<compile_context>
chip_gen: v5e
topology: v5e:2x2
jax: 0.10.0
libtpu: 0.0.40
codegen_flags: <defaults>
</compile_context>

<pallas_src>
import functools

import jax
import jax.numpy as jnp
import numpy as np
from jax import lax
from jax.experimental import pallas as pl
from jax.experimental.pallas import tpu as pltpu


def _round_up(x, m):
    return ((x + m - 1) // m) * m


def _pick_vmem_limit():
    # v7x: 64 MiB physical VMEM per TensorCore -> leave headroom (48 MiB).
    # v5e/v6e: 128 MiB physical -> 96 MiB scoped limit unlocks bigger tiles.
    try:
        cap = int(getattr(pltpu.get_tpu_info(), "vmem_capacity_bytes", 0))
    except Exception:
        cap = 0
    if cap >= 100 * 1024 * 1024:
        return 96 * 1024 * 1024
    return 48 * 1024 * 1024


_VMEM_LIMIT = _pick_vmem_limit()
_PACK_K_MAX = 1024      # pack conv taps along K when taps*Ci <= this (small-K pathway)


def _fold_bn(gamma, beta, mean, var, eps):
    scale = gamma / jnp.sqrt(var + eps)
    bias = beta - mean * scale
    return scale, bias


# ----------------------------------------------------------------------------
# 1x1x1 conv kernels:  out = act(X @ W_folded + bias [+ residual])
# Weight is one resident (K, Cp) block -> DMA'd once, reused across all M tiles.
# ----------------------------------------------------------------------------
def _mm_bias_kernel(x_ref, w_ref, b_ref, o_ref, *, relu):
    acc = jnp.dot(x_ref[...], w_ref[...], preferred_element_type=jnp.float32)
    acc = acc + b_ref[...]
    if relu:
        acc = jnp.maximum(acc, 0.0)
    o_ref[...] = acc.astype(o_ref.dtype)


def _mm_bias_res_kernel(x_ref, w_ref, b_ref, r_ref, o_ref):
    acc = jnp.dot(x_ref[...], w_ref[...], preferred_element_type=jnp.float32)
    acc = acc + b_ref[...] + r_ref[...].astype(jnp.float32)
    o_ref[...] = acc.astype(o_ref.dtype)


def fused_matmul_bias(x2d, w2d, bias2d, *, relu=False, residual=None,
                      out_dtype=jnp.bfloat16):
    """act(x2d @ w2d + bias [+ residual]).  w2d: (K, Cp) bf16, BN scale folded."""
    M, K = x2d.shape
    Cp = w2d.shape[1]
    tm = 512 if _VMEM_LIMIT >= 96 * 1024 * 1024 else 256
    tm = min(tm, _round_up(M, 16))
    Mp = _round_up(M, tm)

    x_p = x2d.astype(jnp.bfloat16)
    if Mp != M:
        x_p = jnp.pad(x_p, ((0, Mp - M), (0, 0)))

    in_specs = [
        pl.BlockSpec((tm, K), lambda i: (i, 0)),
        pl.BlockSpec((K, Cp), lambda i: (0, 0)),   # constant block -> fetched once
        pl.BlockSpec((1, Cp), lambda i: (0, 0)),
    ]
    args = [x_p, w2d, bias2d]
    if residual is not None:
        r_p = residual.astype(jnp.bfloat16)        # bf16 residual stream
        if r_p.shape[1] != Cp:
            r_p = jnp.pad(r_p, ((0, 0), (0, Cp - r_p.shape[1])))
        if Mp != M:
            r_p = jnp.pad(r_p, ((0, Mp - M), (0, 0)))
        in_specs.append(pl.BlockSpec((tm, Cp), lambda i: (i, 0)))
        args.append(r_p)
        kernel = _mm_bias_res_kernel
    else:
        kernel = functools.partial(_mm_bias_kernel, relu=relu)

    out = pl.pallas_call(
        kernel,
        out_shape=jax.ShapeDtypeStruct((Mp, Cp), out_dtype),
        grid=(Mp // tm,),
        in_specs=in_specs,
        out_specs=pl.BlockSpec((tm, Cp), lambda i: (i, 0)),
        compiler_params=pltpu.CompilerParams(
            dimension_semantics=("parallel",),
            vmem_limit_bytes=_VMEM_LIMIT),
    )(*args)
    return out[:M]


# ----------------------------------------------------------------------------
# branch2.a : [tk,1,1] conv + BN + ReLU  (taps packed along K inside the kernel)
# ----------------------------------------------------------------------------
def _temporal_conv_kernel(x_ref, w_ref, b_ref, o_ref, *, T, tk, pack):
    # x_ref: (1, T_pad, hw_blk, Ci) bf16 ; w_ref: (tk*Ci, cn) or (tk, Ci, cn) bf16
    # b_ref: (1, cn) f32 ; o_ref: (1, T, hw_blk, cn) bf16
    hw = x_ref.shape[2]
    ci = x_ref.shape[3]
    cn = o_ref.shape[3]
    if pack:
        taps = [x_ref[0:1, kt:kt + T, :, :] for kt in range(tk)]
        patch = taps[0] if tk == 1 else jnp.concatenate(taps, axis=-1)
        acc = jnp.dot(patch.reshape(T * hw, tk * ci), w_ref[...],
                      preferred_element_type=jnp.float32)
    else:
        acc = jnp.zeros((T * hw, cn), jnp.float32)
        for kt in range(tk):
            acc = acc + jnp.dot(x_ref[0:1, kt:kt + T, :, :].reshape(T * hw, ci),
                                w_ref[kt], preferred_element_type=jnp.float32)
    acc = jnp.maximum(acc + b_ref[...], 0.0)
    o_ref[...] = acc.reshape(1, T, hw, cn).astype(o_ref.dtype)


def temporal_conv_bn_relu(x_cl, wa_k, ba, *, tk):
    # x_cl: (N,T,H,W,Ci) ; wa_k: folded/padded bf16 weight ; ba: (1, Cp) f32 bias
    N, T, H, W, Ci = x_cl.shape
    Cp = wa_k.shape[-1]
    cn_blk = 256 if Cp % 256 == 0 else 128
    pack = wa_k.ndim == 2
    pad_t = tk // 2
    T_pad = T + 2 * pad_t

    hw_blk = 256                                   # HW row tiles (zero halo along T)
    while hw_blk > 16 and (hw_blk > _round_up(H * W, 16) or T * hw_blk > 1024):
        hw_blk //= 2
    HWp = _round_up(H * W, hw_blk)

    xa = x_cl.reshape(N, T, H * W, Ci)
    xa = jnp.pad(xa, ((0, 0), (pad_t, pad_t), (0, HWp - H * W), (0, 0)))
    xa = xa.astype(jnp.bfloat16)

    if pack:
        w_spec = pl.BlockSpec((tk * Ci, cn_blk), lambda n, h, c: (0, c))
    else:
        w_spec = pl.BlockSpec((tk, Ci, cn_blk), lambda n, h, c: (0, 0, c))

    out = pl.pallas_call(
        functools.partial(_temporal_conv_kernel, T=T, tk=tk, pack=pack),
        out_shape=jax.ShapeDtypeStruct((N, T, HWp, Cp), jnp.bfloat16),
        grid=(N, HWp // hw_blk, Cp // cn_blk),
        in_specs=[
            pl.BlockSpec((1, T_pad, hw_blk, Ci), lambda n, h, c: (n, 0, h, 0)),
            w_spec,
            pl.BlockSpec((1, cn_blk), lambda n, h, c: (0, c)),
        ],
        out_specs=pl.BlockSpec((1, T, hw_blk, cn_blk), lambda n, h, c: (n, 0, h, c)),
        compiler_params=pltpu.CompilerParams(
            dimension_semantics=("parallel", "parallel", "parallel"),
            vmem_limit_bytes=_VMEM_LIMIT),
    )(xa, wa_k, ba)
    return out, HWp           # rows ordered (n, t, hw)


# ----------------------------------------------------------------------------
# branch2.b : [1,3,3] conv (stride s, dilation d) + BN + ReLU
# Phase-split layout (NT, s, s, Hq, Wq, Ci): every in-kernel tap slice is a plain
# static slice, and the output comes out NT-major -> no glue transposes downstream.
# ----------------------------------------------------------------------------
def _spatial_conv_kernel(x_ref, w_ref, b_ref, o_ref, *,
                         Ho, Wo, stride, dilation, ho_chunk, pack):
    # x_ref: (nt, s, s, Hq, Wq, Ci) bf16 ; w_ref: (9*Ci, cn) or (9, Ci, cn) bf16
    # b_ref: (1, cn) f32 ; o_ref: (nt, Ho, Wo, cn) bf16
    nt = x_ref.shape[0]
    ci = x_ref.shape[5]
    cn = o_ref.shape[3]
    bias = b_ref[...]
    for ho0 in range(0, Ho, ho_chunk):             # static loop, bounded accumulators
        hoc = min(ho_chunk, Ho - ho0)
        rows = nt * hoc * Wo
        taps = []
        for kh in range(3):
            for kw in range(3):
                qh, rh = divmod(kh * dilation, stride)
                qw, rw = divmod(kw * dilation, stride)
                patch = x_ref[:, rh:rh + 1, rw:rw + 1,
                              qh + ho0:qh + ho0 + hoc, qw:qw + Wo, :]
                taps.append(patch.reshape(nt, hoc, Wo, ci))
        if pack:
            patch_k = jnp.concatenate(taps, axis=-1).reshape(rows, 9 * ci)
            acc = jnp.dot(patch_k, w_ref[...], preferred_element_type=jnp.float32)
        else:
            acc = jnp.zeros((rows, cn), jnp.float32)
            for t in range(9):
                acc = acc + jnp.dot(taps[t].reshape(rows, ci), w_ref[t],
                                    preferred_element_type=jnp.float32)
        acc = jnp.maximum(acc + bias, 0.0)
        o_ref[:, ho0:ho0 + hoc, :, :] = acc.reshape(nt, hoc, Wo, cn).astype(o_ref.dtype)


def spatial_conv_bn_relu(h_cl, wb_k, bb, *, stride, dilation):
    # h_cl: (NT, H, W, Ci) ; output (NT, Ho, Wo, Cp) bf16 (NT-major rows).
    NT, H, W, Ci = h_cl.shape
    Cp = wb_k.shape[-1]
    pack = wb_k.ndim == 2
    s = stride
    pad = dilation
    eff = 2 * dilation + 1
    Ho = (H + 2 * pad - eff) // s + 1
    Wo = (W + 2 * pad - eff) // s + 1
    Hq = -(-(H + 2 * pad) // s)
    Wq = -(-(W + 2 * pad) // s)

    # nt block: ~256 matmul rows, divides NT, leaves >=2 grid steps when possible.
    target = max(1, min(NT, 256 // max(Ho * Wo, 1)))
    if NT >= 2:
        target = max(1, min(target, NT // 2))
    nt_blk = 1
    for cand in range(target, 0, -1):
        if NT % cand == 0:
            nt_blk = cand
            break
    cn_blk = 256 if Cp % 256 == 0 else 128
    ho_chunk = max(1, min(Ho, 512 // max(Wo * nt_blk, 1)))
    # TODO(synk): for very large H*W the per-block phase-split slab should also be
    #             tiled along Ho with halos (needs Element-mode / manual DMA).

    xb = jnp.pad(h_cl.astype(jnp.bfloat16),
                 ((0, 0), (pad, Hq * s - H - pad), (pad, Wq * s - W - pad), (0, 0)))
    xb = xb.reshape(NT, Hq, s, Wq, s, Ci)
    xb = jnp.transpose(xb, (0, 2, 4, 1, 3, 5))       # (NT, s_h, s_w, Hq, Wq, Ci)

    if pack:
        w_spec = pl.BlockSpec((9 * Ci, cn_blk), lambda i, c: (0, c))
    else:
        w_spec = pl.BlockSpec((9, Ci, cn_blk), lambda i, c: (0, 0, c))

    out = pl.pallas_call(
        functools.partial(_spatial_conv_kernel, Ho=Ho, Wo=Wo, stride=s,
                          dilation=dilation, ho_chunk=ho_chunk, pack=pack),
        out_shape=jax.ShapeDtypeStruct((NT, Ho, Wo, Cp), jnp.bfloat16),
        grid=(NT // nt_blk, Cp // cn_blk),
        in_specs=[
            pl.BlockSpec((nt_blk, s, s, Hq, Wq, Ci),
                         lambda i, c: (i, 0, 0, 0, 0, 0)),
            w_spec,
            pl.BlockSpec((1, cn_blk), lambda i, c: (0, c)),
        ],
        out_specs=pl.BlockSpec((nt_blk, Ho, Wo, cn_blk), lambda i, c: (i, 0, 0, c)),
        compiler_params=pltpu.CompilerParams(
            dimension_semantics=("parallel", "parallel"),
            vmem_limit_bytes=_VMEM_LIMIT),
    )(xb, wb_k, bb)
    return out, Ho, Wo


# ----------------------------------------------------------------------------
# One-time weight prep (outside the per-step forward): fold BN, pad channels to
# lane-dense multiples of 128, pack conv taps along K, cast to bf16.
# ----------------------------------------------------------------------------
def prepare_resblock_params(p, *, temp_kernel_size, eps=1e-5):
    tk = temp_kernel_size
    pk = {}

    sa, ba = _fold_bn(p["a_gamma"], p["a_beta"], p["a_mean"], p["a_var"], eps)
    co_a, ci_a = p["wa"].shape[0], p["wa"].shape[1]
    cp_a = _round_up(co_a, 128)
    wa = jnp.transpose(p["wa"][:, :, :, 0, 0], (2, 1, 0)) * sa[None, None, :]
    wa = jnp.pad(wa, ((0, 0), (0, 0), (0, cp_a - co_a))).astype(jnp.bfloat16)
    pk["wa_k"] = wa.reshape(tk * ci_a, cp_a) if tk * ci_a <= _PACK_K_MAX else wa
    pk["ba"] = jnp.pad(ba.reshape(1, co_a).astype(jnp.float32),
                       ((0, 0), (0, cp_a - co_a)))

    sb, bb = _fold_bn(p["b_gamma"], p["b_beta"], p["b_mean"], p["b_var"], eps)
    co_b, ci_b = p["wb"].shape[0], p["wb"].shape[1]
    cp_b = _round_up(co_b, 128)
    wb = jnp.transpose(p["wb"][:, :, 0, :, :], (2, 3, 1, 0)).reshape(9, ci_b, co_b)
    wb = wb * sb[None, None, :]
    wb = jnp.pad(wb, ((0, 0), (0, 0), (0, cp_b - co_b))).astype(jnp.bfloat16)
    pk["wb_k"] = wb.reshape(9 * ci_b, cp_b) if 9 * ci_b <= _PACK_K_MAX else wb
    pk["bb"] = jnp.pad(bb.reshape(1, co_b).astype(jnp.float32),
                       ((0, 0), (0, cp_b - co_b)))

    # branch2.c input rows padded to cp_b: the padded channels of the 3x3 output are
    # exactly zero (zero weights + zero bias pad + ReLU), so zero rows keep math exact.
    sc, bc = _fold_bn(p["c_gamma"], p["c_beta"], p["c_mean"], p["c_var"], eps)
    co_c, ci_c = p["wc"].shape[0], p["wc"].shape[1]
    cp_c = _round_up(co_c, 128)
    wc = jnp.transpose(p["wc"][:, :, 0, 0, 0], (1, 0)) * sc[None, :]
    wc = jnp.pad(wc, ((0, cp_b - ci_c), (0, cp_c - co_c))).astype(jnp.bfloat16)
    pk["wc_k"] = wc
    pk["bc"] = jnp.pad(bc.reshape(1, co_c).astype(jnp.float32),
                       ((0, 0), (0, cp_c - co_c)))

    if "w1" in p:
        s1, b1 = _fold_bn(p["bn1_gamma"], p["bn1_beta"], p["bn1_mean"],
                          p["bn1_var"], eps)
        co_1 = p["w1"].shape[0]
        w1 = jnp.transpose(p["w1"][:, :, 0, 0, 0], (1, 0)) * s1[None, :]
        w1 = jnp.pad(w1, ((0, 0), (0, cp_c - co_1))).astype(jnp.bfloat16)
        pk["w1_k"] = w1
        pk["b1"] = jnp.pad(b1.reshape(1, co_1).astype(jnp.float32),
                           ((0, 0), (0, cp_c - co_1)))
    return pk


# ----------------------------------------------------------------------------
# ResBlock forward (eval mode; BottleneckTransform as trans_func, num_groups=1)
# ----------------------------------------------------------------------------
def resblock_forward(x_ncdhw, pk, *, temp_kernel_size, stride, dim_out, dilation=1):
    # TODO(synk): training-mode drop_connect (stateful Bernoulli mask) and
    #             num_groups>1 (grouped 3x3 conv) are not implemented; eval-mode only.
    N, Cin, T, H, W = x_ncdhw.shape
    x_cl = jnp.transpose(x_ncdhw, (0, 2, 3, 4, 1))            # NCDHW -> channels-last

    # branch2.a : [tk,1,1] conv + BN + ReLU
    ha, _ = temporal_conv_bn_relu(x_cl, pk["wa_k"], pk["ba"], tk=temp_kernel_size)
    dim_inner = (pk["wb_k"].shape[0] // 9 if pk["wb_k"].ndim == 2
                 else pk["wb_k"].shape[1])
    h = ha[:, :, :H * W, :dim_inner].reshape(N * T, H, W, dim_inner)

    # branch2.b : [1,3,3] conv (stride, dilation) + BN + ReLU  -> NT-major rows
    hb, Ho, Wo = spatial_conv_bn_relu(h, pk["wb_k"], pk["bb"],
                                      stride=stride, dilation=dilation)
    hb2d = hb.reshape(N * T * Ho * Wo, hb.shape[-1])

    # branch2.c : 1x1x1 conv + BN (no ReLU); shortcut add fused into the epilogue
    if "w1_k" in pk:
        f_x = fused_matmul_bias(hb2d, pk["wc_k"], pk["bc"], out_dtype=jnp.bfloat16)
        xs = x_cl[:, :, 0:(Ho - 1) * stride + 1:stride,
                  0:(Wo - 1) * stride + 1:stride, :]
        xs2d = xs.reshape(N * T * Ho * Wo, Cin)               # NT-major, no transpose
        out2d = fused_matmul_bias(xs2d, pk["w1_k"], pk["b1"],
                                  residual=f_x, out_dtype=jnp.float32)
    else:
        assert stride == 1 and Cin == dim_out, \
            "identity shortcut requires stride == 1 and dim_in == dim_out"
        xi2d = x_cl.reshape(N * T * H * W, Cin)               # NT-major, no transpose
        out2d = fused_matmul_bias(hb2d, pk["wc_k"], pk["bc"],
                                  residual=xi2d, out_dtype=jnp.float32)

    out = out2d[:, :dim_out].reshape(N, T, Ho, Wo, dim_out)
    return jnp.transpose(out, (0, 4, 1, 2, 3))                # back to NCDHW


# ----------------------------------------------------------------------------
# Pure-JAX (lax.conv) reference for sanity checking
# ----------------------------------------------------------------------------
def _bn_ref(x, gamma, beta, mean, var, eps):
    sh = (1, -1, 1, 1, 1)
    return (x - mean.reshape(sh)) / jnp.sqrt(var.reshape(sh) + eps) * gamma.reshape(sh) + beta.reshape(sh)


def resblock_reference(x, p, *, temp_kernel_size, stride, dilation=1, eps=1e-5):
    dn = ("NCDHW", "OIDHW", "NCDHW")
    hp = lax.Precision.HIGHEST
    pad_t = temp_kernel_size // 2
    a = lax.conv_general_dilated(x, p["wa"], (1, 1, 1),
                                 [(pad_t, pad_t), (0, 0), (0, 0)],
                                 dimension_numbers=dn, precision=hp)
    a = jnp.maximum(_bn_ref(a, p["a_gamma"], p["a_beta"], p["a_mean"], p["a_var"], eps), 0.0)
    b = lax.conv_general_dilated(a, p["wb"], (1, stride, stride),
                                 [(0, 0), (dilation, dilation), (dilation, dilation)],
                                 rhs_dilation=(1, dilation, dilation),
                                 dimension_numbers=dn, precision=hp)
    b = jnp.maximum(_bn_ref(b, p["b_gamma"], p["b_beta"], p["b_mean"], p["b_var"], eps), 0.0)
    c = lax.conv_general_dilated(b, p["wc"], (1, 1, 1), [(0, 0)] * 3,
                                 dimension_numbers=dn, precision=hp)
    f_x = _bn_ref(c, p["c_gamma"], p["c_beta"], p["c_mean"], p["c_var"], eps)
    if "w1" in p:
        r = lax.conv_general_dilated(x, p["w1"], (1, stride, stride), [(0, 0)] * 3,
                                     dimension_numbers=dn, precision=hp)
        return _bn_ref(r, p["bn1_gamma"], p["bn1_beta"], p["bn1_mean"], p["bn1_var"], eps) + f_x
    return x + f_x


# ----------------------------------------------------------------------------
# Deterministic parameter init + demo
# ----------------------------------------------------------------------------
def make_params(key, dim_in, dim_out, dim_inner, temp_kernel_size, has_branch1):
    keys = jax.random.split(key, 24)
    ki = iter(range(24))

    def bn_params(c):
        gamma = jax.random.uniform(keys[next(ki)], (c,), jnp.float32, 0.5, 1.5)
        beta = 0.1 * jax.random.normal(keys[next(ki)], (c,), jnp.float32)
        mean = 0.1 * jax.random.normal(keys[next(ki)], (c,), jnp.float32)
        var = jax.random.uniform(keys[next(ki)], (c,), jnp.float32, 0.5, 1.5)
        return gamma, beta, mean, var

    p = {}
    p["wa"] = 0.1 * jax.random.normal(keys[next(ki)], (dim_inner, dim_in, temp_kernel_size, 1, 1), jnp.float32)
    p["a_gamma"], p["a_beta"], p["a_mean"], p["a_var"] = bn_params(dim_inner)
    p["wb"] = 0.1 * jax.random.normal(keys[next(ki)], (dim_inner, dim_inner, 1, 3, 3), jnp.float32)
    p["b_gamma"], p["b_beta"], p["b_mean"], p["b_var"] = bn_params(dim_inner)
    p["wc"] = 0.1 * jax.random.normal(keys[next(ki)], (dim_out, dim_inner, 1, 1, 1), jnp.float32)
    p["c_gamma"], p["c_beta"], p["c_mean"], p["c_var"] = bn_params(dim_out)
    if has_branch1:
        p["w1"] = 0.1 * jax.random.normal(keys[next(ki)], (dim_out, dim_in, 1, 1, 1), jnp.float32)
        p["bn1_gamma"], p["bn1_beta"], p["bn1_mean"], p["bn1_var"] = bn_params(dim_out)
    return p


if __name__ == "__main__":
    # ResBlock config: dim_in=16, dim_out=32, dim_inner=8, temp_kernel_size=3,
    # stride=2 (applied to the 3x3 conv; stride_1x1=False), num_groups=1, dilation=1.
    dim_in, dim_out, dim_inner = 16, 32, 8
    temp_kernel_size, stride = 3, 2

    key = jax.random.PRNGKey(0)
    kx, kp = jax.random.split(key)
    x = jax.random.normal(kx, (2, dim_in, 4, 8, 8), jnp.float32)  # NCDHW
    params = make_params(kp, dim_in, dim_out, dim_inner, temp_kernel_size,
                         has_branch1=(dim_in != dim_out or stride != 1))

    # One-time (inference) weight prep, hoisted out of the per-step forward.
    prepared = prepare_resblock_params(params, temp_kernel_size=temp_kernel_size,
                                       eps=1e-5)

    fwd = jax.jit(functools.partial(resblock_forward,
                                    temp_kernel_size=temp_kernel_size,
                                    stride=stride, dim_out=dim_out, dilation=1))
    out = fwd(x, prepared)
    jax.block_until_ready(out)

    ref = resblock_reference(x, params, temp_kernel_size=temp_kernel_size, stride=stride)
    np.testing.assert_allclose(np.asarray(out), np.asarray(ref), rtol=5e-2, atol=5e-2)
    assert out.shape == (2, dim_out, 4, 4, 4)
    print("KERNEL_OK")
</pallas_src>

<mosaic_0001>
module attributes {stable_mosaic.version = 11 : i64} {
  func.func @_temporal_conv_kernel(%arg0: i32, %arg1: i32, %arg2: i32, %arg3: memref<1x6x64x16xbf16, #tpu.memory_space<vmem>>, %arg4: memref<48x128xbf16, #tpu.memory_space<vmem>>, %arg5: memref<1x128xf32, #tpu.memory_space<vmem>>, %arg6: memref<1x4x64x128xbf16, #tpu.memory_space<vmem>>) attributes {dimension_semantics = [#tpu.dimension_semantics<parallel>, #tpu.dimension_semantics<parallel>, #tpu.dimension_semantics<parallel>], iteration_bounds = array<i64: 2, 1, 1>, scalar_prefetch = 0 : i64, scratch_operands = 0 : i64, tpu.core_type = #tpu.core_type<tc>, window_params = [{transform_indices = @transform_0, window_bounds = array<i64: 1, 6, 64, 16>}, {transform_indices = @transform_1, window_bounds = array<i64: 48, 128>}, {transform_indices = @transform_2, window_bounds = array<i64: 1, 128>}, {transform_indices = @transform_3, window_bounds = array<i64: 1, 4, 64, 128>}]} {
    %c0 = arith.constant 0 : index
    %c0_0 = arith.constant 0 : index
    %c0_1 = arith.constant 0 : index
    %c0_2 = arith.constant 0 : index
    %0 = vector.load %arg3[%c0, %c0_0, %c0_1, %c0_2] : memref<1x6x64x16xbf16, #tpu.memory_space<vmem>>, vector<1x4x64x16xbf16>
    %c0_3 = arith.constant 0 : index
    %c1 = arith.constant 1 : index
    %c0_4 = arith.constant 0 : index
    %c0_5 = arith.constant 0 : index
    %1 = vector.load %arg3[%c0_3, %c1, %c0_4, %c0_5] : memref<1x6x64x16xbf16, #tpu.memory_space<vmem>>, vector<1x4x64x16xbf16>
    %c0_6 = arith.constant 0 : index
    %c2 = arith.constant 2 : index
    %c0_7 = arith.constant 0 : index
    %c0_8 = arith.constant 0 : index
    %2 = vector.load %arg3[%c0_6, %c2, %c0_7, %c0_8] : memref<1x6x64x16xbf16, #tpu.memory_space<vmem>>, vector<1x4x64x16xbf16>
    %3 = tpu.concatenate %0, %1, %2 in 3 : vector<1x4x64x16xbf16>, vector<1x4x64x16xbf16>, vector<1x4x64x16xbf16> -> vector<1x4x64x48xbf16>
    %4 = vector.shape_cast %3 : vector<1x4x64x48xbf16> to vector<256x48xbf16>
    %c0_9 = arith.constant 0 : index
    %c0_10 = arith.constant 0 : index
    %5 = vector.load %arg4[%c0_9, %c0_10] : memref<48x128xbf16, #tpu.memory_space<vmem>>, vector<48x128xbf16>
    %cst = arith.constant dense<0.000000e+00> : vector<256x128xf32>
    %6 = tpu.matmul %4, %5, %cst {dimension_numbers = #tpu.dot_dimension_numbers<[1], [0], [0], [1], [0, 0, 1, 1], [], []>} : vector<256x48xbf16>, vector<48x128xbf16>, vector<256x128xf32> -> vector<256x128xf32>
    %c0_11 = arith.constant 0 : index
    %c0_12 = arith.constant 0 : index
    %7 = vector.load %arg5[%c0_11, %c0_12] : memref<1x128xf32, #tpu.memory_space<vmem>>, vector<1x128xf32>
    %8 = vector.broadcast %7 : vector<1x128xf32> to vector<256x128xf32>
    %9 = arith.addf %6, %8 : vector<256x128xf32>
    %cst_13 = arith.constant 0.000000e+00 : f32
    %10 = vector.broadcast %cst_13 : f32 to vector<256x128xf32>
    %11 = arith.maximumf %9, %10 : vector<256x128xf32>
    %12 = vector.shape_cast %11 : vector<256x128xf32> to vector<1x4x64x128xf32>
    %13 = arith.truncf %12 : vector<1x4x64x128xf32> to vector<1x4x64x128xbf16>
    %c0_14 = arith.constant 0 : index
    %c0_15 = arith.constant 0 : index
    %c0_16 = arith.constant 0 : index
    %c0_17 = arith.constant 0 : index
    %14 = vector.load %arg6[%c0_14, %c0_15, %c0_16, %c0_17] : memref<1x4x64x128xbf16, #tpu.memory_space<vmem>>, vector<1x4x64x128xbf16>
    tpu.vector_store %arg6[%c0_14, %c0_15, %c0_16, %c0_17], %13 {strides = array<i32>} : memref<1x4x64x128xbf16, #tpu.memory_space<vmem>>, vector<1x4x64x128xbf16>,
    return
  }
  func.func @transform_0(%arg0: i32, %arg1: i32, %arg2: i32) -> (i32, i32, i32, i32) {
    %c0_i32 = arith.constant 0 : i32
    %c0_i32_0 = arith.constant 0 : i32
    %c0_i32_1 = arith.constant 0 : i32
    return %arg0, %c0_i32, %arg1, %c0_i32_0 : i32, i32, i32, i32
  }
  func.func @transform_1(%arg0: i32, %arg1: i32, %arg2: i32) -> (i32, i32) {
    %c0_i32 = arith.constant 0 : i32
    %c0_i32_0 = arith.constant 0 : i32
    return %c0_i32, %arg2 : i32, i32
  }
  func.func @transform_2(%arg0: i32, %arg1: i32, %arg2: i32) -> (i32, i32) {
    %c0_i32 = arith.constant 0 : i32
    %c0_i32_0 = arith.constant 0 : i32
    return %c0_i32, %arg2 : i32, i32
  }
  func.func @transform_3(%arg0: i32, %arg1: i32, %arg2: i32) -> (i32, i32, i32, i32) {
    %c0_i32 = arith.constant 0 : i32
    %c0_i32_0 = arith.constant 0 : i32
    return %arg0, %c0_i32, %arg1, %arg2 : i32, i32, i32, i32
  }
}

module attributes {stable_mosaic.version = 11 : i64} {
  func.func @_spatial_conv_kernel(%arg0: i32, %arg1: i32, %arg2: memref<4x2x2x5x5x8xbf16, #tpu.memory_space<vmem>>, %arg3: memref<72x128xbf16, #tpu.memory_space<vmem>>, %arg4: memref<1x128xf32, #tpu.memory_space<vmem>>, %arg5: memref<4x4x4x128xbf16, #tpu.memory_space<vmem>>) attributes {dimension_semantics = [#tpu.dimension_semantics<parallel>, #tpu.dimension_semantics<parallel>], iteration_bounds = array<i64: 2, 1>, scalar_prefetch = 0 : i64, scratch_operands = 0 : i64, tpu.core_type = #tpu.core_type<tc>, window_params = [{transform_indices = @transform_0, window_bounds = array<i64: 4, 2, 2, 5, 5, 8>}, {transform_indices = @transform_1, window_bounds = array<i64: 72, 128>}, {transform_indices = @transform_2, window_bounds = array<i64: 1, 128>}, {transform_indices = @transform_3, window_bounds = array<i64: 4, 4, 4, 128>}]} {
    %c0 = arith.constant 0 : index
    %c0_0 = arith.constant 0 : index
    %0 = vector.load %arg4[%c0, %c0_0] : memref<1x128xf32, #tpu.memory_space<vmem>>, vector<1x128xf32>
    %c0_1 = arith.constant 0 : index
    %c0_2 = arith.constant 0 : index
    %c0_3 = arith.constant 0 : index
    %c0_4 = arith.constant 0 : index
    %c0_5 = arith.constant 0 : index
    %c0_6 = arith.constant 0 : index
    %1 = vector.load %arg2[%c0_1, %c0_2, %c0_3, %c0_4, %c0_5, %c0_6] : memref<4x2x2x5x5x8xbf16, #tpu.memory_space<vmem>>, vector<4x1x1x4x4x8xbf16>
    %2 = vector.shape_cast %1 : vector<4x1x1x4x4x8xbf16> to vector<4x4x4x8xbf16>
    %c0_7 = arith.constant 0 : index
    %c0_8 = arith.constant 0 : index
    %c1 = arith.constant 1 : index
    %c0_9 = arith.constant 0 : index
    %c0_10 = arith.constant 0 : index
    %c0_11 = arith.constant 0 : index
    %3 = vector.load %arg2[%c0_7, %c0_8, %c1, %c0_9, %c0_10, %c0_11] : memref<4x2x2x5x5x8xbf16, #tpu.memory_space<vmem>>, vector<4x1x1x4x4x8xbf16>
    %4 = vector.shape_cast %3 : vector<4x1x1x4x4x8xbf16> to vector<4x4x4x8xbf16>
    %c0_12 = arith.constant 0 : index
    %c0_13 = arith.constant 0 : index
    %c0_14 = arith.constant 0 : index
    %c0_15 = arith.constant 0 : index
    %c1_16 = arith.constant 1 : index
    %c0_17 = arith.constant 0 : index
    %5 = vector.load %arg2[%c0_12, %c0_13, %c0_14, %c0_15, %c1_16, %c0_17] : memref<4x2x2x5x5x8xbf16, #tpu.memory_space<vmem>>, vector<4x1x1x4x4x8xbf16>
    %6 = vector.shape_cast %5 : vector<4x1x1x4x4x8xbf16> to vector<4x4x4x8xbf16>
    %c0_18 = arith.constant 0 : index
    %c1_19 = arith.constant 1 : index
    %c0_20 = arith.constant 0 : index
    %c0_21 = arith.constant 0 : index
    %c0_22 = arith.constant 0 : index
    %c0_23 = arith.constant 0 : index
    %7 = vector.load %arg2[%c0_18, %c1_19, %c0_20, %c0_21, %c0_22, %c0_23] : memref<4x2x2x5x5x8xbf16, #tpu.memory_space<vmem>>, vector<4x1x1x4x4x8xbf16>
    %8 = vector.shape_cast %7 : vector<4x1x1x4x4x8xbf16> to vector<4x4x4x8xbf16>
    %c0_24 = arith.constant 0 : index
    %c1_25 = arith.constant 1 : index
    %c1_26 = arith.constant 1 : index
    %c0_27 = arith.constant 0 : index
    %c0_28 = arith.constant 0 : index
    %c0_29 = arith.constant 0 : index
    %9 = vector.load %arg2[%c0_24, %c1_25, %c1_26, %c0_27, %c0_28, %c0_29] : memref<4x2x2x5x5x8xbf16, #tpu.memory_space<vmem>>, vector<4x1x1x4x4x8xbf16>
    %10 = vector.shape_cast %9 : vector<4x1x1x4x4x8xbf16> to vector<4x4x4x8xbf16>
    %c0_30 = arith.constant 0 : index
    %c1_31 = arith.constant 1 : index
    %c0_32 = arith.constant 0 : index
    %c0_33 = arith.constant 0 : index
    %c1_34 = arith.constant 1 : index
    %c0_35 = arith.constant 0 : index
    %11 = vector.load %arg2[%c0_30, %c1_31, %c0_32, %c0_33, %c1_34, %c0_35] : memref<4x2x2x5x5x8xbf16, #tpu.memory_space<vmem>>, vector<4x1x1x4x4x8xbf16>
    %12 = vector.shape_cast %11 : vector<4x1x1x4x4x8xbf16> to vector<4x4x4x8xbf16>
    %c0_36 = arith.constant 0 : index
    %c0_37 = arith.constant 0 : index
    %c0_38 = arith.constant 0 : index
    %c1_39 = arith.constant 1 : index
    %c0_40 = arith.constant 0 : index
    %c0_41 = arith.constant 0 : index
    %13 = vector.load %arg2[%c0_36, %c0_37, %c0_38, %c1_39, %c0_40, %c0_41] : memref<4x2x2x5x5x8xbf16, #tpu.memory_space<vmem>>, vector<4x1x1x4x4x8xbf16>
    %14 = vector.shape_cast %13 : vector<4x1x1x4x4x8xbf16> to vector<4x4x4x8xbf16>
    %c0_42 = arith.constant 0 : index
    %c0_43 = arith.constant 0 : index
    %c1_44 = arith.constant 1 : index
    %c1_45 = arith.constant 1 : index
    %c0_46 = arith.constant 0 : index
    %c0_47 = arith.constant 0 : index
    %15 = vector.load %arg2[%c0_42, %c0_43, %c1_44, %c1_45, %c0_46, %c0_47] : memref<4x2x2x5x5x8xbf16, #tpu.memory_space<vmem>>, vector<4x1x1x4x4x8xbf16>
    %16 = vector.shape_cast %15 : vector<4x1x1x4x4x8xbf16> to vector<4x4x4x8xbf16>
    %c0_48 = arith.constant 0 : index
    %c0_49 = arith.constant 0 : index
    %c0_50 = arith.constant 0 : index
    %c1_51 = arith.constant 1 : index
    %c1_52 = arith.constant 1 : index
    %c0_53 = arith.constant 0 : index
    %17 = vector.load %arg2[%c0_48, %c0_49, %c0_50, %c1_51, %c1_52, %c0_53] : memref<4x2x2x5x5x8xbf16, #tpu.memory_space<vmem>>, vector<4x1x1x4x4x8xbf16>
    %18 = vector.shape_cast %17 : vector<4x1x1x4x4x8xbf16> to vector<4x4x4x8xbf16>
    %19 = tpu.concatenate %2, %4, %6, %8, %10, %12, %14, %16, %18 in 3 : vector<4x4x4x8xbf16>, vector<4x4x4x8xbf16>, vector<4x4x4x8xbf16>, vector<4x4x4x8xbf16>, vector<4x4x4x8xbf16>, vector<4x4x4x8xbf16>, vector<4x4x4x8xbf16>, vector<4x4x4x8xbf16>, vector<4x4x4x8xbf16> -> vector<4x4x4x72xbf16>
    %20 = vector.shape_cast %19 : vector<4x4x4x72xbf16> to vector<64x72xbf16>
    %c0_54 = arith.constant 0 : index
    %c0_55 = arith.constant 0 : index
    %21 = vector.load %arg3[%c0_54, %c0_55] : memref<72x128xbf16, #tpu.memory_space<vmem>>, vector<72x128xbf16>
    %cst = arith.constant dense<0.000000e+00> : vector<64x128xf32>
    %22 = tpu.matmul %20, %21, %cst {dimension_numbers = #tpu.dot_dimension_numbers<[1], [0], [0], [1], [0, 0, 1, 1], [], []>} : vector<64x72xbf16>, vector<72x128xbf16>, vector<64x128xf32> -> vector<64x128xf32>
    %23 = vector.broadcast %0 : vector<1x128xf32> to vector<64x128xf32>
    %24 = arith.addf %22, %23 : vector<64x128xf32>
    %cst_56 = arith.constant 0.000000e+00 : f32
    %25 = vector.broadcast %cst_56 : f32 to vector<64x128xf32>
    %26 = arith.maximumf %24, %25 : vector<64x128xf32>
    %27 = vector.shape_cast %26 : vector<64x128xf32> to vector<4x4x4x128xf32>
    %28 = arith.truncf %27 : vector<4x4x4x128xf32> to vector<4x4x4x128xbf16>
    %c0_57 = arith.constant 0 : index
    %c0_58 = arith.constant 0 : index
    %c0_59 = arith.constant 0 : index
    %c0_60 = arith.constant 0 : index
    %29 = vector.load %arg5[%c0_57, %c0_58, %c0_59, %c0_60] : memref<4x4x4x128xbf16, #tpu.memory_space<vmem>>, vector<4x4x4x128xbf16>
    tpu.vector_store %arg5[%c0_57, %c0_58, %c0_59, %c0_60], %28 {strides = array<i32>} : memref<4x4x4x128xbf16, #tpu.memory_space<vmem>>, vector<4x4x4x128xbf16>,
    return
  }
  func.func @transform_0(%arg0: i32, %arg1: i32) -> (i32, i32, i32, i32, i32, i32) {
    %c0_i32 = arith.constant 0 : i32
    %c0_i32_0 = arith.constant 0 : i32
    %c0_i32_1 = arith.constant 0 : i32
    %c0_i32_2 = arith.constant 0 : i32
    %c0_i32_3 = arith.constant 0 : i32
    %c0_i32_4 = arith.constant 0 : i32
    return %arg0, %c0_i32, %c0_i32_0, %c0_i32_1, %c0_i32_2, %c0_i32_3 : i32, i32, i32, i32, i32, i32
  }
  func.func @transform_1(%arg0: i32, %arg1: i32) -> (i32, i32) {
    %c0_i32 = arith.constant 0 : i32
    %c0_i32_0 = arith.constant 0 : i32
    return %c0_i32, %arg1 : i32, i32
  }
  func.func @transform_2(%arg0: i32, %arg1: i32) -> (i32, i32) {
    %c0_i32 = arith.constant 0 : i32
    %c0_i32_0 = arith.constant 0 : i32
    return %c0_i32, %arg1 : i32, i32
  }
  func.func @transform_3(%arg0: i32, %arg1: i32) -> (i32, i32, i32, i32) {
    %c0_i32 = arith.constant 0 : i32
    %c0_i32_0 = arith.constant 0 : i32
    %c0_i32_1 = arith.constant 0 : i32
    return %arg0, %c0_i32, %c0_i32_0, %arg1 : i32, i32, i32, i32
  }
}

module attributes {stable_mosaic.version = 11 : i64} {
  func.func @_mm_bias_kernel(%arg0: i32, %arg1: memref<128x128xbf16, #tpu.memory_space<vmem>>, %arg2: memref<128x128xbf16, #tpu.memory_space<vmem>>, %arg3: memref<1x128xf32, #tpu.memory_space<vmem>>, %arg4: memref<128x128xbf16, #tpu.memory_space<vmem>>) attributes {dimension_semantics = [#tpu.dimension_semantics<parallel>], iteration_bounds = array<i64: 1>, scalar_prefetch = 0 : i64, scratch_operands = 0 : i64, tpu.core_type = #tpu.core_type<tc>, window_params = [{transform_indices = @transform_0, window_bounds = array<i64: 128, 128>}, {pipeline_mode = #tpu.pipeline_mode<synchronous>, transform_indices = @transform_1, window_bounds = array<i64: 128, 128>}, {pipeline_mode = #tpu.pipeline_mode<synchronous>, transform_indices = @transform_2, window_bounds = array<i64: 1, 128>}, {transform_indices = @transform_3, window_bounds = array<i64: 128, 128>}]} {
    %c0 = arith.constant 0 : index
    %c0_0 = arith.constant 0 : index
    %0 = vector.load %arg1[%c0, %c0_0] : memref<128x128xbf16, #tpu.memory_space<vmem>>, vector<128x128xbf16>
    %c0_1 = arith.constant 0 : index
    %c0_2 = arith.constant 0 : index
    %1 = vector.load %arg2[%c0_1, %c0_2] : memref<128x128xbf16, #tpu.memory_space<vmem>>, vector<128x128xbf16>
    %cst = arith.constant dense<0.000000e+00> : vector<128x128xf32>
    %2 = tpu.matmul %0, %1, %cst {dimension_numbers = #tpu.dot_dimension_numbers<[1], [0], [0], [1], [0, 0, 1, 1], [], []>} : vector<128x128xbf16>, vector<128x128xbf16>, vector<128x128xf32> -> vector<128x128xf32>
    %c0_3 = arith.constant 0 : index
    %c0_4 = arith.constant 0 : index
    %3 = vector.load %arg3[%c0_3, %c0_4] : memref<1x128xf32, #tpu.memory_space<vmem>>, vector<1x128xf32>
    %4 = vector.broadcast %3 : vector<1x128xf32> to vector<128x128xf32>
    %5 = arith.addf %2, %4 : vector<128x128xf32>
    %6 = arith.truncf %5 : vector<128x128xf32> to vector<128x128xbf16>
    %c0_5 = arith.constant 0 : index
    %c0_6 = arith.constant 0 : index
    %7 = vector.load %arg4[%c0_5, %c0_6] : memref<128x128xbf16, #tpu.memory_space<vmem>>, vector<128x128xbf16>
    tpu.vector_store %arg4[%c0_5, %c0_6], %6 {strides = array<i32>} : memref<128x128xbf16, #tpu.memory_space<vmem>>, vector<128x128xbf16>,
    return
  }
  func.func @transform_0(%arg0: i32) -> (i32, i32) {
    %c0_i32 = arith.constant 0 : i32
    %c0_i32_0 = arith.constant 0 : i32
    return %arg0, %c0_i32 : i32, i32
  }
  func.func @transform_1(%arg0: i32) -> (i32, i32) {
    %c0_i32 = arith.constant 0 : i32
    %c0_i32_0 = arith.constant 0 : i32
    %c0_i32_1 = arith.constant 0 : i32
    return %c0_i32, %c0_i32_0 : i32, i32
  }
  func.func @transform_2(%arg0: i32) -> (i32, i32) {
    %c0_i32 = arith.constant 0 : i32
    %c0_i32_0 = arith.constant 0 : i32
    %c0_i32_1 = arith.constant 0 : i32
    return %c0_i32, %c0_i32_0 : i32, i32
  }
  func.func @transform_3(%arg0: i32) -> (i32, i32) {
    %c0_i32 = arith.constant 0 : i32
    %c0_i32_0 = arith.constant 0 : i32
    return %arg0, %c0_i32 : i32, i32
  }
}

module attributes {stable_mosaic.version = 11 : i64} {
  func.func @_mm_bias_res_kernel(%arg0: i32, %arg1: memref<128x16xbf16, #tpu.memory_space<vmem>>, %arg2: memref<16x128xbf16, #tpu.memory_space<vmem>>, %arg3: memref<1x128xf32, #tpu.memory_space<vmem>>, %arg4: memref<128x128xbf16, #tpu.memory_space<vmem>>, %arg5: memref<128x128xf32, #tpu.memory_space<vmem>>) attributes {dimension_semantics = [#tpu.dimension_semantics<parallel>], iteration_bounds = array<i64: 1>, scalar_prefetch = 0 : i64, scratch_operands = 0 : i64, tpu.core_type = #tpu.core_type<tc>, window_params = [{transform_indices = @transform_0, window_bounds = array<i64: 128, 16>}, {pipeline_mode = #tpu.pipeline_mode<synchronous>, transform_indices = @transform_1, window_bounds = array<i64: 16, 128>}, {pipeline_mode = #tpu.pipeline_mode<synchronous>, transform_indices = @transform_2, window_bounds = array<i64: 1, 128>}, {transform_indices = @transform_3, window_bounds = array<i64: 128, 128>}, {transform_indices = @transform_4, window_bounds = array<i64: 128, 128>}]} {
    %c0 = arith.constant 0 : index
    %c0_0 = arith.constant 0 : index
    %0 = vector.load %arg1[%c0, %c0_0] : memref<128x16xbf16, #tpu.memory_space<vmem>>, vector<128x16xbf16>
    %c0_1 = arith.constant 0 : index
    %c0_2 = arith.constant 0 : index
    %1 = vector.load %arg2[%c0_1, %c0_2] : memref<16x128xbf16, #tpu.memory_space<vmem>>, vector<16x128xbf16>
    %cst = arith.constant dense<0.000000e+00> : vector<128x128xf32>
    %2 = tpu.matmul %0, %1, %cst {dimension_numbers = #tpu.dot_dimension_numbers<[1], [0], [0], [1], [0, 0, 1, 1], [], []>} : vector<128x16xbf16>, vector<16x128xbf16>, vector<128x128xf32> -> vector<128x128xf32>
    %c0_3 = arith.constant 0 : index
    %c0_4 = arith.constant 0 : index
    %3 = vector.load %arg3[%c0_3, %c0_4] : memref<1x128xf32, #tpu.memory_space<vmem>>, vector<1x128xf32>
    %4 = vector.broadcast %3 : vector<1x128xf32> to vector<128x128xf32>
    %5 = arith.addf %2, %4 : vector<128x128xf32>
    %c0_5 = arith.constant 0 : index
    %c0_6 = arith.constant 0 : index
    %6 = vector.load %arg4[%c0_5, %c0_6] : memref<128x128xbf16, #tpu.memory_space<vmem>>, vector<128x128xbf16>
    %7 = arith.extf %6 : vector<128x128xbf16> to vector<128x128xf32>
    %8 = arith.addf %5, %7 : vector<128x128xf32>
    %c0_7 = arith.constant 0 : index
    %c0_8 = arith.constant 0 : index
    %9 = vector.load %arg5[%c0_7, %c0_8] : memref<128x128xf32, #tpu.memory_space<vmem>>, vector<128x128xf32>
    tpu.vector_store %arg5[%c0_7, %c0_8], %8 {strides = array<i32>} : memref<128x128xf32, #tpu.memory_space<vmem>>, vector<128x128xf32>,
    return
  }
  func.func @transform_0(%arg0: i32) -> (i32, i32) {
    %c0_i32 = arith.constant 0 : i32
    %c0_i32_0 = arith.constant 0 : i32
    return %arg0, %c0_i32 : i32, i32
  }
  func.func @transform_1(%arg0: i32) -> (i32, i32) {
    %c0_i32 = arith.constant 0 : i32
    %c0_i32_0 = arith.constant 0 : i32
    %c0_i32_1 = arith.constant 0 : i32
    return %c0_i32, %c0_i32_0 : i32, i32
  }
  func.func @transform_2(%arg0: i32) -> (i32, i32) {
    %c0_i32 = arith.constant 0 : i32
    %c0_i32_0 = arith.constant 0 : i32
    %c0_i32_1 = arith.constant 0 : i32
    return %c0_i32, %c0_i32_0 : i32, i32
  }
  func.func @transform_3(%arg0: i32) -> (i32, i32) {
    %c0_i32 = arith.constant 0 : i32
    %c0_i32_0 = arith.constant 0 : i32
    return %arg0, %c0_i32 : i32, i32
  }
  func.func @transform_4(%arg0: i32) -> (i32, i32) {
    %c0_i32 = arith.constant 0 : i32
    %c0_i32_0 = arith.constant 0 : i32
    return %arg0, %c0_i32 : i32, i32
  }
}

</mosaic_0001>

<llo_original>
// kernel: resblock_forward.4
$region0: #{resblock_forward.4}
  #allocation0 [shape = 'u32[]', space=smem, size = 0x4, offset = 0x4, fixed_abs, tag = 'smem constant byte address 0x4 - core index']
  #allocation1 [shape = 'u32[72,128]{1,0:T(1,128)}', space=vmem, size = 0x9000, scoped, tag = 'internal scratch']
  %s0 = inlined_call_operand.vmem [shape: bf16[2,6,64,16], index: 0, kind: input, shape index: {}]
  %s1 = inlined_call_operand.vmem [shape: bf16[48,128], index: 1, kind: input, shape index: {}]
  %s2 = inlined_call_operand.vmem [shape: f32[1,128], index: 2, kind: input, shape index: {}]
  %s3 = inlined_call_operand.vmem [shape: bf16[2,4,64,128], index: 3, kind: output, shape index: {}]
  %s4 = sld [smem:[#allocation0]]
  $region45: #{resblock_forward.4} parent=0
    _
  %s6 = ssub.s32 1, %s4
  %s7 = scalar_select 0, %s6, %s4
  loop: start=0, step=1, limit=4
  $region2: #{resblock_forward.4} parent=0 // loop_pre_header
    _
  $region3: #{resblock_forward.4} parent=0 // loop_header
    %s9 = sphi 0, %s13
    %p10 = scmp.ge.s32.totalorder %s9, 4
    %s16 = sphi 0, %s35
    %s17 = sphi 0, %s31
    %s18 = sphi 0, %s27
    %s19 = sphi 0, %s16
    %s20 = sphi 0, %s17
    %s21 = sphi 0, %s18
    %s22 = sphi 0, %s19
    %s23 = sphi 0, %s20
    %s24 = sphi 0, %s21
    %s40 = sphi 0, %s42
    %s43 = sphi 0, %s40
    %s44 = sphi 0, %s43
    %s60 = sphi 0, %s44
    %s66 = sphi 0, %s68
    %s69 = sphi 0, %s66
    %s70 = sphi 0, %s69
    %s86 = sphi 0, %s70
    %s92 = sphi 0, %s94
    %s95 = sphi 0, %s92
    %s96 = sphi 0, %s95
    %s112 = sphi 0, %s96
    %s122 = sphi 0, %s124
    %s125 = sphi 0, %s122
    %s126 = sphi 0, %s125
    %s142 = sphi 0, %s126
  $region4: #{resblock_forward.4} parent=0 // loop_header_branch
    %12 = sbr.rel (%p10) target = $region8
  $region5: #{resblock_forward.4} parent=0 // loop_body
    %s14 = ssub.s32 %s9, 1
    %s15 = ssub.s32 %s9, 2
    %s25 = sadd.s32 1, %s18
    %p26 = scmp.ge.s32.totalorder %s25, 1
    %s27 = scalar_select %p26, 0, %s25
    %s28 = sadd.s32 1, %s17
    %s29 = scalar_select %p26, %s28, %s17
    %p30 = scmp.ge.s32.totalorder %s29, 1
    %s31 = scalar_select %p30, 0, %s29
    %s32 = sadd.s32 1, %s16
    %s33 = scalar_select %p30, %s32, %s16
    %p34 = scmp.ge.s32.totalorder %s33, 2
    %s35 = scalar_select %p34, 0, %s33
    %s36 = ssub.s32 %s16, %s35
    %s37 = ssub.s32 %s17, %s31
    %s38 = sor.u32 %s36, %s37
    %p39 = scmp.eq.s32.totalorder %s38, 0
    %s41 = sadd.s32 %s40, 1
    %s42 = scalar_select %p39, %s40, %s41
    %p45 = pneg %p39
    %p46 = scmp.eq.s32.totalorder %s9, 1
    %p47 = por %p45, %p46
    %p48 = scmp.ne.s32.totalorder %s40, %s43
    %p49 = scmp.eq.s32.totalorder %s9, 0
    %p50 = por %p48, %p49
    %p51 = scmp.ne.s32.totalorder %s40, %s43
    %p52 = scmp.eq.s32.totalorder %s14, 1
    %p53 = por %p51, %p52
    %p54 = scmp.ne.s32.totalorder %s43, %s44
    %p55 = scmp.eq.s32.totalorder %s14, 0
    %p56 = por %p54, %p55
    %p57 = scmp.ne.s32.totalorder %s43, %s44
    %p58 = scmp.eq.s32.totalorder %s15, 1
    %p59 = por %p57, %p58
    %p61 = scmp.ne.s32.totalorder %s44, %s60
    %p62 = scmp.eq.s32.totalorder %s15, 0
    %p63 = por %p61, %p62
    %s64 = ssub.s32 %s18, %s27
    %p65 = scmp.eq.s32.totalorder %s64, 0
    %s67 = sadd.s32 %s66, 1
    %s68 = scalar_select %p65, %s66, %s67
    %p71 = pneg %p65
    %p72 = scmp.eq.s32.totalorder %s9, 1
    %p73 = por %p71, %p72
    %p74 = scmp.ne.s32.totalorder %s66, %s69
    %p75 = scmp.eq.s32.totalorder %s9, 0
    %p76 = por %p74, %p75
    %p77 = scmp.ne.s32.totalorder %s66, %s69
    %p78 = scmp.eq.s32.totalorder %s14, 1
    %p79 = por %p77, %p78
    %p80 = scmp.ne.s32.totalorder %s69, %s70
    %p81 = scmp.eq.s32.totalorder %s14, 0
    %p82 = por %p80, %p81
    %p83 = scmp.ne.s32.totalorder %s69, %s70
    %p84 = scmp.eq.s32.totalorder %s15, 1
    %p85 = por %p83, %p84
    %p87 = scmp.ne.s32.totalorder %s70, %s86
    %p88 = scmp.eq.s32.totalorder %s15, 0
    %p89 = por %p87, %p88
    %s90 = ssub.s32 %s18, %s27
    %p91 = scmp.eq.s32.totalorder %s90, 0
    %s93 = sadd.s32 %s92, 1
    %s94 = scalar_select %p91, %s92, %s93
    %p97 = pneg %p91
    %p98 = scmp.eq.s32.totalorder %s9, 1
    %p99 = por %p97, %p98
    %p100 = scmp.ne.s32.totalorder %s92, %s95
    %p101 = scmp.eq.s32.totalorder %s9, 0
    %p102 = por %p100, %p101
    %p103 = scmp.ne.s32.totalorder %s92, %s95
    %p104 = scmp.eq.s32.totalorder %s14, 1
    %p105 = por %p103, %p104
    %p106 = scmp.ne.s32.totalorder %s95, %s96
    %p107 = scmp.eq.s32.totalorder %s14, 0
    %p108 = por %p106, %p107
    %p109 = scmp.ne.s32.totalorder %s95, %s96
    %p110 = scmp.eq.s32.totalorder %s15, 1
    %p111 = por %p109, %p110
    %p113 = scmp.ne.s32.totalorder %s96, %s112
    %p114 = scmp.eq.s32.totalorder %s15, 0
    %p115 = por %p113, %p114
    %s116 = ssub.s32 %s16, %s35
    %s117 = ssub.s32 %s17, %s31
    %s118 = sor.u32 %s116, %s117
    %s119 = ssub.s32 %s18, %s27
    %s120 = sor.u32 %s118, %s119
    %p121 = scmp.eq.s32.totalorder %s120, 0
    %s123 = sadd.s32 %s122, 1
    %s124 = scalar_select %p121, %s122, %s123
    %p127 = pneg %p121
    %p128 = scmp.eq.s32.totalorder %s9, 1
    %p129 = por %p127, %p128
    %p130 = scmp.ne.s32.totalorder %s122, %s125
    %p131 = scmp.eq.s32.totalorder %s9, 0
    %p132 = por %p130, %p131
    %p133 = scmp.ne.s32.totalorder %s122, %s125
    %p134 = scmp.eq.s32.totalorder %s14, 1
    %p135 = por %p133, %p134
    %p136 = scmp.ne.s32.totalorder %s125, %s126
    %p137 = scmp.eq.s32.totalorder %s14, 0
    %p138 = por %p136, %p137
    %p139 = scmp.ne.s32.totalorder %s125, %s126
    %p140 = scmp.eq.s32.totalorder %s15, 1
    %p141 = por %p139, %p140
    %p143 = scmp.ne.s32.totalorder %s126, %s142
    %p144 = scmp.eq.s32.totalorder %s15, 0
    %p145 = por %p143, %p144
    %p146 = scmp.le.s32.totalorder 1, %s9
    %p147 = scmp.lt.s32.totalorder %s9, 3
    %p148 = pnand %p146, %p147
    %p149 = pneg %p148
    // Predicated region
    $region9: #{resblock_forward.4} parent=5 // pred_check
      _
    $region10: #{resblock_forward.4} parent=5 // pred_check_branch
      %151 = sbr.rel (%p148) target = $region12
    $region11: #{resblock_forward.4} parent=5 // pred_region
      %s152 = ssub.s32 %s9, 1
      // Predicated region
      $region13: #{resblock_forward.4} parent=11 // pred_check
        %p153 = pneg %p82
      $region14: #{resblock_forward.4} parent=11 // pred_check_branch
        %155 = sbr.rel (%p153) target = $region16
      $region15: #{resblock_forward.4} parent=11 // pred_region
        %p156 = scmp.lt.s32.totalorder %s21, 0
        %s157 = scalar_select %p156, %s21, 0
        %s158 = smul.addr %s157, 4
        %s159 = scalar_lea.vmem %s1, %s158
      $region16: #{resblock_forward.4} parent=11 // pred_fallthru
        _
      // Predicated region
      $region17: #{resblock_forward.4} parent=11 // pred_check
        %p160 = pneg %p108
      $region18: #{resblock_forward.4} parent=11 // pred_check_branch
        %162 = sbr.rel (%p160) target = $region20
      $region19: #{resblock_forward.4} parent=11 // pred_region
        %p163 = scmp.lt.s32.totalorder %s21, 0
        %s164 = scalar_select %p163, %s21, 0
        %s165 = scalar_lea.vmem %s2, %s164
      $region20: #{resblock_forward.4} parent=11 // pred_fallthru
        _
    $region12: #{resblock_forward.4} parent=5 // pred_fallthru
      _
    %p166 = scmp.lt.s32.totalorder %s9, 2
    // Predicated region
    $region21: #{resblock_forward.4} parent=5 // pred_check
      %p167 = pneg %p166
    $region22: #{resblock_forward.4} parent=5 // pred_check_branch
      %169 = sbr.rel (%p167) target = $region24
    $region23: #{resblock_forward.4} parent=5 // pred_region
      // Predicated region
      $region25: #{resblock_forward.4} parent=23 // pred_check
        %p170 = pneg %p50
      $region26: #{resblock_forward.4} parent=23 // pred_check_branch
        %172 = sbr.rel (%p170) target = $region28
      $region27: #{resblock_forward.4} parent=23 // pred_region
        %s173 = smul.u32 8, %s17
        %p174 = scmp.lt.s32.totalorder %s16, 1
        %s175 = scalar_select %p174, %s16, 1
        %p176 = scmp.lt.s32.totalorder %s173, 7
        %s177 = scalar_select %p176, %s173, 7
        %s178 = smul.addr %s175, 48
        %s179 = sadd.s32 %s177, %s178
        %s180 = smul.addr %s179, 4
        %s181 = scalar_lea.vmem %s0, %s180
        %s182 = smul.u32 8, %s17
      $region28: #{resblock_forward.4} parent=23 // pred_fallthru
        _
    $region24: #{resblock_forward.4} parent=5 // pred_fallthru
      _
    %p183 = scmp.le.s32.totalorder 1, %s9
    %p184 = scmp.lt.s32.totalorder %s9, 3
    %p185 = pnand %p183, %p184
    %p186 = pneg %p185
    // Predicated region
    $region29: #{resblock_forward.4} parent=5 // pred_check
      _
    $region30: #{resblock_forward.4} parent=5 // pred_check_branch
      %188 = sbr.rel (%p185) target = $region32
    $region31: #{resblock_forward.4} parent=5 // pred_region
      %s189 = ssub.s32 %s9, 1
      %s190 = smul.u32 8, %s20
      %p191 = scmp.lt.s32.totalorder %s19, 1
      %s192 = scalar_select %p191, %s19, 1
      %p193 = scmp.lt.s32.totalorder %s190, 7
      %s194 = scalar_select %p193, %s190, 7
      %s195 = smul.addr %s192, 48
      %s196 = sadd.s32 %s194, %s195
      %s197 = smul.addr %s196, 4
      %s198 = scalar_lea.vmem %s0, %s197
      %p199 = pneg %p56
      %p200 = pneg %p53
      %p201 = scmp.lt.s32.totalorder %s21, 0
      %s202 = scalar_select %p201, %s21, 0
      %s203 = smul.addr %s202, 4
      %s204 = scalar_lea.vmem %s1, %s203
      %p205 = pneg %p82
      %p206 = pneg %p79
      %p207 = scmp.lt.s32.totalorder %s21, 0
      %s208 = scalar_select %p207, %s21, 0
      %s209 = scalar_lea.vmem %s2, %s208
      %p210 = pneg %p108
      %p211 = pneg %p105
      %p212 = pneg %p138
      %p213 = pneg %p135
      %s214 = smul.u32 8, %s20
      %p215 = scmp.lt.s32.totalorder %s19, 1
      %s216 = scalar_select %p215, %s19, 1
      %p217 = scmp.lt.s32.totalorder %s214, 7
      %s218 = scalar_select %p217, %s214, 7
      %p219 = scmp.lt.s32.totalorder %s21, 0
      %s220 = scalar_select %p219, %s21, 0
      %s221 = sadd.s32 %s220, %s218
      %s222 = smul.addr %s216, 32
      %s223 = sadd.s32 %s221, %s222
      %s224 = smul.addr %s223, 4
      %s225 = scalar_lea.vmem %s3, %s224
      %s226 = smul.u32 8, %s20
      %p227 = scmp.lt.s32.totalorder %s19, 1
      %s228 = scalar_select %p227, %s19, 1
      %p229 = scmp.lt.s32.totalorder %s226, 7
      %s230 = scalar_select %p229, %s226, 7
      %s231 = smul.addr %s228, 48
      %s232 = sadd.s32 %s230, %s231
      %s233 = smul.addr %s232, 4
      %s234 = scalar_lea.vmem %s0, %s233
      %s235 = smul.u32 8, %s20
      %p236 = scmp.lt.s32.totalorder %s21, 0
      %s237 = scalar_select %p236, %s21, 0
      %s238 = smul.addr %s237, 4
      %s239 = scalar_lea.vmem %s1, %s238
      %p240 = scmp.lt.s32.totalorder %s21, 0
      %s241 = scalar_select %p240, %s21, 0
      %s242 = scalar_lea.vmem %s2, %s241
      %s243 = smul.u32 8, %s20
      %p244 = scmp.lt.s32.totalorder %s19, 1
      %s245 = scalar_select %p244, %s19, 1
      %p246 = scmp.lt.s32.totalorder %s243, 7
      %s247 = scalar_select %p246, %s243, 7
      %p248 = scmp.lt.s32.totalorder %s21, 0
      %s249 = scalar_select %p248, %s21, 0
      %s250 = sadd.s32 %s249, %s247
      %s251 = smul.addr %s245, 32
      %s252 = sadd.s32 %s250, %s251
      %s253 = smul.addr %s252, 4
      %s254 = scalar_lea.vmem %s3, %s253
      %s255 = smul.u32 8, %s20
      %v257 = vld [vmem:[%s234] sm:$0xf]
      %v258 = vld [vmem:[%s234 + $0x4] sm:$0xf]
      %v259 = vld [vmem:[%s234 + $0x8] sm:$0xf]
      %v260 = vld [vmem:[%s234 + $0xc] sm:$0xf]
      %v261 = vld [vmem:[%s234 + $0x10] sm:$0xf]
      %v262 = vld [vmem:[%s234 + $0x14] sm:$0xf]
      %v263 = vld [vmem:[%s234 + $0x18] sm:$0xf]
      %v264 = vld [vmem:[%s234 + $0x1c] sm:$0xf]
      %v265 = vld [vmem:[%s234 + $0x20] sm:$0xf]
      %v266 = vld [vmem:[%s234 + $0x24] sm:$0xf]
      %v267 = vld [vmem:[%s234 + $0x28] sm:$0xf]
      %v268 = vld [vmem:[%s234 + $0x2c] sm:$0xf]
      %v269 = vld [vmem:[%s234 + $0x30] sm:$0xf]
      %v270 = vld [vmem:[%s234 + $0x34] sm:$0xf]
      %v271 = vld [vmem:[%s234 + $0x38] sm:$0xf]
      %v272 = vld [vmem:[%s234 + $0x3c] sm:$0xf]
      %v273 = vld [vmem:[%s234 + $0x40] sm:$0xf]
      %v274 = vld [vmem:[%s234 + $0x44] sm:$0xf]
      %v275 = vld [vmem:[%s234 + $0x48] sm:$0xf]
      %v276 = vld [vmem:[%s234 + $0x4c] sm:$0xf]
      %v277 = vld [vmem:[%s234 + $0x50] sm:$0xf]
      %v278 = vld [vmem:[%s234 + $0x54] sm:$0xf]
      %v279 = vld [vmem:[%s234 + $0x58] sm:$0xf]
      %v280 = vld [vmem:[%s234 + $0x5c] sm:$0xf]
      %v281 = vld [vmem:[%s234 + $0x60] sm:$0xf]
      %v282 = vld [vmem:[%s234 + $0x64] sm:$0xf]
      %v283 = vld [vmem:[%s234 + $0x68] sm:$0xf]
      %v284 = vld [vmem:[%s234 + $0x6c] sm:$0xf]
      %v285 = vld [vmem:[%s234 + $0x70] sm:$0xf]
      %v286 = vld [vmem:[%s234 + $0x74] sm:$0xf]
      %v287 = vld [vmem:[%s234 + $0x78] sm:$0xf]
      %v288 = vld [vmem:[%s234 + $0x7c] sm:$0xf]
      %s289 = scalar_lea.vmem %s234, 32
      %v290 = vld [vmem:[%s289] sm:$0xf]
      %v291 = vld [vmem:[%s289 + $0x4] sm:$0xf]
      %v292 = vld [vmem:[%s289 + $0x8] sm:$0xf]
      %v293 = vld [vmem:[%s289 + $0xc] sm:$0xf]
      %v294 = vld [vmem:[%s289 + $0x10] sm:$0xf]
      %v295 = vld [vmem:[%s289 + $0x14] sm:$0xf]
      %v296 = vld [vmem:[%s289 + $0x18] sm:$0xf]
      %v297 = vld [vmem:[%s289 + $0x1c] sm:$0xf]
      %v298 = vld [vmem:[%s289 + $0x20] sm:$0xf]
      %v299 = vld [vmem:[%s289 + $0x24] sm:$0xf]
      %v300 = vld [vmem:[%s289 + $0x28] sm:$0xf]
      %v301 = vld [vmem:[%s289 + $0x2c] sm:$0xf]
      %v302 = vld [vmem:[%s289 + $0x30] sm:$0xf]
      %v303 = vld [vmem:[%s289 + $0x34] sm:$0xf]
      %v304 = vld [vmem:[%s289 + $0x38] sm:$0xf]
      %v305 = vld [vmem:[%s289 + $0x3c] sm:$0xf]
      %v306 = vld [vmem:[%s289 + $0x40] sm:$0xf]
      %v307 = vld [vmem:[%s289 + $0x44] sm:$0xf]
      %v308 = vld [vmem:[%s289 + $0x48] sm:$0xf]
      %v309 = vld [vmem:[%s289 + $0x4c] sm:$0xf]
      %v310 = vld [vmem:[%s289 + $0x50] sm:$0xf]
      %v311 = vld [vmem:[%s289 + $0x54] sm:$0xf]
      %v312 = vld [vmem:[%s289 + $0x58] sm:$0xf]
      %v313 = vld [vmem:[%s289 + $0x5c] sm:$0xf]
      %v314 = vld [vmem:[%s289 + $0x60] sm:$0xf]
      %v315 = vld [vmem:[%s289 + $0x64] sm:$0xf]
      %v316 = vld [vmem:[%s289 + $0x68] sm:$0xf]
      %v317 = vld [vmem:[%s289 + $0x6c] sm:$0xf]
      %v318 = vld [vmem:[%s289 + $0x70] sm:$0xf]
      %v319 = vld [vmem:[%s289 + $0x74] sm:$0xf]
      %v320 = vld [vmem:[%s289 + $0x78] sm:$0xf]
      %v321 = vld [vmem:[%s289 + $0x7c] sm:$0xf]
      %s322 = scalar_lea.vmem %s234, 64
      %v323 = vld [vmem:[%s322] sm:$0xf]
      %v324 = vld [vmem:[%s322 + $0x4] sm:$0xf]
      %v325 = vld [vmem:[%s322 + $0x8] sm:$0xf]
      %v326 = vld [vmem:[%s322 + $0xc] sm:$0xf]
      %v327 = vld [vmem:[%s322 + $0x10] sm:$0xf]
      %v328 = vld [vmem:[%s322 + $0x14] sm:$0xf]
      %v329 = vld [vmem:[%s322 + $0x18] sm:$0xf]
      %v330 = vld [vmem:[%s322 + $0x1c] sm:$0xf]
      %v331 = vld [vmem:[%s322 + $0x20] sm:$0xf]
      %v332 = vld [vmem:[%s322 + $0x24] sm:$0xf]
      %v333 = vld [vmem:[%s322 + $0x28] sm:$0xf]
      %v334 = vld [vmem:[%s322 + $0x2c] sm:$0xf]
      %v335 = vld [vmem:[%s322 + $0x30] sm:$0xf]
      %v336 = vld [vmem:[%s322 + $0x34] sm:$0xf]
      %v337 = vld [vmem:[%s322 + $0x38] sm:$0xf]
      %v338 = vld [vmem:[%s322 + $0x3c] sm:$0xf]
      %v339 = vld [vmem:[%s322 + $0x40] sm:$0xf]
      %v340 = vld [vmem:[%s322 + $0x44] sm:$0xf]
      %v341 = vld [vmem:[%s322 + $0x48] sm:$0xf]
      %v342 = vld [vmem:[%s322 + $0x4c] sm:$0xf]
      %v343 = vld [vmem:[%s322 + $0x50] sm:$0xf]
      %v344 = vld [vmem:[%s322 + $0x54] sm:$0xf]
      %v345 = vld [vmem:[%s322 + $0x58] sm:$0xf]
      %v346 = vld [vmem:[%s322 + $0x5c] sm:$0xf]
      %v347 = vld [vmem:[%s322 + $0x60] sm:$0xf]
      %v348 = vld [vmem:[%s322 + $0x64] sm:$0xf]
      %v349 = vld [vmem:[%s322 + $0x68] sm:$0xf]
      %v350 = vld [vmem:[%s322 + $0x6c] sm:$0xf]
      %v351 = vld [vmem:[%s322 + $0x70] sm:$0xf]
      %v352 = vld [vmem:[%s322 + $0x74] sm:$0xf]
      %v353 = vld [vmem:[%s322 + $0x78] sm:$0xf]
      %v354 = vld [vmem:[%s322 + $0x7c] sm:$0xf]
      %v387 = vunpack.c.l.b16 %v257
      %v388 = vunpack.c.l.b16 %v258
      %v389 = vunpack.c.l.b16 %v259
      %v390 = vunpack.c.l.b16 %v260
      %v391 = vunpack.c.l.b16 %v261
      %v392 = vunpack.c.l.b16 %v262
      %v393 = vunpack.c.l.b16 %v263
      %v394 = vunpack.c.l.b16 %v264
      %v395 = vunpack.c.l.b16 %v265
      %v396 = vunpack.c.l.b16 %v266
      %v397 = vunpack.c.l.b16 %v267
      %v398 = vunpack.c.l.b16 %v268
      %v399 = vunpack.c.l.b16 %v269
      %v400 = vunpack.c.l.b16 %v270
      %v401 = vunpack.c.l.b16 %v271
      %v402 = vunpack.c.l.b16 %v272
      %v403 = vunpack.c.l.b16 %v273
      %v404 = vunpack.c.l.b16 %v274
      %v405 = vunpack.c.l.b16 %v275
      %v406 = vunpack.c.l.b16 %v276
      %v407 = vunpack.c.l.b16 %v277
      %v408 = vunpack.c.l.b16 %v278
      %v409 = vunpack.c.l.b16 %v279
      %v410 = vunpack.c.l.b16 %v280
      %v411 = vunpack.c.l.b16 %v281
      %v412 = vunpack.c.l.b16 %v282
      %v413 = vunpack.c.l.b16 %v283
      %v414 = vunpack.c.l.b16 %v284
      %v415 = vunpack.c.l.b16 %v285
      %v416 = vunpack.c.l.b16 %v286
      %v417 = vunpack.c.l.b16 %v287
      %v418 = vunpack.c.l.b16 %v288
      %v419 = vpack.c.b16 %v388, %v387
      %v420 = vpack.c.b16 %v390, %v389
      %v421 = vpack.c.b16 %v392, %v391
      %v422 = vpack.c.b16 %v394, %v393
      %v423 = vpack.c.b16 %v396, %v395
      %v424 = vpack.c.b16 %v398, %v397
      %v425 = vpack.c.b16 %v400, %v399
      %v426 = vpack.c.b16 %v402, %v401
      %v427 = vpack.c.b16 %v404, %v403
      %v428 = vpack.c.b16 %v406, %v405
      %v429 = vpack.c.b16 %v408, %v407
      %v430 = vpack.c.b16 %v410, %v409
      %v431 = vpack.c.b16 %v412, %v411
      %v432 = vpack.c.b16 %v414, %v413
      %v433 = vpack.c.b16 %v416, %v415
      %v434 = vpack.c.b16 %v418, %v417
      %v467 = vunpack.c.l.b16 %v290
      %v468 = vunpack.c.l.b16 %v291
      %v469 = vunpack.c.l.b16 %v292
      %v470 = vunpack.c.l.b16 %v293
      %v471 = vunpack.c.l.b16 %v294
      %v472 = vunpack.c.l.b16 %v295
      %v473 = vunpack.c.l.b16 %v296
      %v474 = vunpack.c.l.b16 %v297
      %v475 = vunpack.c.l.b16 %v298
      %v476 = vunpack.c.l.b16 %v299
      %v477 = vunpack.c.l.b16 %v300
      %v478 = vunpack.c.l.b16 %v301
      %v479 = vunpack.c.l.b16 %v302
      %v480 = vunpack.c.l.b16 %v303
      %v481 = vunpack.c.l.b16 %v304
      %v482 = vunpack.c.l.b16 %v305
      %v483 = vunpack.c.l.b16 %v306
      %v484 = vunpack.c.l.b16 %v307
      %v485 = vunpack.c.l.b16 %v308
      %v486 = vunpack.c.l.b16 %v309
      %v487 = vunpack.c.l.b16 %v310
      %v488 = vunpack.c.l.b16 %v311
      %v489 = vunpack.c.l.b16 %v312
      %v490 = vunpack.c.l.b16 %v313
      %v491 = vunpack.c.l.b16 %v314
      %v492 = vunpack.c.l.b16 %v315
      %v493 = vunpack.c.l.b16 %v316
      %v494 = vunpack.c.l.b16 %v317
      %v495 = vunpack.c.l.b16 %v318
      %v496 = vunpack.c.l.b16 %v319
      %v497 = vunpack.c.l.b16 %v320
      %v498 = vunpack.c.l.b16 %v321
      %v499 = vpack.c.b16 %v468, %v467
      %v500 = vpack.c.b16 %v470, %v469
      %v501 = vpack.c.b16 %v472, %v471
      %v502 = vpack.c.b16 %v474, %v473
      %v503 = vpack.c.b16 %v476, %v475
      %v504 = vpack.c.b16 %v478, %v477
      %v505 = vpack.c.b16 %v480, %v479
      %v506 = vpack.c.b16 %v482, %v481
      %v507 = vpack.c.b16 %v484, %v483
      %v508 = vpack.c.b16 %v486, %v485
      %v509 = vpack.c.b16 %v488, %v487
      %v510 = vpack.c.b16 %v490, %v489
      %v511 = vpack.c.b16 %v492, %v491
      %v512 = vpack.c.b16 %v494, %v493
      %v513 = vpack.c.b16 %v496, %v495
      %v514 = vpack.c.b16 %v498, %v497
      %515 = vrot.lane.b32.xlu0 %v499, 16
      %v516 = vpop.permute.xlu0 %515
      %517 = vrot.lane.b32.xlu0 %v500, 16
      %v518 = vpop.permute.xlu0 %517
      %519 = vrot.lane.b32.xlu0 %v501, 16
      %v520 = vpop.permute.xlu0 %519
      %521 = vrot.lane.b32.xlu0 %v502, 16
      %v522 = vpop.permute.xlu0 %521
      %523 = vrot.lane.b32.xlu0 %v503, 16
      %v524 = vpop.permute.xlu0 %523
      %525 = vrot.lane.b32.xlu0 %v504, 16
      %v526 = vpop.permute.xlu0 %525
      %527 = vrot.lane.b32.xlu0 %v505, 16
      %v528 = vpop.permute.xlu0 %527
      %529 = vrot.lane.b32.xlu0 %v506, 16
      %v530 = vpop.permute.xlu0 %529
      %531 = vrot.lane.b32.xlu0 %v507, 16
      %v532 = vpop.permute.xlu0 %531
      %533 = vrot.lane.b32.xlu0 %v508, 16
      %v534 = vpop.permute.xlu0 %533
      %535 = vrot.lane.b32.xlu0 %v509, 16
      %v536 = vpop.permute.xlu0 %535
      %537 = vrot.lane.b32.xlu0 %v510, 16
      %v538 = vpop.permute.xlu0 %537
      %539 = vrot.lane.b32.xlu0 %v511, 16
      %v540 = vpop.permute.xlu0 %539
      %541 = vrot.lane.b32.xlu0 %v512, 16
      %v542 = vpop.permute.xlu0 %541
      %543 = vrot.lane.b32.xlu0 %v513, 16
      %v544 = vpop.permute.xlu0 %543
      %545 = vrot.lane.b32.xlu0 %v514, 16
      %v546 = vpop.permute.xlu0 %545
      %v579 = vunpack.c.l.b16 %v323
      %v580 = vunpack.c.l.b16 %v324
      %v581 = vunpack.c.l.b16 %v325
      %v582 = vunpack.c.l.b16 %v326
      %v583 = vunpack.c.l.b16 %v327
      %v584 = vunpack.c.l.b16 %v328
      %v585 = vunpack.c.l.b16 %v329
      %v586 = vunpack.c.l.b16 %v330
      %v587 = vunpack.c.l.b16 %v331
      %v588 = vunpack.c.l.b16 %v332
      %v589 = vunpack.c.l.b16 %v333
      %v590 = vunpack.c.l.b16 %v334
      %v591 = vunpack.c.l.b16 %v335
      %v592 = vunpack.c.l.b16 %v336
      %v593 = vunpack.c.l.b16 %v337
      %v594 = vunpack.c.l.b16 %v338
      %v595 = vunpack.c.l.b16 %v339
      %v596 = vunpack.c.l.b16 %v340
      %v597 = vunpack.c.l.b16 %v341
      %v598 = vunpack.c.l.b16 %v342
      %v599 = vunpack.c.l.b16 %v343
      %v600 = vunpack.c.l.b16 %v344
      %v601 = vunpack.c.l.b16 %v345
      %v602 = vunpack.c.l.b16 %v346
      %v603 = vunpack.c.l.b16 %v347
      %v604 = vunpack.c.l.b16 %v348
      %v605 = vunpack.c.l.b16 %v349
      %v606 = vunpack.c.l.b16 %v350
      %v607 = vunpack.c.l.b16 %v351
      %v608 = vunpack.c.l.b16 %v352
      %v609 = vunpack.c.l.b16 %v353
      %v610 = vunpack.c.l.b16 %v354
      %v611 = vpack.c.b16 %v580, %v579
      %v612 = vpack.c.b16 %v582, %v581
      %v613 = vpack.c.b16 %v584, %v583
      %v614 = vpack.c.b16 %v586, %v585
      %v615 = vpack.c.b16 %v588, %v587
      %v616 = vpack.c.b16 %v590, %v589
      %v617 = vpack.c.b16 %v592, %v591
      %v618 = vpack.c.b16 %v594, %v593
      %v619 = vpack.c.b16 %v596, %v595
      %v620 = vpack.c.b16 %v598, %v597
      %v621 = vpack.c.b16 %v600, %v599
      %v622 = vpack.c.b16 %v602, %v601
      %v623 = vpack.c.b16 %v604, %v603
      %v624 = vpack.c.b16 %v606, %v605
      %v625 = vpack.c.b16 %v608, %v607
      %v626 = vpack.c.b16 %v610, %v609
      %627 = vrot.lane.b32.xlu0 %v611, 32
      %v628 = vpop.permute.xlu0 %627
      %629 = vrot.lane.b32.xlu0 %v612, 32
      %v630 = vpop.permute.xlu0 %629
      %631 = vrot.lane.b32.xlu0 %v613, 32
      %v632 = vpop.permute.xlu0 %631
      %633 = vrot.lane.b32.xlu0 %v614, 32
      %v634 = vpop.permute.xlu0 %633
      %635 = vrot.lane.b32.xlu0 %v615, 32
      %v636 = vpop.permute.xlu0 %635
      %637 = vrot.lane.b32.xlu0 %v616, 32
      %v638 = vpop.permute.xlu0 %637
      %639 = vrot.lane.b32.xlu0 %v617, 32
      %v640 = vpop.permute.xlu0 %639
      %641 = vrot.lane.b32.xlu0 %v618, 32
      %v642 = vpop.permute.xlu0 %641
      %643 = vrot.lane.b32.xlu0 %v619, 32
      %v644 = vpop.permute.xlu0 %643
      %645 = vrot.lane.b32.xlu0 %v620, 32
      %v646 = vpop.permute.xlu0 %645
      %647 = vrot.lane.b32.xlu0 %v621, 32
      %v648 = vpop.permute.xlu0 %647
      %649 = vrot.lane.b32.xlu0 %v622, 32
      %v650 = vpop.permute.xlu0 %649
      %651 = vrot.lane.b32.xlu0 %v623, 32
      %v652 = vpop.permute.xlu0 %651
      %653 = vrot.lane.b32.xlu0 %v624, 32
      %v654 = vpop.permute.xlu0 %653
      %655 = vrot.lane.b32.xlu0 %v625, 32
      %v656 = vpop.permute.xlu0 %655
      %657 = vrot.lane.b32.xlu0 %v626, 32
      %v658 = vpop.permute.xlu0 %657
      %vm659 = vcmask 130048
      %v662 = vsel %vm659, %v419, %v516
      %v665 = vsel %vm659, %v420, %v518
      %v668 = vsel %vm659, %v421, %v520
      %v671 = vsel %vm659, %v422, %v522
      %v674 = vsel %vm659, %v423, %v524
      %v677 = vsel %vm659, %v424, %v526
      %v680 = vsel %vm659, %v425, %v528
      %v683 = vsel %vm659, %v426, %v530
      %v686 = vsel %vm659, %v427, %v532
      %v689 = vsel %vm659, %v428, %v534
      %v692 = vsel %vm659, %v429, %v536
      %v695 = vsel %vm659, %v430, %v538
      %v698 = vsel %vm659, %v431, %v540
      %v701 = vsel %vm659, %v432, %v542
      %v704 = vsel %vm659, %v433, %v544
      %v707 = vsel %vm659, %v434, %v546
      %vm708 = vcmask 261120
      %v710 = vsel %vm708, %v662, %v628
      %v712 = vsel %vm708, %v665, %v630
      %v714 = vsel %vm708, %v668, %v632
      %v716 = vsel %vm708, %v671, %v634
      %v718 = vsel %vm708, %v674, %v636
      %v720 = vsel %vm708, %v677, %v638
      %v722 = vsel %vm708, %v680, %v640
      %v724 = vsel %vm708, %v683, %v642
      %v726 = vsel %vm708, %v686, %v644
      %v728 = vsel %vm708, %v689, %v646
      %v730 = vsel %vm708, %v692, %v648
      %v732 = vsel %vm708, %v695, %v650
      %v734 = vsel %vm708, %v698, %v652
      %v736 = vsel %vm708, %v701, %v654
      %v738 = vsel %vm708, %v704, %v656
      %v740 = vsel %vm708, %v707, %v658
      %v741 = vld [vmem:[%s239] sm:$0xf]
      %v742 = vld [vmem:[%s239 + $0x4] sm:$0xf]
      %v743 = vld [vmem:[%s239 + $0x8] sm:$0xf]
      %v744 = vld [vmem:[%s239 + $0xc] sm:$0xf]
      %v745 = vld [vmem:[%s239 + $0x10] sm:$0xf]
      %v746 = vld [vmem:[%s239 + $0x14] sm:$0xf]
      %v747 = vld [vmem:[%s242] sm:$0x1]
      %v749 = vperm.slane %v747, 0
      %v757 = vunpack.c.l.b16 %v741
      %v758 = vunpack.c.l.b16 %v742
      %v759 = vunpack.c.l.b16 %v743
      %v760 = vunpack.c.l.b16 %v744
      %v761 = vunpack.c.l.b16 %v745
      %v762 = vunpack.c.l.b16 %v746
      %v763 = vpack.c.b16 %v758, %v757
      %v764 = vpack.c.b16 %v760, %v759
      %v765 = vpack.c.b16 %v762, %v761
      %vm769 = vcmask 392192
      %v770 = vsel %vm769, %v710, 0
      %v772 = vsel %vm769, %v712, 0
      %v774 = vsel %vm769, %v714, 0
      %v776 = vsel %vm769, %v716, 0
      %v778 = vsel %vm769, %v718, 0
      %v780 = vsel %vm769, %v720, 0
      %v782 = vsel %vm769, %v722, 0
      %v784 = vsel %vm769, %v724, 0
      %v786 = vsel %vm769, %v726, 0
      %v788 = vsel %vm769, %v728, 0
      %v790 = vsel %vm769, %v730, 0
      %v792 = vsel %vm769, %v732, 0
      %v794 = vsel %vm769, %v734, 0
      %v796 = vsel %vm769, %v736, 0
      %v798 = vsel %vm769, %v738, 0
      %v800 = vsel %vm769, %v740, 0
      %802 = vmatpush.bf16.msra.mxu0 0
      %803 = vmatpush.bf16.msra.mxu0 0
      %804 = vmatpush.bf16.msra.mxu0 0
      %805 = vmatpush.bf16.msra.mxu0 0
      %806 = vmatpush.bf16.msra.mxu0 0
      %807 = vmatpush.bf16.msra.mxu0 %v765
      %808 = vmatpush.bf16.msra.mxu0 %v764
      %809 = vmatpush.bf16.msra.mxu0 %v763
      %810 = vmatmul.bf16.gmra.mxu0 %v770
      %v811 = vpop.f32.mrf.mxu0
      %v812 = vadd.f32 %v749, %v811
      %v813 = vpop.f32.mrf.mxu0
      %v814 = vadd.f32 %v749, %v813
      %815 = vmatmul.bf16.gmra.mxu0 %v772
      %v816 = vpop.f32.mrf.mxu0
      %v817 = vadd.f32 %v749, %v816
      %v818 = vpop.f32.mrf.mxu0
      %v819 = vadd.f32 %v749, %v818
      %820 = vmatmul.bf16.gmra.mxu0 %v774
      %v821 = vpop.f32.mrf.mxu0
      %v822 = vadd.f32 %v749, %v821
      %v823 = vpop.f32.mrf.mxu0
      %v824 = vadd.f32 %v749, %v823
      %825 = vmatmul.bf16.gmra.mxu0 %v776
      %v826 = vpop.f32.mrf.mxu0
      %v827 = vadd.f32 %v749, %v826
      %v828 = vpop.f32.mrf.mxu0
      %v829 = vadd.f32 %v749, %v828
      %830 = vmatmul.bf16.gmra.mxu0 %v778
      %v831 = vpop.f32.mrf.mxu0
      %v832 = vadd.f32 %v749, %v831
      %v833 = vpop.f32.mrf.mxu0
      %v834 = vadd.f32 %v749, %v833
      %835 = vmatmul.bf16.gmra.mxu0 %v780
      %v836 = vpop.f32.mrf.mxu0
      %v837 = vadd.f32 %v749, %v836
      %v838 = vpop.f32.mrf.mxu0
      %v839 = vadd.f32 %v749, %v838
      %840 = vmatmul.bf16.gmra.mxu0 %v782
      %v841 = vpop.f32.mrf.mxu0
      %v842 = vadd.f32 %v749, %v841
      %v843 = vpop.f32.mrf.mxu0
      %v844 = vadd.f32 %v749, %v843
      %845 = vmatmul.bf16.gmra.mxu0 %v784
      %v846 = vpop.f32.mrf.mxu0
      %v847 = vadd.f32 %v749, %v846
      %v848 = vpop.f32.mrf.mxu0
      %v849 = vadd.f32 %v749, %v848
      %850 = vmatmul.bf16.gmra.mxu0 %v786
      %v851 = vpop.f32.mrf.mxu0
      %v852 = vadd.f32 %v749, %v851
      %v853 = vpop.f32.mrf.mxu0
      %v854 = vadd.f32 %v749, %v853
      %855 = vmatmul.bf16.gmra.mxu0 %v788
      %v856 = vpop.f32.mrf.mxu0
      %v857 = vadd.f32 %v749, %v856
      %v858 = vpop.f32.mrf.mxu0
      %v859 = vadd.f32 %v749, %v858
      %860 = vmatmul.bf16.gmra.mxu0 %v790
      %v861 = vpop.f32.mrf.mxu0
      %v862 = vadd.f32 %v749, %v861
      %v863 = vpop.f32.mrf.mxu0
      %v864 = vadd.f32 %v749, %v863
      %865 = vmatmul.bf16.gmra.mxu0 %v792
      %v866 = vpop.f32.mrf.mxu0
      %v867 = vadd.f32 %v749, %v866
      %v868 = vpop.f32.mrf.mxu0
      %v869 = vadd.f32 %v749, %v868
      %870 = vmatmul.bf16.gmra.mxu0 %v794
      %v871 = vpop.f32.mrf.mxu0
      %v872 = vadd.f32 %v749, %v871
      %v873 = vpop.f32.mrf.mxu0
      %v874 = vadd.f32 %v749, %v873
      %875 = vmatmul.bf16.gmra.mxu0 %v796
      %v876 = vpop.f32.mrf.mxu0
      %v877 = vadd.f32 %v749, %v876
      %v878 = vpop.f32.mrf.mxu0
      %v879 = vadd.f32 %v749, %v878
      %880 = vmatmul.bf16.gmra.mxu0 %v798
      %v881 = vpop.f32.mrf.mxu0
      %v882 = vadd.f32 %v749, %v881
      %v883 = vpop.f32.mrf.mxu0
      %v884 = vadd.f32 %v749, %v883
      %885 = vmatmul.bf16.gmra.mxu0 %v800
      %v886 = vpop.f32.mrf.mxu0
      %v887 = vadd.f32 %v749, %v886
      %v888 = vpop.f32.mrf.mxu0
      %v889 = vadd.f32 %v749, %v888
      %890 = vdwg.mxu0
      %v891 = vmax.f32 %v812, 0.0
      %v892 = vmax.f32 %v814, 0.0
      %v893 = vmax.f32 %v817, 0.0
      %v894 = vmax.f32 %v819, 0.0
      %v895 = vmax.f32 %v822, 0.0
      %v896 = vmax.f32 %v824, 0.0
      %v897 = vmax.f32 %v827, 0.0
      %v898 = vmax.f32 %v829, 0.0
      %v899 = vmax.f32 %v832, 0.0
      %v900 = vmax.f32 %v834, 0.0
      %v901 = vmax.f32 %v837, 0.0
      %v902 = vmax.f32 %v839, 0.0
      %v903 = vmax.f32 %v842, 0.0
      %v904 = vmax.f32 %v844, 0.0
      %v905 = vmax.f32 %v847, 0.0
      %v906 = vmax.f32 %v849, 0.0
      %v907 = vmax.f32 %v852, 0.0
      %v908 = vmax.f32 %v854, 0.0
      %v909 = vmax.f32 %v857, 0.0
      %v910 = vmax.f32 %v859, 0.0
      %v911 = vmax.f32 %v862, 0.0
      %v912 = vmax.f32 %v864, 0.0
      %v913 = vmax.f32 %v867, 0.0
      %v914 = vmax.f32 %v869, 0.0
      %v915 = vmax.f32 %v872, 0.0
      %v916 = vmax.f32 %v874, 0.0
      %v917 = vmax.f32 %v877, 0.0
      %v918 = vmax.f32 %v879, 0.0
      %v919 = vmax.f32 %v882, 0.0
      %v920 = vmax.f32 %v884, 0.0
      %v921 = vmax.f32 %v887, 0.0
      %v922 = vmax.f32 %v889, 0.0
      %v923 = vpack.c.bf16 %v891, %v891
      %v924 = vpack.c.bf16 %v892, %v892
      %v925 = vpack.c.bf16 %v893, %v893
      %v926 = vpack.c.bf16 %v894, %v894
      %v927 = vpack.c.bf16 %v895, %v895
      %v928 = vpack.c.bf16 %v896, %v896
      %v929 = vpack.c.bf16 %v897, %v897
      %v930 = vpack.c.bf16 %v898, %v898
      %v931 = vpack.c.bf16 %v899, %v899
      %v932 = vpack.c.bf16 %v900, %v900
      %v933 = vpack.c.bf16 %v901, %v901
      %v934 = vpack.c.bf16 %v902, %v902
      %v935 = vpack.c.bf16 %v903, %v903
      %v936 = vpack.c.bf16 %v904, %v904
      %v937 = vpack.c.bf16 %v905, %v905
      %v938 = vpack.c.bf16 %v906, %v906
      %v939 = vpack.c.bf16 %v907, %v907
      %v940 = vpack.c.bf16 %v908, %v908
      %v941 = vpack.c.bf16 %v909, %v909
      %v942 = vpack.c.bf16 %v910, %v910
      %v943 = vpack.c.bf16 %v911, %v911
      %v944 = vpack.c.bf16 %v912, %v912
      %v945 = vpack.c.bf16 %v913, %v913
      %v946 = vpack.c.bf16 %v914, %v914
      %v947 = vpack.c.bf16 %v915, %v915
      %v948 = vpack.c.bf16 %v916, %v916
      %v949 = vpack.c.bf16 %v917, %v917
      %v950 = vpack.c.bf16 %v918, %v918
      %v951 = vpack.c.bf16 %v919, %v919
      %v952 = vpack.c.bf16 %v920, %v920
      %v953 = vpack.c.bf16 %v921, %v921
      %v954 = vpack.c.bf16 %v922, %v922
      %955 = vst [vmem:[%s254] sm:$0xf] %v923
      %956 = vst [vmem:[%s254 + $0x4] sm:$0xf] %v924
      %957 = vst [vmem:[%s254 + $0x8] sm:$0xf] %v925
      %958 = vst [vmem:[%s254 + $0xc] sm:$0xf] %v926
      %959 = vst [vmem:[%s254 + $0x10] sm:$0xf] %v927
      %960 = vst [vmem:[%s254 + $0x14] sm:$0xf] %v928
      %961 = vst [vmem:[%s254 + $0x18] sm:$0xf] %v929
      %962 = vst [vmem:[%s254 + $0x1c] sm:$0xf] %v930
      %963 = vst [vmem:[%s254 + $0x20] sm:$0xf] %v931
      %964 = vst [vmem:[%s254 + $0x24] sm:$0xf] %v932
      %965 = vst [vmem:[%s254 + $0x28] sm:$0xf] %v933
      %966 = vst [vmem:[%s254 + $0x2c] sm:$0xf] %v934
      %967 = vst [vmem:[%s254 + $0x30] sm:$0xf] %v935
      %968 = vst [vmem:[%s254 + $0x34] sm:$0xf] %v936
      %969 = vst [vmem:[%s254 + $0x38] sm:$0xf] %v937
      %970 = vst [vmem:[%s254 + $0x3c] sm:$0xf] %v938
      %971 = vst [vmem:[%s254 + $0x40] sm:$0xf] %v939
      %972 = vst [vmem:[%s254 + $0x44] sm:$0xf] %v940
      %973 = vst [vmem:[%s254 + $0x48] sm:$0xf] %v941
      %974 = vst [vmem:[%s254 + $0x4c] sm:$0xf] %v942
      %975 = vst [vmem:[%s254 + $0x50] sm:$0xf] %v943
      %976 = vst [vmem:[%s254 + $0x54] sm:$0xf] %v944
      %977 = vst [vmem:[%s254 + $0x58] sm:$0xf] %v945
      %978 = vst [vmem:[%s254 + $0x5c] sm:$0xf] %v946
      %979 = vst [vmem:[%s254 + $0x60] sm:$0xf] %v947
      %980 = vst [vmem:[%s254 + $0x64] sm:$0xf] %v948
      %981 = vst [vmem:[%s254 + $0x68] sm:$0xf] %v949
      %982 = vst [vmem:[%s254 + $0x6c] sm:$0xf] %v950
      %983 = vst [vmem:[%s254 + $0x70] sm:$0xf] %v951
      %984 = vst [vmem:[%s254 + $0x74] sm:$0xf] %v952
      %985 = vst [vmem:[%s254 + $0x78] sm:$0xf] %v953
      %986 = vst [vmem:[%s254 + $0x7c] sm:$0xf] %v954
      %s987 = smul.u32 8, %s20
      %p988 = scmp.lt.s32.totalorder %s19, 1
      %s989 = scalar_select %p988, %s19, 1
      %p990 = scmp.lt.s32.totalorder %s987, 7
      %s991 = scalar_select %p990, %s987, 7
      %p992 = scmp.lt.s32.totalorder %s21, 0
      %s993 = scalar_select %p992, %s21, 0
      %s994 = sadd.s32 %s993, %s991
      %s995 = smul.addr %s989, 32
      %s996 = sadd.s32 %s994, %s995
      %s997 = smul.addr %s996, 4
      %s998 = scalar_lea.vmem %s3, %s997
      // Predicated region
      $region33: #{resblock_forward.4} parent=31 // pred_check
        %p999 = pneg %p135
      $region34: #{resblock_forward.4} parent=31 // pred_check_branch
        %1001 = sbr.rel (%p999) target = $region36
      $region35: #{resblock_forward.4} parent=31 // pred_region
        %s1002 = smul.u32 8, %s20
      $region36: #{resblock_forward.4} parent=31 // pred_fallthru
        _
    $region32: #{resblock_forward.4} parent=5 // pred_fallthru
      _
    %p1003 = scmp.le.s32.totalorder 2, %s9
    // Predicated region
    $region37: #{resblock_forward.4} parent=5 // pred_check
      %p1004 = pneg %p1003
    $region38: #{resblock_forward.4} parent=5 // pred_check_branch
      %1006 = sbr.rel (%p1004) target = $region40
    $region39: #{resblock_forward.4} parent=5 // pred_region
      %s1007 = ssub.s32 %s9, 2
      // Predicated region
      $region41: #{resblock_forward.4} parent=39 // pred_check
        %p1008 = pneg %p141
      $region42: #{resblock_forward.4} parent=39 // pred_check_branch
        %1010 = sbr.rel (%p1008) target = $region44
      $region43: #{resblock_forward.4} parent=39 // pred_region
        %s1011 = smul.u32 8, %s23
        %p1012 = scmp.lt.s32.totalorder %s22, 1
        %s1013 = scalar_select %p1012, %s22, 1
        %p1014 = scmp.lt.s32.totalorder %s1011, 7
        %s1015 = scalar_select %p1014, %s1011, 7
        %p1016 = scmp.lt.s32.totalorder %s24, 0
        %s1017 = scalar_select %p1016, %s24, 0
        %s1018 = sadd.s32 %s1017, %s1015
        %s1019 = smul.addr %s1013, 32
        %s1020 = sadd.s32 %s1018, %s1019
        %s1021 = smul.addr %s1020, 4
        %s1022 = scalar_lea.vmem %s3, %s1021
      $region44: #{resblock_forward.4} parent=39 // pred_fallthru
        _
    $region40: #{resblock_forward.4} parent=5 // pred_fallthru
      _
  $region6: #{resblock_forward.4} parent=0 // loop_footer
    %s13 = sadd.s32 1, %s9
  $region7: #{resblock_forward.4} parent=0 // loop_footer_branch
    %8 = sbr.rel target = $region3
  $region8: #{resblock_forward.4} parent=0 // loop_exit
    _

// kernel: resblock_forward.6
$region0: #{resblock_forward.6}
  #allocation0 [shape = 'u32[]', space=smem, size = 0x4, offset = 0x4, fixed_abs, tag = 'smem constant byte address 0x4 - core index']
  #allocation1 [shape = 'u32[72,128]{1,0:T(1,128)}', space=vmem, size = 0x9000, scoped, tag = 'internal scratch']
  %s0 = inlined_call_operand.vmem [shape: bf16[128,128], index: 0, kind: input, shape index: {}]
  %s1 = inlined_call_operand.vmem [shape: bf16[128,128], index: 1, kind: input, shape index: {}]
  %s2 = inlined_call_operand.vmem [shape: f32[1,128], index: 2, kind: input, shape index: {}]
  %s3 = inlined_call_operand.vmem [shape: bf16[128,128], index: 3, kind: output, shape index: {}]
  %s4 = sld [smem:[#allocation0]]
  $region22: #{resblock_forward.6} parent=0
    _
  %s6 = ssub.s32 1, %s4
  %s7 = scalar_select 0, %s6, %s4
  // Predicated region
  $region2: #{resblock_forward.6} parent=0 // pred_check
    _
  $region3: #{resblock_forward.6} parent=0 // pred_check_branch
    %9 = sbr.rel (0) target = $region5
  $region4: #{resblock_forward.6} parent=0 // pred_region
    _
  $region5: #{resblock_forward.6} parent=0 // pred_fallthru
    _
  // Predicated region
  $region6: #{resblock_forward.6} parent=0 // pred_check
    _
  $region7: #{resblock_forward.6} parent=0 // pred_check_branch
    %11 = sbr.rel (0) target = $region9
  $region8: #{resblock_forward.6} parent=0 // pred_region
    _
  $region9: #{resblock_forward.6} parent=0 // pred_fallthru
    _
  // Predicated region
  $region10: #{resblock_forward.6} parent=0 // pred_check
    _
  $region11: #{resblock_forward.6} parent=0 // pred_check_branch
    %13 = sbr.rel (0) target = $region13
  $region12: #{resblock_forward.6} parent=0 // pred_region
    _
  $region13: #{resblock_forward.6} parent=0 // pred_fallthru
    _
  %v14 = vld [vmem:[%s0] sm:$0xf]
  %v15 = vld [vmem:[%s0 + $0x4] sm:$0xf]
  %v16 = vld [vmem:[%s0 + $0x8] sm:$0xf]
  %v17 = vld [vmem:[%s0 + $0xc] sm:$0xf]
  %v18 = vld [vmem:[%s0 + $0x10] sm:$0xf]
  %v19 = vld [vmem:[%s0 + $0x14] sm:$0xf]
  %v20 = vld [vmem:[%s0 + $0x18] sm:$0xf]
  %v21 = vld [vmem:[%s0 + $0x1c] sm:$0xf]
  %v22 = vld [vmem:[%s0 + $0x20] sm:$0xf]
  %v23 = vld [vmem:[%s0 + $0x24] sm:$0xf]
  %v24 = vld [vmem:[%s0 + $0x28] sm:$0xf]
  %v25 = vld [vmem:[%s0 + $0x2c] sm:$0xf]
  %v26 = vld [vmem:[%s0 + $0x30] sm:$0xf]
  %v27 = vld [vmem:[%s0 + $0x34] sm:$0xf]
  %v28 = vld [vmem:[%s0 + $0x38] sm:$0xf]
  %v29 = vld [vmem:[%s0 + $0x3c] sm:$0xf]
  %v30 = vld [vmem:[%s1] sm:$0xf]
  %v31 = vld [vmem:[%s1 + $0x4] sm:$0xf]
  %v32 = vld [vmem:[%s1 + $0x8] sm:$0xf]
  %v33 = vld [vmem:[%s1 + $0xc] sm:$0xf]
  %v34 = vld [vmem:[%s1 + $0x10] sm:$0xf]
  %v35 = vld [vmem:[%s1 + $0x14] sm:$0xf]
  %v36 = vld [vmem:[%s1 + $0x18] sm:$0xf]
  %v37 = vld [vmem:[%s1 + $0x1c] sm:$0xf]
  %v38 = vld [vmem:[%s1 + $0x20] sm:$0xf]
  %v39 = vld [vmem:[%s1 + $0x24] sm:$0xf]
  %v40 = vld [vmem:[%s1 + $0x28] sm:$0xf]
  %v41 = vld [vmem:[%s1 + $0x2c] sm:$0xf]
  %v42 = vld [vmem:[%s1 + $0x30] sm:$0xf]
  %v43 = vld [vmem:[%s1 + $0x34] sm:$0xf]
  %v44 = vld [vmem:[%s1 + $0x38] sm:$0xf]
  %v45 = vld [vmem:[%s1 + $0x3c] sm:$0xf]
  %v46 = vld [vmem:[%s2] sm:$0x1]
  %v48 = vperm.slane %v46, 0
  %v66 = vunpack.c.l.b16 %v14
  %v67 = vunpack.c.l.b16 %v15
  %v68 = vunpack.c.l.b16 %v16
  %v69 = vunpack.c.l.b16 %v17
  %v70 = vunpack.c.l.b16 %v18
  %v71 = vunpack.c.l.b16 %v19
  %v72 = vunpack.c.l.b16 %v20
  %v73 = vunpack.c.l.b16 %v21
  %v74 = vunpack.c.l.b16 %v22
  %v75 = vunpack.c.l.b16 %v23
  %v76 = vunpack.c.l.b16 %v24
  %v77 = vunpack.c.l.b16 %v25
  %v78 = vunpack.c.l.b16 %v26
  %v79 = vunpack.c.l.b16 %v27
  %v80 = vunpack.c.l.b16 %v28
  %v81 = vunpack.c.l.b16 %v29
  %v82 = vpack.c.b16 %v67, %v66
  %v83 = vpack.c.b16 %v69, %v68
  %v84 = vpack.c.b16 %v71, %v70
  %v85 = vpack.c.b16 %v73, %v72
  %v86 = vpack.c.b16 %v75, %v74
  %v87 = vpack.c.b16 %v77, %v76
  %v88 = vpack.c.b16 %v79, %v78
  %v89 = vpack.c.b16 %v81, %v80
  %v114 = vunpack.c.l.b16 %v30
  %v115 = vunpack.c.l.b16 %v31
  %v116 = vunpack.c.l.b16 %v32
  %v117 = vunpack.c.l.b16 %v33
  %v118 = vunpack.c.l.b16 %v34
  %v119 = vunpack.c.l.b16 %v35
  %v120 = vunpack.c.l.b16 %v36
  %v121 = vunpack.c.l.b16 %v37
  %v122 = vunpack.c.l.b16 %v38
  %v123 = vunpack.c.l.b16 %v39
  %v124 = vunpack.c.l.b16 %v40
  %v125 = vunpack.c.l.b16 %v41
  %v126 = vunpack.c.l.b16 %v42
  %v127 = vunpack.c.l.b16 %v43
  %v128 = vunpack.c.l.b16 %v44
  %v129 = vunpack.c.l.b16 %v45
  %v130 = vpack.c.b16 %v115, %v114
  %v131 = vpack.c.b16 %v117, %v116
  %v132 = vpack.c.b16 %v119, %v118
  %v133 = vpack.c.b16 %v121, %v120
  %v134 = vpack.c.b16 %v123, %v122
  %v135 = vpack.c.b16 %v125, %v124
  %v136 = vpack.c.b16 %v127, %v126
  %v137 = vpack.c.b16 %v129, %v128
  %146 = vmatpush.bf16.msra.mxu0 %v137
  %147 = vmatpush.bf16.msra.mxu0 %v136
  %148 = vmatpush.bf16.msra.mxu0 %v135
  %149 = vmatpush.bf16.msra.mxu0 %v134
  %150 = vmatpush.bf16.msra.mxu0 %v133
  %151 = vmatpush.bf16.msra.mxu0 %v132
  %152 = vmatpush.bf16.msra.mxu0 %v131
  %153 = vmatpush.bf16.msra.mxu0 %v130
  %154 = vmatmul.bf16.gmra.mxu0 %v82
  %v155 = vpop.f32.mrf.mxu0
  %v156 = vadd.f32 %v48, %v155
  %v157 = vpop.f32.mrf.mxu0
  %v158 = vadd.f32 %v48, %v157
  %159 = vmatmul.bf16.gmra.mxu0 %v83
  %v160 = vpop.f32.mrf.mxu0
  %v161 = vadd.f32 %v48, %v160
  %v162 = vpop.f32.mrf.mxu0
  %v163 = vadd.f32 %v48, %v162
  %164 = vmatmul.bf16.gmra.mxu0 %v84
  %v165 = vpop.f32.mrf.mxu0
  %v166 = vadd.f32 %v48, %v165
  %v167 = vpop.f32.mrf.mxu0
  %v168 = vadd.f32 %v48, %v167
  %169 = vmatmul.bf16.gmra.mxu0 %v85
  %v170 = vpop.f32.mrf.mxu0
  %v171 = vadd.f32 %v48, %v170
  %v172 = vpop.f32.mrf.mxu0
  %v173 = vadd.f32 %v48, %v172
  %174 = vmatmul.bf16.gmra.mxu0 %v86
  %v175 = vpop.f32.mrf.mxu0
  %v176 = vadd.f32 %v48, %v175
  %v177 = vpop.f32.mrf.mxu0
  %v178 = vadd.f32 %v48, %v177
  %179 = vmatmul.bf16.gmra.mxu0 %v87
  %v180 = vpop.f32.mrf.mxu0
  %v181 = vadd.f32 %v48, %v180
  %v182 = vpop.f32.mrf.mxu0
  %v183 = vadd.f32 %v48, %v182
  %184 = vmatmul.bf16.gmra.mxu0 %v88
  %v185 = vpop.f32.mrf.mxu0
  %v186 = vadd.f32 %v48, %v185
  %v187 = vpop.f32.mrf.mxu0
  %v188 = vadd.f32 %v48, %v187
  %189 = vmatmul.bf16.gmra.mxu0 %v89
  %v190 = vpop.f32.mrf.mxu0
  %v191 = vadd.f32 %v48, %v190
  %v192 = vpop.f32.mrf.mxu0
  %v193 = vadd.f32 %v48, %v192
  %194 = vdwg.mxu0
  %v195 = vpack.c.bf16 %v156, %v156
  %v196 = vpack.c.bf16 %v158, %v158
  %v197 = vpack.c.bf16 %v161, %v161
  %v198 = vpack.c.bf16 %v163, %v163
  %v199 = vpack.c.bf16 %v166, %v166
  %v200 = vpack.c.bf16 %v168, %v168
  %v201 = vpack.c.bf16 %v171, %v171
  %v202 = vpack.c.bf16 %v173, %v173
  %v203 = vpack.c.bf16 %v176, %v176
  %v204 = vpack.c.bf16 %v178, %v178
  %v205 = vpack.c.bf16 %v181, %v181
  %v206 = vpack.c.bf16 %v183, %v183
  %v207 = vpack.c.bf16 %v186, %v186
  %v208 = vpack.c.bf16 %v188, %v188
  %v209 = vpack.c.bf16 %v191, %v191
  %v210 = vpack.c.bf16 %v193, %v193
  %211 = vst [vmem:[%s3] sm:$0xf] %v195
  %212 = vst [vmem:[%s3 + $0x4] sm:$0xf] %v196
  %213 = vst [vmem:[%s3 + $0x8] sm:$0xf] %v197
  %214 = vst [vmem:[%s3 + $0xc] sm:$0xf] %v198
  %215 = vst [vmem:[%s3 + $0x10] sm:$0xf] %v199
  %216 = vst [vmem:[%s3 + $0x14] sm:$0xf] %v200
  %217 = vst [vmem:[%s3 + $0x18] sm:$0xf] %v201
  %218 = vst [vmem:[%s3 + $0x1c] sm:$0xf] %v202
  %219 = vst [vmem:[%s3 + $0x20] sm:$0xf] %v203
  %220 = vst [vmem:[%s3 + $0x24] sm:$0xf] %v204
  %221 = vst [vmem:[%s3 + $0x28] sm:$0xf] %v205
  %222 = vst [vmem:[%s3 + $0x2c] sm:$0xf] %v206
  %223 = vst [vmem:[%s3 + $0x30] sm:$0xf] %v207
  %224 = vst [vmem:[%s3 + $0x34] sm:$0xf] %v208
  %225 = vst [vmem:[%s3 + $0x38] sm:$0xf] %v209
  %226 = vst [vmem:[%s3 + $0x3c] sm:$0xf] %v210
  // Predicated region
  $region14: #{resblock_forward.6} parent=0 // pred_check
    _
  $region15: #{resblock_forward.6} parent=0 // pred_check_branch
    %228 = sbr.rel (0) target = $region17
  $region16: #{resblock_forward.6} parent=0 // pred_region
    _
  $region17: #{resblock_forward.6} parent=0 // pred_fallthru
    _
  // Predicated region
  $region18: #{resblock_forward.6} parent=0 // pred_check
    _
  $region19: #{resblock_forward.6} parent=0 // pred_check_branch
    %230 = sbr.rel (0) target = $region21
  $region20: #{resblock_forward.6} parent=0 // pred_region
    _
  $region21: #{resblock_forward.6} parent=0 // pred_fallthru
    _

// kernel: resblock_forward.7
$region0: #{resblock_forward.7}
  #allocation0 [shape = 'u32[]', space=smem, size = 0x4, offset = 0x4, fixed_abs, tag = 'smem constant byte address 0x4 - core index']
  #allocation1 [shape = 'u32[72,128]{1,0:T(1,128)}', space=vmem, size = 0x9000, scoped, tag = 'internal scratch']
  %s0 = inlined_call_operand.vmem [shape: bf16[128,16], index: 0, kind: input, shape index: {}]
  %s1 = inlined_call_operand.vmem [shape: bf16[16,128], index: 1, kind: input, shape index: {}]
  %s2 = inlined_call_operand.vmem [shape: f32[1,128], index: 2, kind: input, shape index: {}]
  %s3 = inlined_call_operand.vmem [shape: bf16[128,128], index: 3, kind: input, shape index: {}]
  %s4 = inlined_call_operand.hbm [shape: f32[128,128], index: 4, kind: output, shape index: {}]
  %s5 = sld [smem:[#allocation0]]
  $region26: #{resblock_forward.7} parent=0
    _
  %s7 = ssub.s32 1, %s5
  %s8 = scalar_select 0, %s7, %s5
  $region1: #{resblock_forward.7} parent=0
    #allocation2 [shape = 'u8[65536]{0}', space=vmem, size = 0x10000, scoped, tag = 'output window, operand 0, single buffered']
    #allocation3 [shape = 's32[1]{0}', space=sflag, size = 0x4, scoped, tag = 'scoped memory for resblock_forward.7']
    %9 = vsyncpa [#allocation3], 0
    // Predicated region
    $region2: #{resblock_forward.7} parent=1 // pred_check
      _
    $region3: #{resblock_forward.7} parent=1 // pred_check_branch
      %11 = sbr.rel (0) target = $region5
    $region4: #{resblock_forward.7} parent=1 // pred_region
      _
    $region5: #{resblock_forward.7} parent=1 // pred_fallthru
      _
    // Predicated region
    $region6: #{resblock_forward.7} parent=1 // pred_check
      _
    $region7: #{resblock_forward.7} parent=1 // pred_check_branch
      %13 = sbr.rel (0) target = $region9
    $region8: #{resblock_forward.7} parent=1 // pred_region
      _
    $region9: #{resblock_forward.7} parent=1 // pred_fallthru
      _
    // Predicated region
    $region10: #{resblock_forward.7} parent=1 // pred_check
      _
    $region11: #{resblock_forward.7} parent=1 // pred_check_branch
      %15 = sbr.rel (0) target = $region13
    $region12: #{resblock_forward.7} parent=1 // pred_region
      _
    $region13: #{resblock_forward.7} parent=1 // pred_fallthru
      _
    // Predicated region
    $region14: #{resblock_forward.7} parent=1 // pred_check
      _
    $region15: #{resblock_forward.7} parent=1 // pred_check_branch
      %17 = sbr.rel (0) target = $region17
    $region16: #{resblock_forward.7} parent=1 // pred_region
      _
    $region17: #{resblock_forward.7} parent=1 // pred_fallthru
      _
    %v19 = vld [vmem:[%s0] sm:$0xf]
    %v20 = vld [vmem:[%s0 + $0x4] sm:$0xf]
    %v21 = vld [vmem:[%s0 + $0x8] sm:$0xf]
    %v22 = vld [vmem:[%s0 + $0xc] sm:$0xf]
    %v23 = vld [vmem:[%s0 + $0x10] sm:$0xf]
    %v24 = vld [vmem:[%s0 + $0x14] sm:$0xf]
    %v25 = vld [vmem:[%s0 + $0x18] sm:$0xf]
    %v26 = vld [vmem:[%s0 + $0x1c] sm:$0xf]
    %v27 = vld [vmem:[%s0 + $0x20] sm:$0xf]
    %v28 = vld [vmem:[%s0 + $0x24] sm:$0xf]
    %v29 = vld [vmem:[%s0 + $0x28] sm:$0xf]
    %v30 = vld [vmem:[%s0 + $0x2c] sm:$0xf]
    %v31 = vld [vmem:[%s0 + $0x30] sm:$0xf]
    %v32 = vld [vmem:[%s0 + $0x34] sm:$0xf]
    %v33 = vld [vmem:[%s0 + $0x38] sm:$0xf]
    %v34 = vld [vmem:[%s0 + $0x3c] sm:$0xf]
    %v35 = vld [vmem:[%s1] sm:$0xf]
    %v36 = vld [vmem:[%s1 + $0x4] sm:$0xf]
    %v37 = vld [vmem:[%s2] sm:$0x1]
    %v39 = vperm.slane %v37, 0
    %v57 = vunpack.c.l.b16 %v19
    %v58 = vunpack.c.l.b16 %v20
    %v59 = vunpack.c.l.b16 %v21
    %v60 = vunpack.c.l.b16 %v22
    %v61 = vunpack.c.l.b16 %v23
    %v62 = vunpack.c.l.b16 %v24
    %v63 = vunpack.c.l.b16 %v25
    %v64 = vunpack.c.l.b16 %v26
    %v65 = vunpack.c.l.b16 %v27
    %v66 = vunpack.c.l.b16 %v28
    %v67 = vunpack.c.l.b16 %v29
    %v68 = vunpack.c.l.b16 %v30
    %v69 = vunpack.c.l.b16 %v31
    %v70 = vunpack.c.l.b16 %v32
    %v71 = vunpack.c.l.b16 %v33
    %v72 = vunpack.c.l.b16 %v34
    %v73 = vpack.c.b16 %v58, %v57
    %v74 = vpack.c.b16 %v60, %v59
    %v75 = vpack.c.b16 %v62, %v61
    %v76 = vpack.c.b16 %v64, %v63
    %v77 = vpack.c.b16 %v66, %v65
    %v78 = vpack.c.b16 %v68, %v67
    %v79 = vpack.c.b16 %v70, %v69
    %v80 = vpack.c.b16 %v72, %v71
    %v83 = vunpack.c.l.b16 %v35
    %v84 = vunpack.c.l.b16 %v36
    %v85 = vpack.c.b16 %v84, %v83
    %vm87 = vcmask 130048
    %v89 = vsel %vm87, %v73, 0
    %v92 = vsel %vm87, %v74, 0
    %v95 = vsel %vm87, %v75, 0
    %v98 = vsel %vm87, %v76, 0
    %v101 = vsel %vm87, %v77, 0
    %v104 = vsel %vm87, %v78, 0
    %v107 = vsel %vm87, %v79, 0
    %v110 = vsel %vm87, %v80, 0
    %112 = vmatpush.bf16.msra.mxu0 0
    %113 = vmatpush.bf16.msra.mxu0 0
    %114 = vmatpush.bf16.msra.mxu0 0
    %115 = vmatpush.bf16.msra.mxu0 0
    %116 = vmatpush.bf16.msra.mxu0 0
    %117 = vmatpush.bf16.msra.mxu0 0
    %118 = vmatpush.bf16.msra.mxu0 0
    %119 = vmatpush.bf16.msra.mxu0 %v85
    %120 = vmatmul.bf16.gmra.mxu0 %v89
    %v121 = vpop.f32.mrf.mxu0
    %v122 = vadd.f32 %v39, %v121
    %v123 = vpop.f32.mrf.mxu0
    %v124 = vadd.f32 %v39, %v123
    %125 = vmatmul.bf16.gmra.mxu0 %v92
    %v126 = vpop.f32.mrf.mxu0
    %v127 = vadd.f32 %v39, %v126
    %v128 = vpop.f32.mrf.mxu0
    %v129 = vadd.f32 %v39, %v128
    %130 = vmatmul.bf16.gmra.mxu0 %v95
    %v131 = vpop.f32.mrf.mxu0
    %v132 = vadd.f32 %v39, %v131
    %v133 = vpop.f32.mrf.mxu0
    %v134 = vadd.f32 %v39, %v133
    %135 = vmatmul.bf16.gmra.mxu0 %v98
    %v136 = vpop.f32.mrf.mxu0
    %v137 = vadd.f32 %v39, %v136
    %v138 = vpop.f32.mrf.mxu0
    %v139 = vadd.f32 %v39, %v138
    %140 = vmatmul.bf16.gmra.mxu0 %v101
    %v141 = vpop.f32.mrf.mxu0
    %v142 = vadd.f32 %v39, %v141
    %v143 = vpop.f32.mrf.mxu0
    %v144 = vadd.f32 %v39, %v143
    %145 = vmatmul.bf16.gmra.mxu0 %v104
    %v146 = vpop.f32.mrf.mxu0
    %v147 = vadd.f32 %v39, %v146
    %v148 = vpop.f32.mrf.mxu0
    %v149 = vadd.f32 %v39, %v148
    %150 = vmatmul.bf16.gmra.mxu0 %v107
    %v151 = vpop.f32.mrf.mxu0
    %v152 = vadd.f32 %v39, %v151
    %v153 = vpop.f32.mrf.mxu0
    %v154 = vadd.f32 %v39, %v153
    %155 = vmatmul.bf16.gmra.mxu0 %v110
    %v156 = vpop.f32.mrf.mxu0
    %v157 = vadd.f32 %v39, %v156
    %v158 = vpop.f32.mrf.mxu0
    %v159 = vadd.f32 %v39, %v158
    %160 = vdwg.mxu0
    %v161 = vld [vmem:[%s3] sm:$0xf]
    %v162 = vld [vmem:[%s3 + $0x4] sm:$0xf]
    %v163 = vld [vmem:[%s3 + $0x8] sm:$0xf]
    %v164 = vld [vmem:[%s3 + $0xc] sm:$0xf]
    %v165 = vld [vmem:[%s3 + $0x10] sm:$0xf]
    %v166 = vld [vmem:[%s3 + $0x14] sm:$0xf]
    %v167 = vld [vmem:[%s3 + $0x18] sm:$0xf]
    %v168 = vld [vmem:[%s3 + $0x1c] sm:$0xf]
    %v169 = vld [vmem:[%s3 + $0x20] sm:$0xf]
    %v170 = vld [vmem:[%s3 + $0x24] sm:$0xf]
    %v171 = vld [vmem:[%s3 + $0x28] sm:$0xf]
    %v172 = vld [vmem:[%s3 + $0x2c] sm:$0xf]
    %v173 = vld [vmem:[%s3 + $0x30] sm:$0xf]
    %v174 = vld [vmem:[%s3 + $0x34] sm:$0xf]
    %v175 = vld [vmem:[%s3 + $0x38] sm:$0xf]
    %v176 = vld [vmem:[%s3 + $0x3c] sm:$0xf]
    %v177 = vunpack.c.l.bf16 %v161
    %v178 = vunpack.c.l.bf16 %v162
    %v179 = vunpack.c.l.bf16 %v163
    %v180 = vunpack.c.l.bf16 %v164
    %v181 = vunpack.c.l.bf16 %v165
    %v182 = vunpack.c.l.bf16 %v166
    %v183 = vunpack.c.l.bf16 %v167
    %v184 = vunpack.c.l.bf16 %v168
    %v185 = vunpack.c.l.bf16 %v169
    %v186 = vunpack.c.l.bf16 %v170
    %v187 = vunpack.c.l.bf16 %v171
    %v188 = vunpack.c.l.bf16 %v172
    %v189 = vunpack.c.l.bf16 %v173
    %v190 = vunpack.c.l.bf16 %v174
    %v191 = vunpack.c.l.bf16 %v175
    %v192 = vunpack.c.l.bf16 %v176
    %v193 = vadd.f32 %v122, %v177
    %v194 = vadd.f32 %v124, %v178
    %v195 = vadd.f32 %v127, %v179
    %v196 = vadd.f32 %v129, %v180
    %v197 = vadd.f32 %v132, %v181
    %v198 = vadd.f32 %v134, %v182
    %v199 = vadd.f32 %v137, %v183
    %v200 = vadd.f32 %v139, %v184
    %v201 = vadd.f32 %v142, %v185
    %v202 = vadd.f32 %v144, %v186
    %v203 = vadd.f32 %v147, %v187
    %v204 = vadd.f32 %v149, %v188
    %v205 = vadd.f32 %v152, %v189
    %v206 = vadd.f32 %v154, %v190
    %v207 = vadd.f32 %v157, %v191
    %v208 = vadd.f32 %v159, %v192
    %209 = vst [vmem:[#allocation2] sm:$0xff] %v193
    %210 = vst [vmem:[#allocation2 + $0x8] sm:$0xff] %v194
    %211 = vst [vmem:[#allocation2 + $0x10] sm:$0xff] %v195
    %212 = vst [vmem:[#allocation2 + $0x18] sm:$0xff] %v196
    %213 = vst [vmem:[#allocation2 + $0x20] sm:$0xff] %v197
    %214 = vst [vmem:[#allocation2 + $0x28] sm:$0xff] %v198
    %215 = vst [vmem:[#allocation2 + $0x30] sm:$0xff] %v199
    %216 = vst [vmem:[#allocation2 + $0x38] sm:$0xff] %v200
    %217 = vst [vmem:[#allocation2 + $0x40] sm:$0xff] %v201
    %218 = vst [vmem:[#allocation2 + $0x48] sm:$0xff] %v202
    %219 = vst [vmem:[#allocation2 + $0x50] sm:$0xff] %v203
    %220 = vst [vmem:[#allocation2 + $0x58] sm:$0xff] %v204
    %221 = vst [vmem:[#allocation2 + $0x60] sm:$0xff] %v205
    %222 = vst [vmem:[#allocation2 + $0x68] sm:$0xff] %v206
    %223 = vst [vmem:[#allocation2 + $0x70] sm:$0xff] %v207
    %224 = vst [vmem:[#allocation2 + $0x78] sm:$0xff] %v208
    // Predicated region
    $region18: #{resblock_forward.7} parent=1 // pred_check
      _
    $region19: #{resblock_forward.7} parent=1 // pred_check_branch
      %226 = sbr.rel (0) target = $region21
    $region20: #{resblock_forward.7} parent=1 // pred_region
      %228 = vsyncadd [#allocation3], 0
      %s229 = sshll.u32 [#allocation2], 4
      %s230 = int_to_ptr.vmem [resolvable:$true] %s229
      %s231 = sshll.u32 %s4, 4
      %s232 = int_to_ptr.hbm [resolvable:$true] %s231
      %237 = dma.vmem_to_hbm [thread:$0]  %s230, 2048, %s232, [#allocation3], 128, 128, 8
    $region21: #{resblock_forward.7} parent=1 // pred_fallthru
      _
    // Predicated region
    $region22: #{resblock_forward.7} parent=1 // pred_check
      _
    $region23: #{resblock_forward.7} parent=1 // pred_check_branch
      %239 = sbr.rel (0) target = $region25
    $region24: #{resblock_forward.7} parent=1 // pred_region
      %241 = dma.done [#allocation3], 2048
    $region25: #{resblock_forward.7} parent=1 // pred_fallthru
      _
    %242 = vsyncpa [#allocation3], 1

// kernel: resblock_forward.5
$region0: #{resblock_forward.5}
  #allocation0 [shape = 'u32[]', space=smem, size = 0x4, offset = 0x4, fixed_abs, tag = 'smem constant byte address 0x4 - core index']
  #allocation1 [shape = 'u32[72,128]{1,0:T(1,128)}', space=vmem, size = 0x9000, scoped, tag = 'internal scratch']
  %s0 = inlined_call_operand.vmem [shape: bf16[8,2,2,5,5,8], index: 0, kind: input, shape index: {}]
  %s1 = inlined_call_operand.vmem [shape: bf16[72,128], index: 1, kind: input, shape index: {}]
  %s2 = inlined_call_operand.vmem [shape: f32[1,128], index: 2, kind: input, shape index: {}]
  %s3 = inlined_call_operand.vmem [shape: bf16[8,4,4,128], index: 3, kind: output, shape index: {}]
  %s4 = sld [smem:[#allocation0]]
  $region45: #{resblock_forward.5} parent=0
    _
  %s6 = ssub.s32 1, %s4
  %s7 = scalar_select 0, %s6, %s4
  loop: start=0, step=1, limit=4
  $region2: #{resblock_forward.5} parent=0 // loop_pre_header
    _
  $region3: #{resblock_forward.5} parent=0 // loop_header
    %s9 = sphi 0, %s13
    %p10 = scmp.ge.s32.totalorder %s9, 4
    %s16 = sphi 0, %s28
    %s17 = sphi 0, %s24
    %s18 = sphi 0, %s16
    %s19 = sphi 0, %s17
    %s20 = sphi 0, %s18
    %s21 = sphi 0, %s19
    %s31 = sphi 0, %s33
    %s34 = sphi 0, %s31
    %s35 = sphi 0, %s34
    %s51 = sphi 0, %s35
    %s57 = sphi 0, %s59
    %s60 = sphi 0, %s57
    %s61 = sphi 0, %s60
    %s77 = sphi 0, %s61
    %s83 = sphi 0, %s85
    %s86 = sphi 0, %s83
    %s87 = sphi 0, %s86
    %s103 = sphi 0, %s87
    %s111 = sphi 0, %s113
    %s114 = sphi 0, %s111
    %s115 = sphi 0, %s114
    %s131 = sphi 0, %s115
  $region4: #{resblock_forward.5} parent=0 // loop_header_branch
    %12 = sbr.rel (%p10) target = $region8
  $region5: #{resblock_forward.5} parent=0 // loop_body
    %s14 = ssub.s32 %s9, 1
    %s15 = ssub.s32 %s9, 2
    %s22 = sadd.s32 1, %s17
    %p23 = scmp.ge.s32.totalorder %s22, 1
    %s24 = scalar_select %p23, 0, %s22
    %s25 = sadd.s32 1, %s16
    %s26 = scalar_select %p23, %s25, %s16
    %p27 = scmp.ge.s32.totalorder %s26, 2
    %s28 = scalar_select %p27, 0, %s26
    %s29 = ssub.s32 %s16, %s28
    %p30 = scmp.eq.s32.totalorder %s29, 0
    %s32 = sadd.s32 %s31, 1
    %s33 = scalar_select %p30, %s31, %s32
    %p36 = pneg %p30
    %p37 = scmp.eq.s32.totalorder %s9, 1
    %p38 = por %p36, %p37
    %p39 = scmp.ne.s32.totalorder %s31, %s34
    %p40 = scmp.eq.s32.totalorder %s9, 0
    %p41 = por %p39, %p40
    %p42 = scmp.ne.s32.totalorder %s31, %s34
    %p43 = scmp.eq.s32.totalorder %s14, 1
    %p44 = por %p42, %p43
    %p45 = scmp.ne.s32.totalorder %s34, %s35
    %p46 = scmp.eq.s32.totalorder %s14, 0
    %p47 = por %p45, %p46
    %p48 = scmp.ne.s32.totalorder %s34, %s35
    %p49 = scmp.eq.s32.totalorder %s15, 1
    %p50 = por %p48, %p49
    %p52 = scmp.ne.s32.totalorder %s35, %s51
    %p53 = scmp.eq.s32.totalorder %s15, 0
    %p54 = por %p52, %p53
    %s55 = ssub.s32 %s17, %s24
    %p56 = scmp.eq.s32.totalorder %s55, 0
    %s58 = sadd.s32 %s57, 1
    %s59 = scalar_select %p56, %s57, %s58
    %p62 = pneg %p56
    %p63 = scmp.eq.s32.totalorder %s9, 1
    %p64 = por %p62, %p63
    %p65 = scmp.ne.s32.totalorder %s57, %s60
    %p66 = scmp.eq.s32.totalorder %s9, 0
    %p67 = por %p65, %p66
    %p68 = scmp.ne.s32.totalorder %s57, %s60
    %p69 = scmp.eq.s32.totalorder %s14, 1
    %p70 = por %p68, %p69
    %p71 = scmp.ne.s32.totalorder %s60, %s61
    %p72 = scmp.eq.s32.totalorder %s14, 0
    %p73 = por %p71, %p72
    %p74 = scmp.ne.s32.totalorder %s60, %s61
    %p75 = scmp.eq.s32.totalorder %s15, 1
    %p76 = por %p74, %p75
    %p78 = scmp.ne.s32.totalorder %s61, %s77
    %p79 = scmp.eq.s32.totalorder %s15, 0
    %p80 = por %p78, %p79
    %s81 = ssub.s32 %s17, %s24
    %p82 = scmp.eq.s32.totalorder %s81, 0
    %s84 = sadd.s32 %s83, 1
    %s85 = scalar_select %p82, %s83, %s84
    %p88 = pneg %p82
    %p89 = scmp.eq.s32.totalorder %s9, 1
    %p90 = por %p88, %p89
    %p91 = scmp.ne.s32.totalorder %s83, %s86
    %p92 = scmp.eq.s32.totalorder %s9, 0
    %p93 = por %p91, %p92
    %p94 = scmp.ne.s32.totalorder %s83, %s86
    %p95 = scmp.eq.s32.totalorder %s14, 1
    %p96 = por %p94, %p95
    %p97 = scmp.ne.s32.totalorder %s86, %s87
    %p98 = scmp.eq.s32.totalorder %s14, 0
    %p99 = por %p97, %p98
    %p100 = scmp.ne.s32.totalorder %s86, %s87
    %p101 = scmp.eq.s32.totalorder %s15, 1
    %p102 = por %p100, %p101
    %p104 = scmp.ne.s32.totalorder %s87, %s103
    %p105 = scmp.eq.s32.totalorder %s15, 0
    %p106 = por %p104, %p105
    %s107 = ssub.s32 %s16, %s28
    %s108 = ssub.s32 %s17, %s24
    %s109 = sor.u32 %s107, %s108
    %p110 = scmp.eq.s32.totalorder %s109, 0
    %s112 = sadd.s32 %s111, 1
    %s113 = scalar_select %p110, %s111, %s112
    %p116 = pneg %p110
    %p117 = scmp.eq.s32.totalorder %s9, 1
    %p118 = por %p116, %p117
    %p119 = scmp.ne.s32.totalorder %s111, %s114
    %p120 = scmp.eq.s32.totalorder %s9, 0
    %p121 = por %p119, %p120
    %p122 = scmp.ne.s32.totalorder %s111, %s114
    %p123 = scmp.eq.s32.totalorder %s14, 1
    %p124 = por %p122, %p123
    %p125 = scmp.ne.s32.totalorder %s114, %s115
    %p126 = scmp.eq.s32.totalorder %s14, 0
    %p127 = por %p125, %p126
    %p128 = scmp.ne.s32.totalorder %s114, %s115
    %p129 = scmp.eq.s32.totalorder %s15, 1
    %p130 = por %p128, %p129
    %p132 = scmp.ne.s32.totalorder %s115, %s131
    %p133 = scmp.eq.s32.totalorder %s15, 0
    %p134 = por %p132, %p133
    %p135 = scmp.le.s32.totalorder 1, %s9
    %p136 = scmp.lt.s32.totalorder %s9, 3
    %p137 = pnand %p135, %p136
    %p138 = pneg %p137
    // Predicated region
    $region9: #{resblock_forward.5} parent=5 // pred_check
      _
    $region10: #{resblock_forward.5} parent=5 // pred_check_branch
      %140 = sbr.rel (%p137) target = $region12
    $region11: #{resblock_forward.5} parent=5 // pred_region
      %s141 = ssub.s32 %s9, 1
      // Predicated region
      $region13: #{resblock_forward.5} parent=11 // pred_check
        %p142 = pneg %p73
      $region14: #{resblock_forward.5} parent=11 // pred_check_branch
        %144 = sbr.rel (%p142) target = $region16
      $region15: #{resblock_forward.5} parent=11 // pred_region
        %p145 = scmp.lt.s32.totalorder %s19, 0
        %s146 = scalar_select %p145, %s19, 0
        %s147 = smul.addr %s146, 4
        %s148 = scalar_lea.vmem %s1, %s147
      $region16: #{resblock_forward.5} parent=11 // pred_fallthru
        _
      // Predicated region
      $region17: #{resblock_forward.5} parent=11 // pred_check
        %p149 = pneg %p99
      $region18: #{resblock_forward.5} parent=11 // pred_check_branch
        %151 = sbr.rel (%p149) target = $region20
      $region19: #{resblock_forward.5} parent=11 // pred_region
        %p152 = scmp.lt.s32.totalorder %s19, 0
        %s153 = scalar_select %p152, %s19, 0
        %s154 = scalar_lea.vmem %s2, %s153
      $region20: #{resblock_forward.5} parent=11 // pred_fallthru
        _
    $region12: #{resblock_forward.5} parent=5 // pred_fallthru
      _
    %p155 = scmp.lt.s32.totalorder %s9, 2
    // Predicated region
    $region21: #{resblock_forward.5} parent=5 // pred_check
      %p156 = pneg %p155
    $region22: #{resblock_forward.5} parent=5 // pred_check_branch
      %158 = sbr.rel (%p156) target = $region24
    $region23: #{resblock_forward.5} parent=5 // pred_region
      // Predicated region
      $region25: #{resblock_forward.5} parent=23 // pred_check
        %p159 = pneg %p41
      $region26: #{resblock_forward.5} parent=23 // pred_check_branch
        %161 = sbr.rel (%p159) target = $region28
      $region27: #{resblock_forward.5} parent=23 // pred_region
        %s162 = smul.u32 4, %s16
        %p163 = scmp.lt.s32.totalorder %s162, 7
        %s164 = scalar_select %p163, %s162, 7
        %s165 = smul.addr %s164, 20
        %s166 = smul.addr %s165, 4
        %s167 = scalar_lea.vmem %s0, %s166
        %s168 = smul.u32 4, %s16
      $region28: #{resblock_forward.5} parent=23 // pred_fallthru
        _
    $region24: #{resblock_forward.5} parent=5 // pred_fallthru
      _
    %p169 = scmp.le.s32.totalorder 1, %s9
    %p170 = scmp.lt.s32.totalorder %s9, 3
    %p171 = pnand %p169, %p170
    %p172 = pneg %p171
    // Predicated region
    $region29: #{resblock_forward.5} parent=5 // pred_check
      _
    $region30: #{resblock_forward.5} parent=5 // pred_check_branch
      %174 = sbr.rel (%p171) target = $region32
    $region31: #{resblock_forward.5} parent=5 // pred_region
      %s175 = ssub.s32 %s9, 1
      %s176 = smul.u32 4, %s18
      %p177 = scmp.lt.s32.totalorder %s176, 7
      %s178 = scalar_select %p177, %s176, 7
      %s179 = smul.addr %s178, 20
      %s180 = smul.addr %s179, 4
      %s181 = scalar_lea.vmem %s0, %s180
      %p182 = pneg %p47
      %p183 = pneg %p44
      %p184 = scmp.lt.s32.totalorder %s19, 0
      %s185 = scalar_select %p184, %s19, 0
      %s186 = smul.addr %s185, 4
      %s187 = scalar_lea.vmem %s1, %s186
      %p188 = pneg %p73
      %p189 = pneg %p70
      %p190 = scmp.lt.s32.totalorder %s19, 0
      %s191 = scalar_select %p190, %s19, 0
      %s192 = scalar_lea.vmem %s2, %s191
      %p193 = pneg %p99
      %p194 = pneg %p96
      %p195 = pneg %p127
      %p196 = pneg %p124
      %s197 = smul.u32 4, %s18
      %p198 = scmp.lt.s32.totalorder %s197, 7
      %s199 = scalar_select %p198, %s197, 7
      %p200 = scmp.lt.s32.totalorder %s19, 0
      %s201 = scalar_select %p200, %s19, 0
      %s202 = smul.addr %s199, 4
      %s203 = sadd.s32 %s201, %s202
      %s204 = smul.addr %s203, 2
      %s205 = scalar_lea.vmem %s3, %s204
      %s206 = smul.u32 4, %s18
      %p207 = scmp.lt.s32.totalorder %s206, 7
      %s208 = scalar_select %p207, %s206, 7
      %s209 = smul.addr %s208, 20
      %s210 = smul.addr %s209, 4
      %s211 = scalar_lea.vmem %s0, %s210
      %s212 = smul.u32 4, %s18
      %p213 = scmp.lt.s32.totalorder %s19, 0
      %s214 = scalar_select %p213, %s19, 0
      %s215 = smul.addr %s214, 4
      %s216 = scalar_lea.vmem %s1, %s215
      %p217 = scmp.lt.s32.totalorder %s19, 0
      %s218 = scalar_select %p217, %s19, 0
      %s219 = scalar_lea.vmem %s2, %s218
      %s220 = smul.u32 4, %s18
      %p221 = scmp.lt.s32.totalorder %s220, 7
      %s222 = scalar_select %p221, %s220, 7
      %p223 = scmp.lt.s32.totalorder %s19, 0
      %s224 = scalar_select %p223, %s19, 0
      %s225 = smul.addr %s222, 4
      %s226 = sadd.s32 %s224, %s225
      %s227 = smul.addr %s226, 2
      %s228 = scalar_lea.vmem %s3, %s227
      %s229 = smul.u32 4, %s18
      %v231 = vld [vmem:[%s219] sm:$0x1]
      %v232 = vld [vmem:[%s211] sm:$0x3]
      %v233 = vld [vmem:[%s211 + $0x4] sm:$0x3]
      %v234 = vld [vmem:[%s211 + $0x8] sm:$0x3]
      %v235 = vld [vmem:[%s211 + $0xc] sm:$0x3]
      %v236 = vld [vmem:[%s211 + $0x50] sm:$0x3]
      %v237 = vld [vmem:[%s211 + $0x54] sm:$0x3]
      %v238 = vld [vmem:[%s211 + $0x58] sm:$0x3]
      %v239 = vld [vmem:[%s211 + $0x5c] sm:$0x3]
      %v240 = vld [vmem:[%s211 + $0xa0] sm:$0x3]
      %v241 = vld [vmem:[%s211 + $0xa4] sm:$0x3]
      %v242 = vld [vmem:[%s211 + $0xa8] sm:$0x3]
      %v243 = vld [vmem:[%s211 + $0xac] sm:$0x3]
      %v244 = vld [vmem:[%s211 + $0xf0] sm:$0x3]
      %v245 = vld [vmem:[%s211 + $0xf4] sm:$0x3]
      %v246 = vld [vmem:[%s211 + $0xf8] sm:$0x3]
      %v247 = vld [vmem:[%s211 + $0xfc] sm:$0x3]
      %s248 = scalar_lea.vmem %s211, 20
      %v249 = vld [vmem:[%s248] sm:$0x3]
      %v250 = vld [vmem:[%s248 + $0x4] sm:$0x3]
      %v251 = vld [vmem:[%s248 + $0x8] sm:$0x3]
      %v252 = vld [vmem:[%s248 + $0xc] sm:$0x3]
      %v253 = vld [vmem:[%s248 + $0x50] sm:$0x3]
      %v254 = vld [vmem:[%s248 + $0x54] sm:$0x3]
      %v255 = vld [vmem:[%s248 + $0x58] sm:$0x3]
      %v256 = vld [vmem:[%s248 + $0x5c] sm:$0x3]
      %v257 = vld [vmem:[%s248 + $0xa0] sm:$0x3]
      %v258 = vld [vmem:[%s248 + $0xa4] sm:$0x3]
      %v259 = vld [vmem:[%s248 + $0xa8] sm:$0x3]
      %v260 = vld [vmem:[%s248 + $0xac] sm:$0x3]
      %v261 = vld [vmem:[%s248 + $0xf0] sm:$0x3]
      %v262 = vld [vmem:[%s248 + $0xf4] sm:$0x3]
      %v263 = vld [vmem:[%s248 + $0xf8] sm:$0x3]
      %v264 = vld [vmem:[%s248 + $0xfc] sm:$0x3]
      %v265 = vld [vmem:[%s211] sm:$0x7]
      %v266 = vld [vmem:[%s211 + $0x4] sm:$0x7]
      %v267 = vld [vmem:[%s211 + $0x8] sm:$0x7]
      %v268 = vld [vmem:[%s211 + $0xc] sm:$0x7]
      %v269 = vld [vmem:[%s211 + $0x50] sm:$0x7]
      %v270 = vld [vmem:[%s211 + $0x54] sm:$0x7]
      %v271 = vld [vmem:[%s211 + $0x58] sm:$0x7]
      %v272 = vld [vmem:[%s211 + $0x5c] sm:$0x7]
      %v273 = vld [vmem:[%s211 + $0xa0] sm:$0x7]
      %v274 = vld [vmem:[%s211 + $0xa4] sm:$0x7]
      %v275 = vld [vmem:[%s211 + $0xa8] sm:$0x7]
      %v276 = vld [vmem:[%s211 + $0xac] sm:$0x7]
      %v277 = vld [vmem:[%s211 + $0xf0] sm:$0x7]
      %v278 = vld [vmem:[%s211 + $0xf4] sm:$0x7]
      %v279 = vld [vmem:[%s211 + $0xf8] sm:$0x7]
      %v280 = vld [vmem:[%s211 + $0xfc] sm:$0x7]
      %s281 = scalar_lea.vmem %s211, 40
      %v282 = vld [vmem:[%s281] sm:$0x3]
      %v283 = vld [vmem:[%s281 + $0x4] sm:$0x3]
      %v284 = vld [vmem:[%s281 + $0x8] sm:$0x3]
      %v285 = vld [vmem:[%s281 + $0xc] sm:$0x3]
      %v286 = vld [vmem:[%s281 + $0x50] sm:$0x3]
      %v287 = vld [vmem:[%s281 + $0x54] sm:$0x3]
      %v288 = vld [vmem:[%s281 + $0x58] sm:$0x3]
      %v289 = vld [vmem:[%s281 + $0x5c] sm:$0x3]
      %v290 = vld [vmem:[%s281 + $0xa0] sm:$0x3]
      %v291 = vld [vmem:[%s281 + $0xa4] sm:$0x3]
      %v292 = vld [vmem:[%s281 + $0xa8] sm:$0x3]
      %v293 = vld [vmem:[%s281 + $0xac] sm:$0x3]
      %v294 = vld [vmem:[%s281 + $0xf0] sm:$0x3]
      %v295 = vld [vmem:[%s281 + $0xf4] sm:$0x3]
      %v296 = vld [vmem:[%s281 + $0xf8] sm:$0x3]
      %v297 = vld [vmem:[%s281 + $0xfc] sm:$0x3]
      %s298 = scalar_lea.vmem %s211, 60
      %v299 = vld [vmem:[%s298] sm:$0x3]
      %v300 = vld [vmem:[%s298 + $0x4] sm:$0x3]
      %v301 = vld [vmem:[%s298 + $0x8] sm:$0x3]
      %v302 = vld [vmem:[%s298 + $0xc] sm:$0x3]
      %v303 = vld [vmem:[%s298 + $0x50] sm:$0x3]
      %v304 = vld [vmem:[%s298 + $0x54] sm:$0x3]
      %v305 = vld [vmem:[%s298 + $0x58] sm:$0x3]
      %v306 = vld [vmem:[%s298 + $0x5c] sm:$0x3]
      %v307 = vld [vmem:[%s298 + $0xa0] sm:$0x3]
      %v308 = vld [vmem:[%s298 + $0xa4] sm:$0x3]
      %v309 = vld [vmem:[%s298 + $0xa8] sm:$0x3]
      %v310 = vld [vmem:[%s298 + $0xac] sm:$0x3]
      %v311 = vld [vmem:[%s298 + $0xf0] sm:$0x3]
      %v312 = vld [vmem:[%s298 + $0xf4] sm:$0x3]
      %v313 = vld [vmem:[%s298 + $0xf8] sm:$0x3]
      %v314 = vld [vmem:[%s298 + $0xfc] sm:$0x3]
      %v315 = vld [vmem:[%s281] sm:$0x7]
      %v316 = vld [vmem:[%s281 + $0x4] sm:$0x7]
      %v317 = vld [vmem:[%s281 + $0x8] sm:$0x7]
      %v318 = vld [vmem:[%s281 + $0xc] sm:$0x7]
      %v319 = vld [vmem:[%s281 + $0x50] sm:$0x7]
      %v320 = vld [vmem:[%s281 + $0x54] sm:$0x7]
      %v321 = vld [vmem:[%s281 + $0x58] sm:$0x7]
      %v322 = vld [vmem:[%s281 + $0x5c] sm:$0x7]
      %v323 = vld [vmem:[%s281 + $0xa0] sm:$0x7]
      %v324 = vld [vmem:[%s281 + $0xa4] sm:$0x7]
      %v325 = vld [vmem:[%s281 + $0xa8] sm:$0x7]
      %v326 = vld [vmem:[%s281 + $0xac] sm:$0x7]
      %v327 = vld [vmem:[%s281 + $0xf0] sm:$0x7]
      %v328 = vld [vmem:[%s281 + $0xf4] sm:$0x7]
      %v329 = vld [vmem:[%s281 + $0xf8] sm:$0x7]
      %v330 = vld [vmem:[%s281 + $0xfc] sm:$0x7]
      %s331 = scalar_lea.vmem %s211, 4
      %v332 = vld [vmem:[%s331] sm:$0x3]
      %v333 = vld [vmem:[%s331 + $0x4] sm:$0x3]
      %v334 = vld [vmem:[%s331 + $0x8] sm:$0x3]
      %v335 = vld [vmem:[%s331 + $0xc] sm:$0x3]
      %v336 = vld [vmem:[%s331 + $0x50] sm:$0x3]
      %v337 = vld [vmem:[%s331 + $0x54] sm:$0x3]
      %v338 = vld [vmem:[%s331 + $0x58] sm:$0x3]
      %v339 = vld [vmem:[%s331 + $0x5c] sm:$0x3]
      %v340 = vld [vmem:[%s331 + $0xa0] sm:$0x3]
      %v341 = vld [vmem:[%s331 + $0xa4] sm:$0x3]
      %v342 = vld [vmem:[%s331 + $0xa8] sm:$0x3]
      %v343 = vld [vmem:[%s331 + $0xac] sm:$0x3]
      %v344 = vld [vmem:[%s331 + $0xf0] sm:$0x3]
      %v345 = vld [vmem:[%s331 + $0xf4] sm:$0x3]
      %v346 = vld [vmem:[%s331 + $0xf8] sm:$0x3]
      %v347 = vld [vmem:[%s331 + $0xfc] sm:$0x3]
      %s348 = scalar_lea.vmem %s211, 24
      %v349 = vld [vmem:[%s348] sm:$0x3]
      %v350 = vld [vmem:[%s348 + $0x4] sm:$0x3]
      %v351 = vld [vmem:[%s348 + $0x8] sm:$0x3]
      %v352 = vld [vmem:[%s348 + $0xc] sm:$0x3]
      %v353 = vld [vmem:[%s348 + $0x50] sm:$0x3]
      %v354 = vld [vmem:[%s348 + $0x54] sm:$0x3]
      %v355 = vld [vmem:[%s348 + $0x58] sm:$0x3]
      %v356 = vld [vmem:[%s348 + $0x5c] sm:$0x3]
      %v357 = vld [vmem:[%s348 + $0xa0] sm:$0x3]
      %v358 = vld [vmem:[%s348 + $0xa4] sm:$0x3]
      %v359 = vld [vmem:[%s348 + $0xa8] sm:$0x3]
      %v360 = vld [vmem:[%s348 + $0xac] sm:$0x3]
      %v361 = vld [vmem:[%s348 + $0xf0] sm:$0x3]
      %v362 = vld [vmem:[%s348 + $0xf4] sm:$0x3]
      %v363 = vld [vmem:[%s348 + $0xf8] sm:$0x3]
      %v364 = vld [vmem:[%s348 + $0xfc] sm:$0x3]
      %v365 = vld [vmem:[%s331] sm:$0x7]
      %v366 = vld [vmem:[%s331 + $0x4] sm:$0x7]
      %v367 = vld [vmem:[%s331 + $0x8] sm:$0x7]
      %v368 = vld [vmem:[%s331 + $0xc] sm:$0x7]
      %v369 = vld [vmem:[%s331 + $0x50] sm:$0x7]
      %v370 = vld [vmem:[%s331 + $0x54] sm:$0x7]
      %v371 = vld [vmem:[%s331 + $0x58] sm:$0x7]
      %v372 = vld [vmem:[%s331 + $0x5c] sm:$0x7]
      %v373 = vld [vmem:[%s331 + $0xa0] sm:$0x7]
      %v374 = vld [vmem:[%s331 + $0xa4] sm:$0x7]
      %v375 = vld [vmem:[%s331 + $0xa8] sm:$0x7]
      %v376 = vld [vmem:[%s331 + $0xac] sm:$0x7]
      %v377 = vld [vmem:[%s331 + $0xf0] sm:$0x7]
      %v378 = vld [vmem:[%s331 + $0xf4] sm:$0x7]
      %v379 = vld [vmem:[%s331 + $0xf8] sm:$0x7]
      %v380 = vld [vmem:[%s331 + $0xfc] sm:$0x7]
      %v397 = vunpack.c.l.b16 %v249
      %v398 = vunpack.c.l.b16 %v250
      %v399 = vunpack.c.l.b16 %v251
      %v400 = vunpack.c.l.b16 %v252
      %v401 = vunpack.c.l.b16 %v253
      %v402 = vunpack.c.l.b16 %v254
      %v403 = vunpack.c.l.b16 %v255
      %v404 = vunpack.c.l.b16 %v256
      %v405 = vunpack.c.l.b16 %v257
      %v406 = vunpack.c.l.b16 %v258
      %v407 = vunpack.c.l.b16 %v259
      %v408 = vunpack.c.l.b16 %v260
      %v409 = vunpack.c.l.b16 %v261
      %v410 = vunpack.c.l.b16 %v262
      %v411 = vunpack.c.l.b16 %v263
      %v412 = vunpack.c.l.b16 %v264
      %v413 = vpack.c.b16 %v397, %v397
      %v414 = vpack.c.b16 %v398, %v398
      %v415 = vpack.c.b16 %v399, %v399
      %v416 = vpack.c.b16 %v400, %v400
      %v417 = vpack.c.b16 %v401, %v401
      %v418 = vpack.c.b16 %v402, %v402
      %v419 = vpack.c.b16 %v403, %v403
      %v420 = vpack.c.b16 %v404, %v404
      %v421 = vpack.c.b16 %v405, %v405
      %v422 = vpack.c.b16 %v406, %v406
      %v423 = vpack.c.b16 %v407, %v407
      %v424 = vpack.c.b16 %v408, %v408
      %v425 = vpack.c.b16 %v409, %v409
      %v426 = vpack.c.b16 %v410, %v410
      %v427 = vpack.c.b16 %v411, %v411
      %v428 = vpack.c.b16 %v412, %v412
      %429 = vrot.lane.b32.xlu0 %v413, 8
      %v430 = vpop.permute.xlu0 %429
      %431 = vrot.lane.b32.xlu0 %v414, 8
      %v432 = vpop.permute.xlu0 %431
      %433 = vrot.lane.b32.xlu0 %v415, 8
      %v434 = vpop.permute.xlu0 %433
      %435 = vrot.lane.b32.xlu0 %v416, 8
      %v436 = vpop.permute.xlu0 %435
      %437 = vrot.lane.b32.xlu0 %v417, 8
      %v438 = vpop.permute.xlu0 %437
      %439 = vrot.lane.b32.xlu0 %v418, 8
      %v440 = vpop.permute.xlu0 %439
      %441 = vrot.lane.b32.xlu0 %v419, 8
      %v442 = vpop.permute.xlu0 %441
      %443 = vrot.lane.b32.xlu0 %v420, 8
      %v444 = vpop.permute.xlu0 %443
      %445 = vrot.lane.b32.xlu0 %v421, 8
      %v446 = vpop.permute.xlu0 %445
      %447 = vrot.lane.b32.xlu0 %v422, 8
      %v448 = vpop.permute.xlu0 %447
      %449 = vrot.lane.b32.xlu0 %v423, 8
      %v450 = vpop.permute.xlu0 %449
      %451 = vrot.lane.b32.xlu0 %v424, 8
      %v452 = vpop.permute.xlu0 %451
      %453 = vrot.lane.b32.xlu0 %v425, 8
      %v454 = vpop.permute.xlu0 %453
      %455 = vrot.lane.b32.xlu0 %v426, 8
      %v456 = vpop.permute.xlu0 %455
      %457 = vrot.lane.b32.xlu0 %v427, 8
      %v458 = vpop.permute.xlu0 %457
      %459 = vrot.lane.b32.xlu0 %v428, 8
      %v460 = vpop.permute.xlu0 %459
      %v477 = vunpack.c.l.b16 %v265
      %v478 = vunpack.c.l.b16 %v266
      %v479 = vunpack.c.l.b16 %v267
      %v480 = vunpack.c.l.b16 %v268
      %v481 = vunpack.c.l.b16 %v269
      %v482 = vunpack.c.l.b16 %v270
      %v483 = vunpack.c.l.b16 %v271
      %v484 = vunpack.c.l.b16 %v272
      %v485 = vunpack.c.l.b16 %v273
      %v486 = vunpack.c.l.b16 %v274
      %v487 = vunpack.c.l.b16 %v275
      %v488 = vunpack.c.l.b16 %v276
      %v489 = vunpack.c.l.b16 %v277
      %v490 = vunpack.c.l.b16 %v278
      %v491 = vunpack.c.l.b16 %v279
      %v492 = vunpack.c.l.b16 %v280
      %v493 = vpack.c.b16 %v477, %v477
      %v494 = vpack.c.b16 %v478, %v478
      %v495 = vpack.c.b16 %v479, %v479
      %v496 = vpack.c.b16 %v480, %v480
      %v497 = vpack.c.b16 %v481, %v481
      %v498 = vpack.c.b16 %v482, %v482
      %v499 = vpack.c.b16 %v483, %v483
      %v500 = vpack.c.b16 %v484, %v484
      %v501 = vpack.c.b16 %v485, %v485
      %v502 = vpack.c.b16 %v486, %v486
      %v503 = vpack.c.b16 %v487, %v487
      %v504 = vpack.c.b16 %v488, %v488
      %v505 = vpack.c.b16 %v489, %v489
      %v506 = vpack.c.b16 %v490, %v490
      %v507 = vpack.c.b16 %v491, %v491
      %v508 = vpack.c.b16 %v492, %v492
      %v510 = vshrl.u32 %v493, 16
      %v512 = vshll.u32 %v493, 16
      %v514 = vrot.slane %v512, 1
      %v515 = vor.u32 %v510, %v514
      %v517 = vshrl.u32 %v494, 16
      %v519 = vshll.u32 %v494, 16
      %v521 = vrot.slane %v519, 1
      %v522 = vor.u32 %v517, %v521
      %v524 = vshrl.u32 %v495, 16
      %v526 = vshll.u32 %v495, 16
      %v528 = vrot.slane %v526, 1
      %v529 = vor.u32 %v524, %v528
      %v531 = vshrl.u32 %v496, 16
      %v533 = vshll.u32 %v496, 16
      %v535 = vrot.slane %v533, 1
      %v536 = vor.u32 %v531, %v535
      %v538 = vshrl.u32 %v497, 16
      %v540 = vshll.u32 %v497, 16
      %v542 = vrot.slane %v540, 1
      %v543 = vor.u32 %v538, %v542
      %v545 = vshrl.u32 %v498, 16
      %v547 = vshll.u32 %v498, 16
      %v549 = vrot.slane %v547, 1
      %v550 = vor.u32 %v545, %v549
      %v552 = vshrl.u32 %v499, 16
      %v554 = vshll.u32 %v499, 16
      %v556 = vrot.slane %v554, 1
      %v557 = vor.u32 %v552, %v556
      %v559 = vshrl.u32 %v500, 16
      %v561 = vshll.u32 %v500, 16
      %v563 = vrot.slane %v561, 1
      %v564 = vor.u32 %v559, %v563
      %v566 = vshrl.u32 %v501, 16
      %v568 = vshll.u32 %v501, 16
      %v570 = vrot.slane %v568, 1
      %v571 = vor.u32 %v566, %v570
      %v573 = vshrl.u32 %v502, 16
      %v575 = vshll.u32 %v502, 16
      %v577 = vrot.slane %v575, 1
      %v578 = vor.u32 %v573, %v577
      %v580 = vshrl.u32 %v503, 16
      %v582 = vshll.u32 %v503, 16
      %v584 = vrot.slane %v582, 1
      %v585 = vor.u32 %v580, %v584
      %v587 = vshrl.u32 %v504, 16
      %v589 = vshll.u32 %v504, 16
      %v591 = vrot.slane %v589, 1
      %v592 = vor.u32 %v587, %v591
      %v594 = vshrl.u32 %v505, 16
      %v596 = vshll.u32 %v505, 16
      %v598 = vrot.slane %v596, 1
      %v599 = vor.u32 %v594, %v598
      %v601 = vshrl.u32 %v506, 16
      %v603 = vshll.u32 %v506, 16
      %v605 = vrot.slane %v603, 1
      %v606 = vor.u32 %v601, %v605
      %v608 = vshrl.u32 %v507, 16
      %v610 = vshll.u32 %v507, 16
      %v612 = vrot.slane %v610, 1
      %v613 = vor.u32 %v608, %v612
      %v615 = vshrl.u32 %v508, 16
      %v617 = vshll.u32 %v508, 16
      %v619 = vrot.slane %v617, 1
      %v620 = vor.u32 %v615, %v619
      %621 = vrot.lane.b32.xlu0 %v515, 16
      %v622 = vpop.permute.xlu0 %621
      %623 = vrot.lane.b32.xlu0 %v522, 16
      %v624 = vpop.permute.xlu0 %623
      %625 = vrot.lane.b32.xlu0 %v529, 16
      %v626 = vpop.permute.xlu0 %625
      %627 = vrot.lane.b32.xlu0 %v536, 16
      %v628 = vpop.permute.xlu0 %627
      %629 = vrot.lane.b32.xlu0 %v543, 16
      %v630 = vpop.permute.xlu0 %629
      %631 = vrot.lane.b32.xlu0 %v550, 16
      %v632 = vpop.permute.xlu0 %631
      %633 = vrot.lane.b32.xlu0 %v557, 16
      %v634 = vpop.permute.xlu0 %633
      %635 = vrot.lane.b32.xlu0 %v564, 16
      %v636 = vpop.permute.xlu0 %635
      %637 = vrot.lane.b32.xlu0 %v571, 16
      %v638 = vpop.permute.xlu0 %637
      %639 = vrot.lane.b32.xlu0 %v578, 16
      %v640 = vpop.permute.xlu0 %639
      %641 = vrot.lane.b32.xlu0 %v585, 16
      %v642 = vpop.permute.xlu0 %641
      %643 = vrot.lane.b32.xlu0 %v592, 16
      %v644 = vpop.permute.xlu0 %643
      %645 = vrot.lane.b32.xlu0 %v599, 16
      %v646 = vpop.permute.xlu0 %645
      %647 = vrot.lane.b32.xlu0 %v606, 16
      %v648 = vpop.permute.xlu0 %647
      %649 = vrot.lane.b32.xlu0 %v613, 16
      %v650 = vpop.permute.xlu0 %649
      %651 = vrot.lane.b32.xlu0 %v620, 16
      %v652 = vpop.permute.xlu0 %651
      %v669 = vunpack.c.l.b16 %v282
      %v670 = vunpack.c.l.b16 %v283
      %v671 = vunpack.c.l.b16 %v284
      %v672 = vunpack.c.l.b16 %v285
      %v673 = vunpack.c.l.b16 %v286
      %v674 = vunpack.c.l.b16 %v287
      %v675 = vunpack.c.l.b16 %v288
      %v676 = vunpack.c.l.b16 %v289
      %v677 = vunpack.c.l.b16 %v290
      %v678 = vunpack.c.l.b16 %v291
      %v679 = vunpack.c.l.b16 %v292
      %v680 = vunpack.c.l.b16 %v293
      %v681 = vunpack.c.l.b16 %v294
      %v682 = vunpack.c.l.b16 %v295
      %v683 = vunpack.c.l.b16 %v296
      %v684 = vunpack.c.l.b16 %v297
      %v685 = vpack.c.b16 %v669, %v669
      %v686 = vpack.c.b16 %v670, %v670
      %v687 = vpack.c.b16 %v671, %v671
      %v688 = vpack.c.b16 %v672, %v672
      %v689 = vpack.c.b16 %v673, %v673
      %v690 = vpack.c.b16 %v674, %v674
      %v691 = vpack.c.b16 %v675, %v675
      %v692 = vpack.c.b16 %v676, %v676
      %v693 = vpack.c.b16 %v677, %v677
      %v694 = vpack.c.b16 %v678, %v678
      %v695 = vpack.c.b16 %v679, %v679
      %v696 = vpack.c.b16 %v680, %v680
      %v697 = vpack.c.b16 %v681, %v681
      %v698 = vpack.c.b16 %v682, %v682
      %v699 = vpack.c.b16 %v683, %v683
      %v700 = vpack.c.b16 %v684, %v684
      %701 = vrot.lane.b32.xlu0 %v685, 24
      %v702 = vpop.permute.xlu0 %701
      %703 = vrot.lane.b32.xlu0 %v686, 24
      %v704 = vpop.permute.xlu0 %703
      %705 = vrot.lane.b32.xlu0 %v687, 24
      %v706 = vpop.permute.xlu0 %705
      %707 = vrot.lane.b32.xlu0 %v688, 24
      %v708 = vpop.permute.xlu0 %707
      %709 = vrot.lane.b32.xlu0 %v689, 24
      %v710 = vpop.permute.xlu0 %709
      %711 = vrot.lane.b32.xlu0 %v690, 24
      %v712 = vpop.permute.xlu0 %711
      %713 = vrot.lane.b32.xlu0 %v691, 24
      %v714 = vpop.permute.xlu0 %713
      %715 = vrot.lane.b32.xlu0 %v692, 24
      %v716 = vpop.permute.xlu0 %715
      %717 = vrot.lane.b32.xlu0 %v693, 24
      %v718 = vpop.permute.xlu0 %717
      %719 = vrot.lane.b32.xlu0 %v694, 24
      %v720 = vpop.permute.xlu0 %719
      %721 = vrot.lane.b32.xlu0 %v695, 24
      %v722 = vpop.permute.xlu0 %721
      %723 = vrot.lane.b32.xlu0 %v696, 24
      %v724 = vpop.permute.xlu0 %723
      %725 = vrot.lane.b32.xlu0 %v697, 24
      %v726 = vpop.permute.xlu0 %725
      %727 = vrot.lane.b32.xlu0 %v698, 24
      %v728 = vpop.permute.xlu0 %727
      %729 = vrot.lane.b32.xlu0 %v699, 24
      %v730 = vpop.permute.xlu0 %729
      %731 = vrot.lane.b32.xlu0 %v700, 24
      %v732 = vpop.permute.xlu0 %731
      %v749 = vunpack.c.l.b16 %v299
      %v750 = vunpack.c.l.b16 %v300
      %v751 = vunpack.c.l.b16 %v301
      %v752 = vunpack.c.l.b16 %v302
      %v753 = vunpack.c.l.b16 %v303
      %v754 = vunpack.c.l.b16 %v304
      %v755 = vunpack.c.l.b16 %v305
      %v756 = vunpack.c.l.b16 %v306
      %v757 = vunpack.c.l.b16 %v307
      %v758 = vunpack.c.l.b16 %v308
      %v759 = vunpack.c.l.b16 %v309
      %v760 = vunpack.c.l.b16 %v310
      %v761 = vunpack.c.l.b16 %v311
      %v762 = vunpack.c.l.b16 %v312
      %v763 = vunpack.c.l.b16 %v313
      %v764 = vunpack.c.l.b16 %v314
      %v765 = vpack.c.b16 %v749, %v749
      %v766 = vpack.c.b16 %v750, %v750
      %v767 = vpack.c.b16 %v751, %v751
      %v768 = vpack.c.b16 %v752, %v752
      %v769 = vpack.c.b16 %v753, %v753
      %v770 = vpack.c.b16 %v754, %v754
      %v771 = vpack.c.b16 %v755, %v755
      %v772 = vpack.c.b16 %v756, %v756
      %v773 = vpack.c.b16 %v757, %v757
      %v774 = vpack.c.b16 %v758, %v758
      %v775 = vpack.c.b16 %v759, %v759
      %v776 = vpack.c.b16 %v760, %v760
      %v777 = vpack.c.b16 %v761, %v761
      %v778 = vpack.c.b16 %v762, %v762
      %v779 = vpack.c.b16 %v763, %v763
      %v780 = vpack.c.b16 %v764, %v764
      %781 = vrot.lane.b32.xlu0 %v765, 32
      %v782 = vpop.permute.xlu0 %781
      %783 = vrot.lane.b32.xlu0 %v766, 32
      %v784 = vpop.permute.xlu0 %783
      %785 = vrot.lane.b32.xlu0 %v767, 32
      %v786 = vpop.permute.xlu0 %785
      %787 = vrot.lane.b32.xlu0 %v768, 32
      %v788 = vpop.permute.xlu0 %787
      %789 = vrot.lane.b32.xlu0 %v769, 32
      %v790 = vpop.permute.xlu0 %789
      %791 = vrot.lane.b32.xlu0 %v770, 32
      %v792 = vpop.permute.xlu0 %791
      %793 = vrot.lane.b32.xlu0 %v771, 32
      %v794 = vpop.permute.xlu0 %793
      %795 = vrot.lane.b32.xlu0 %v772, 32
      %v796 = vpop.permute.xlu0 %795
      %797 = vrot.lane.b32.xlu0 %v773, 32
      %v798 = vpop.permute.xlu0 %797
      %799 = vrot.lane.b32.xlu0 %v774, 32
      %v800 = vpop.permute.xlu0 %799
      %801 = vrot.lane.b32.xlu0 %v775, 32
      %v802 = vpop.permute.xlu0 %801
      %803 = vrot.lane.b32.xlu0 %v776, 32
      %v804 = vpop.permute.xlu0 %803
      %805 = vrot.lane.b32.xlu0 %v777, 32
      %v806 = vpop.permute.xlu0 %805
      %807 = vrot.lane.b32.xlu0 %v778, 32
      %v808 = vpop.permute.xlu0 %807
      %809 = vrot.lane.b32.xlu0 %v779, 32
      %v810 = vpop.permute.xlu0 %809
      %811 = vrot.lane.b32.xlu0 %v780, 32
      %v812 = vpop.permute.xlu0 %811
      %v829 = vunpack.c.l.b16 %v315
      %v830 = vunpack.c.l.b16 %v316
      %v831 = vunpack.c.l.b16 %v317
      %v832 = vunpack.c.l.b16 %v318
      %v833 = vunpack.c.l.b16 %v319
      %v834 = vunpack.c.l.b16 %v320
      %v835 = vunpack.c.l.b16 %v321
      %v836 = vunpack.c.l.b16 %v322
      %v837 = vunpack.c.l.b16 %v323
      %v838 = vunpack.c.l.b16 %v324
      %v839 = vunpack.c.l.b16 %v325
      %v840 = vunpack.c.l.b16 %v326
      %v841 = vunpack.c.l.b16 %v327
      %v842 = vunpack.c.l.b16 %v328
      %v843 = vunpack.c.l.b16 %v329
      %v844 = vunpack.c.l.b16 %v330
      %v845 = vpack.c.b16 %v829, %v829
      %v846 = vpack.c.b16 %v830, %v830
      %v847 = vpack.c.b16 %v831, %v831
      %v848 = vpack.c.b16 %v832, %v832
      %v849 = vpack.c.b16 %v833, %v833
      %v850 = vpack.c.b16 %v834, %v834
      %v851 = vpack.c.b16 %v835, %v835
      %v852 = vpack.c.b16 %v836, %v836
      %v853 = vpack.c.b16 %v837, %v837
      %v854 = vpack.c.b16 %v838, %v838
      %v855 = vpack.c.b16 %v839, %v839
      %v856 = vpack.c.b16 %v840, %v840
      %v857 = vpack.c.b16 %v841, %v841
      %v858 = vpack.c.b16 %v842, %v842
      %v859 = vpack.c.b16 %v843, %v843
      %v860 = vpack.c.b16 %v844, %v844
      %v862 = vshrl.u32 %v845, 16
      %v864 = vshll.u32 %v845, 16
      %v866 = vrot.slane %v864, 1
      %v867 = vor.u32 %v862, %v866
      %v869 = vshrl.u32 %v846, 16
      %v871 = vshll.u32 %v846, 16
      %v873 = vrot.slane %v871, 1
      %v874 = vor.u32 %v869, %v873
      %v876 = vshrl.u32 %v847, 16
      %v878 = vshll.u32 %v847, 16
      %v880 = vrot.slane %v878, 1
      %v881 = vor.u32 %v876, %v880
      %v883 = vshrl.u32 %v848, 16
      %v885 = vshll.u32 %v848, 16
      %v887 = vrot.slane %v885, 1
      %v888 = vor.u32 %v883, %v887
      %v890 = vshrl.u32 %v849, 16
      %v892 = vshll.u32 %v849, 16
      %v894 = vrot.slane %v892, 1
      %v895 = vor.u32 %v890, %v894
      %v897 = vshrl.u32 %v850, 16
      %v899 = vshll.u32 %v850, 16
      %v901 = vrot.slane %v899, 1
      %v902 = vor.u32 %v897, %v901
      %v904 = vshrl.u32 %v851, 16
      %v906 = vshll.u32 %v851, 16
      %v908 = vrot.slane %v906, 1
      %v909 = vor.u32 %v904, %v908
      %v911 = vshrl.u32 %v852, 16
      %v913 = vshll.u32 %v852, 16
      %v915 = vrot.slane %v913, 1
      %v916 = vor.u32 %v911, %v915
      %v918 = vshrl.u32 %v853, 16
      %v920 = vshll.u32 %v853, 16
      %v922 = vrot.slane %v920, 1
      %v923 = vor.u32 %v918, %v922
      %v925 = vshrl.u32 %v854, 16
      %v927 = vshll.u32 %v854, 16
      %v929 = vrot.slane %v927, 1
      %v930 = vor.u32 %v925, %v929
      %v932 = vshrl.u32 %v855, 16
      %v934 = vshll.u32 %v855, 16
      %v936 = vrot.slane %v934, 1
      %v937 = vor.u32 %v932, %v936
      %v939 = vshrl.u32 %v856, 16
      %v941 = vshll.u32 %v856, 16
      %v943 = vrot.slane %v941, 1
      %v944 = vor.u32 %v939, %v943
      %v946 = vshrl.u32 %v857, 16
      %v948 = vshll.u32 %v857, 16
      %v950 = vrot.slane %v948, 1
      %v951 = vor.u32 %v946, %v950
      %v953 = vshrl.u32 %v858, 16
      %v955 = vshll.u32 %v858, 16
      %v957 = vrot.slane %v955, 1
      %v958 = vor.u32 %v953, %v957
      %v960 = vshrl.u32 %v859, 16
      %v962 = vshll.u32 %v859, 16
      %v964 = vrot.slane %v962, 1
      %v965 = vor.u32 %v960, %v964
      %v967 = vshrl.u32 %v860, 16
      %v969 = vshll.u32 %v860, 16
      %v971 = vrot.slane %v969, 1
      %v972 = vor.u32 %v967, %v971
      %973 = vrot.lane.b32.xlu0 %v867, 40
      %v974 = vpop.permute.xlu0 %973
      %975 = vrot.lane.b32.xlu0 %v874, 40
      %v976 = vpop.permute.xlu0 %975
      %977 = vrot.lane.b32.xlu0 %v881, 40
      %v978 = vpop.permute.xlu0 %977
      %979 = vrot.lane.b32.xlu0 %v888, 40
      %v980 = vpop.permute.xlu0 %979
      %981 = vrot.lane.b32.xlu0 %v895, 40
      %v982 = vpop.permute.xlu0 %981
      %983 = vrot.lane.b32.xlu0 %v902, 40
      %v984 = vpop.permute.xlu0 %983
      %985 = vrot.lane.b32.xlu0 %v909, 40
      %v986 = vpop.permute.xlu0 %985
      %987 = vrot.lane.b32.xlu0 %v916, 40
      %v988 = vpop.permute.xlu0 %987
      %989 = vrot.lane.b32.xlu0 %v923, 40
      %v990 = vpop.permute.xlu0 %989
      %991 = vrot.lane.b32.xlu0 %v930, 40
      %v992 = vpop.permute.xlu0 %991
      %993 = vrot.lane.b32.xlu0 %v937, 40
      %v994 = vpop.permute.xlu0 %993
      %995 = vrot.lane.b32.xlu0 %v944, 40
      %v996 = vpop.permute.xlu0 %995
      %997 = vrot.lane.b32.xlu0 %v951, 40
      %v998 = vpop.permute.xlu0 %997
      %999 = vrot.lane.b32.xlu0 %v958, 40
      %v1000 = vpop.permute.xlu0 %999
      %1001 = vrot.lane.b32.xlu0 %v965, 40
      %v1002 = vpop.permute.xlu0 %1001
      %1003 = vrot.lane.b32.xlu0 %v972, 40
      %v1004 = vpop.permute.xlu0 %1003
      %v1021 = vunpack.c.l.b16 %v332
      %v1022 = vunpack.c.l.b16 %v333
      %v1023 = vunpack.c.l.b16 %v334
      %v1024 = vunpack.c.l.b16 %v335
      %v1025 = vunpack.c.l.b16 %v336
      %v1026 = vunpack.c.l.b16 %v337
      %v1027 = vunpack.c.l.b16 %v338
      %v1028 = vunpack.c.l.b16 %v339
      %v1029 = vunpack.c.l.b16 %v340
      %v1030 = vunpack.c.l.b16 %v341
      %v1031 = vunpack.c.l.b16 %v342
      %v1032 = vunpack.c.l.b16 %v343
      %v1033 = vunpack.c.l.b16 %v344
      %v1034 = vunpack.c.l.b16 %v345
      %v1035 = vunpack.c.l.b16 %v346
      %v1036 = vunpack.c.l.b16 %v347
      %v1037 = vpack.c.b16 %v1021, %v1021
      %v1038 = vpack.c.b16 %v1022, %v1022
      %v1039 = vpack.c.b16 %v1023, %v1023
      %v1040 = vpack.c.b16 %v1024, %v1024
      %v1041 = vpack.c.b16 %v1025, %v1025
      %v1042 = vpack.c.b16 %v1026, %v1026
      %v1043 = vpack.c.b16 %v1027, %v1027
      %v1044 = vpack.c.b16 %v1028, %v1028
      %v1045 = vpack.c.b16 %v1029, %v1029
      %v1046 = vpack.c.b16 %v1030, %v1030
      %v1047 = vpack.c.b16 %v1031, %v1031
      %v1048 = vpack.c.b16 %v1032, %v1032
      %v1049 = vpack.c.b16 %v1033, %v1033
      %v1050 = vpack.c.b16 %v1034, %v1034
      %v1051 = vpack.c.b16 %v1035, %v1035
      %v1052 = vpack.c.b16 %v1036, %v1036
      %1053 = vrot.lane.b32.xlu0 %v1037, 48
      %v1054 = vpop.permute.xlu0 %1053
      %1055 = vrot.lane.b32.xlu0 %v1038, 48
      %v1056 = vpop.permute.xlu0 %1055
      %1057 = vrot.lane.b32.xlu0 %v1039, 48
      %v1058 = vpop.permute.xlu0 %1057
      %1059 = vrot.lane.b32.xlu0 %v1040, 48
      %v1060 = vpop.permute.xlu0 %1059
      %1061 = vrot.lane.b32.xlu0 %v1041, 48
      %v1062 = vpop.permute.xlu0 %1061
      %1063 = vrot.lane.b32.xlu0 %v1042, 48
      %v1064 = vpop.permute.xlu0 %1063
      %1065 = vrot.lane.b32.xlu0 %v1043, 48
      %v1066 = vpop.permute.xlu0 %1065
      %1067 = vrot.lane.b32.xlu0 %v1044, 48
      %v1068 = vpop.permute.xlu0 %1067
      %1069 = vrot.lane.b32.xlu0 %v1045, 48
      %v1070 = vpop.permute.xlu0 %1069
      %1071 = vrot.lane.b32.xlu0 %v1046, 48
      %v1072 = vpop.permute.xlu0 %1071
      %1073 = vrot.lane.b32.xlu0 %v1047, 48
      %v1074 = vpop.permute.xlu0 %1073
      %1075 = vrot.lane.b32.xlu0 %v1048, 48
      %v1076 = vpop.permute.xlu0 %1075
      %1077 = vrot.lane.b32.xlu0 %v1049, 48
      %v1078 = vpop.permute.xlu0 %1077
      %1079 = vrot.lane.b32.xlu0 %v1050, 48
      %v1080 = vpop.permute.xlu0 %1079
      %1081 = vrot.lane.b32.xlu0 %v1051, 48
      %v1082 = vpop.permute.xlu0 %1081
      %1083 = vrot.lane.b32.xlu0 %v1052, 48
      %v1084 = vpop.permute.xlu0 %1083
      %v1101 = vunpack.c.l.b16 %v349
      %v1102 = vunpack.c.l.b16 %v350
      %v1103 = vunpack.c.l.b16 %v351
      %v1104 = vunpack.c.l.b16 %v352
      %v1105 = vunpack.c.l.b16 %v353
      %v1106 = vunpack.c.l.b16 %v354
      %v1107 = vunpack.c.l.b16 %v355
      %v1108 = vunpack.c.l.b16 %v356
      %v1109 = vunpack.c.l.b16 %v357
      %v1110 = vunpack.c.l.b16 %v358
      %v1111 = vunpack.c.l.b16 %v359
      %v1112 = vunpack.c.l.b16 %v360
      %v1113 = vunpack.c.l.b16 %v361
      %v1114 = vunpack.c.l.b16 %v362
      %v1115 = vunpack.c.l.b16 %v363
      %v1116 = vunpack.c.l.b16 %v364
      %v1117 = vpack.c.b16 %v1101, %v1101
      %v1118 = vpack.c.b16 %v1102, %v1102
      %v1119 = vpack.c.b16 %v1103, %v1103
      %v1120 = vpack.c.b16 %v1104, %v1104
      %v1121 = vpack.c.b16 %v1105, %v1105
      %v1122 = vpack.c.b16 %v1106, %v1106
      %v1123 = vpack.c.b16 %v1107, %v1107
      %v1124 = vpack.c.b16 %v1108, %v1108
      %v1125 = vpack.c.b16 %v1109, %v1109
      %v1126 = vpack.c.b16 %v1110, %v1110
      %v1127 = vpack.c.b16 %v1111, %v1111
      %v1128 = vpack.c.b16 %v1112, %v1112
      %v1129 = vpack.c.b16 %v1113, %v1113
      %v1130 = vpack.c.b16 %v1114, %v1114
      %v1131 = vpack.c.b16 %v1115, %v1115
      %v1132 = vpack.c.b16 %v1116, %v1116
      %1133 = vrot.lane.b32.xlu0 %v1117, 56
      %v1134 = vpop.permute.xlu0 %1133
      %1135 = vrot.lane.b32.xlu0 %v1118, 56
      %v1136 = vpop.permute.xlu0 %1135
      %1137 = vrot.lane.b32.xlu0 %v1119, 56
      %v1138 = vpop.permute.xlu0 %1137
      %1139 = vrot.lane.b32.xlu0 %v1120, 56
      %v1140 = vpop.permute.xlu0 %1139
      %1141 = vrot.lane.b32.xlu0 %v1121, 56
      %v1142 = vpop.permute.xlu0 %1141
      %1143 = vrot.lane.b32.xlu0 %v1122, 56
      %v1144 = vpop.permute.xlu0 %1143
      %1145 = vrot.lane.b32.xlu0 %v1123, 56
      %v1146 = vpop.permute.xlu0 %1145
      %1147 = vrot.lane.b32.xlu0 %v1124, 56
      %v1148 = vpop.permute.xlu0 %1147
      %1149 = vrot.lane.b32.xlu0 %v1125, 56
      %v1150 = vpop.permute.xlu0 %1149
      %1151 = vrot.lane.b32.xlu0 %v1126, 56
      %v1152 = vpop.permute.xlu0 %1151
      %1153 = vrot.lane.b32.xlu0 %v1127, 56
      %v1154 = vpop.permute.xlu0 %1153
      %1155 = vrot.lane.b32.xlu0 %v1128, 56
      %v1156 = vpop.permute.xlu0 %1155
      %1157 = vrot.lane.b32.xlu0 %v1129, 56
      %v1158 = vpop.permute.xlu0 %1157
      %1159 = vrot.lane.b32.xlu0 %v1130, 56
      %v1160 = vpop.permute.xlu0 %1159
      %1161 = vrot.lane.b32.xlu0 %v1131, 56
      %v1162 = vpop.permute.xlu0 %1161
      %1163 = vrot.lane.b32.xlu0 %v1132, 56
      %v1164 = vpop.permute.xlu0 %1163
      %v1181 = vunpack.c.l.b16 %v365
      %v1182 = vunpack.c.l.b16 %v366
      %v1183 = vunpack.c.l.b16 %v367
      %v1184 = vunpack.c.l.b16 %v368
      %v1185 = vunpack.c.l.b16 %v369
      %v1186 = vunpack.c.l.b16 %v370
      %v1187 = vunpack.c.l.b16 %v371
      %v1188 = vunpack.c.l.b16 %v372
      %v1189 = vunpack.c.l.b16 %v373
      %v1190 = vunpack.c.l.b16 %v374
      %v1191 = vunpack.c.l.b16 %v375
      %v1192 = vunpack.c.l.b16 %v376
      %v1193 = vunpack.c.l.b16 %v377
      %v1194 = vunpack.c.l.b16 %v378
      %v1195 = vunpack.c.l.b16 %v379
      %v1196 = vunpack.c.l.b16 %v380
      %v1197 = vpack.c.b16 %v1181, %v1181
      %v1198 = vpack.c.b16 %v1182, %v1182
      %v1199 = vpack.c.b16 %v1183, %v1183
      %v1200 = vpack.c.b16 %v1184, %v1184
      %v1201 = vpack.c.b16 %v1185, %v1185
      %v1202 = vpack.c.b16 %v1186, %v1186
      %v1203 = vpack.c.b16 %v1187, %v1187
      %v1204 = vpack.c.b16 %v1188, %v1188
      %v1205 = vpack.c.b16 %v1189, %v1189
      %v1206 = vpack.c.b16 %v1190, %v1190
      %v1207 = vpack.c.b16 %v1191, %v1191
      %v1208 = vpack.c.b16 %v1192, %v1192
      %v1209 = vpack.c.b16 %v1193, %v1193
      %v1210 = vpack.c.b16 %v1194, %v1194
      %v1211 = vpack.c.b16 %v1195, %v1195
      %v1212 = vpack.c.b16 %v1196, %v1196
      %v1214 = vshrl.u32 %v1197, 16
      %v1216 = vshll.u32 %v1197, 16
      %v1218 = vrot.slane %v1216, 1
      %v1219 = vor.u32 %v1214, %v1218
      %v1221 = vshrl.u32 %v1198, 16
      %v1223 = vshll.u32 %v1198, 16
      %v1225 = vrot.slane %v1223, 1
      %v1226 = vor.u32 %v1221, %v1225
      %v1228 = vshrl.u32 %v1199, 16
      %v1230 = vshll.u32 %v1199, 16
      %v1232 = vrot.slane %v1230, 1
      %v1233 = vor.u32 %v1228, %v1232
      %v1235 = vshrl.u32 %v1200, 16
      %v1237 = vshll.u32 %v1200, 16
      %v1239 = vrot.slane %v1237, 1
      %v1240 = vor.u32 %v1235, %v1239
      %v1242 = vshrl.u32 %v1201, 16
      %v1244 = vshll.u32 %v1201, 16
      %v1246 = vrot.slane %v1244, 1
      %v1247 = vor.u32 %v1242, %v1246
      %v1249 = vshrl.u32 %v1202, 16
      %v1251 = vshll.u32 %v1202, 16
      %v1253 = vrot.slane %v1251, 1
      %v1254 = vor.u32 %v1249, %v1253
      %v1256 = vshrl.u32 %v1203, 16
      %v1258 = vshll.u32 %v1203, 16
      %v1260 = vrot.slane %v1258, 1
      %v1261 = vor.u32 %v1256, %v1260
      %v1263 = vshrl.u32 %v1204, 16
      %v1265 = vshll.u32 %v1204, 16
      %v1267 = vrot.slane %v1265, 1
      %v1268 = vor.u32 %v1263, %v1267
      %v1270 = vshrl.u32 %v1205, 16
      %v1272 = vshll.u32 %v1205, 16
      %v1274 = vrot.slane %v1272, 1
      %v1275 = vor.u32 %v1270, %v1274
      %v1277 = vshrl.u32 %v1206, 16
      %v1279 = vshll.u32 %v1206, 16
      %v1281 = vrot.slane %v1279, 1
      %v1282 = vor.u32 %v1277, %v1281
      %v1284 = vshrl.u32 %v1207, 16
      %v1286 = vshll.u32 %v1207, 16
      %v1288 = vrot.slane %v1286, 1
      %v1289 = vor.u32 %v1284, %v1288
      %v1291 = vshrl.u32 %v1208, 16
      %v1293 = vshll.u32 %v1208, 16
      %v1295 = vrot.slane %v1293, 1
      %v1296 = vor.u32 %v1291, %v1295
      %v1298 = vshrl.u32 %v1209, 16
      %v1300 = vshll.u32 %v1209, 16
      %v1302 = vrot.slane %v1300, 1
      %v1303 = vor.u32 %v1298, %v1302
      %v1305 = vshrl.u32 %v1210, 16
      %v1307 = vshll.u32 %v1210, 16
      %v1309 = vrot.slane %v1307, 1
      %v1310 = vor.u32 %v1305, %v1309
      %v1312 = vshrl.u32 %v1211, 16
      %v1314 = vshll.u32 %v1211, 16
      %v1316 = vrot.slane %v1314, 1
      %v1317 = vor.u32 %v1312, %v1316
      %v1319 = vshrl.u32 %v1212, 16
      %v1321 = vshll.u32 %v1212, 16
      %v1323 = vrot.slane %v1321, 1
      %v1324 = vor.u32 %v1319, %v1323
      %1325 = vrot.lane.b32.xlu0 %v1219, 64
      %v1326 = vpop.permute.xlu0 %1325
      %1327 = vrot.lane.b32.xlu0 %v1226, 64
      %v1328 = vpop.permute.xlu0 %1327
      %1329 = vrot.lane.b32.xlu0 %v1233, 64
      %v1330 = vpop.permute.xlu0 %1329
      %1331 = vrot.lane.b32.xlu0 %v1240, 64
      %v1332 = vpop.permute.xlu0 %1331
      %1333 = vrot.lane.b32.xlu0 %v1247, 64
      %v1334 = vpop.permute.xlu0 %1333
      %1335 = vrot.lane.b32.xlu0 %v1254, 64
      %v1336 = vpop.permute.xlu0 %1335
      %1337 = vrot.lane.b32.xlu0 %v1261, 64
      %v1338 = vpop.permute.xlu0 %1337
      %1339 = vrot.lane.b32.xlu0 %v1268, 64
      %v1340 = vpop.permute.xlu0 %1339
      %1341 = vrot.lane.b32.xlu0 %v1275, 64
      %v1342 = vpop.permute.xlu0 %1341
      %1343 = vrot.lane.b32.xlu0 %v1282, 64
      %v1344 = vpop.permute.xlu0 %1343
      %1345 = vrot.lane.b32.xlu0 %v1289, 64
      %v1346 = vpop.permute.xlu0 %1345
      %1347 = vrot.lane.b32.xlu0 %v1296, 64
      %v1348 = vpop.permute.xlu0 %1347
      %1349 = vrot.lane.b32.xlu0 %v1303, 64
      %v1350 = vpop.permute.xlu0 %1349
      %1351 = vrot.lane.b32.xlu0 %v1310, 64
      %v1352 = vpop.permute.xlu0 %1351
      %1353 = vrot.lane.b32.xlu0 %v1317, 64
      %v1354 = vpop.permute.xlu0 %1353
      %1355 = vrot.lane.b32.xlu0 %v1324, 64
      %v1356 = vpop.permute.xlu0 %1355
      %vm1357 = vcmask 64512
      %v1360 = vsel %vm1357, %v232, %v430
      %v1363 = vsel %vm1357, %v233, %v432
      %v1366 = vsel %vm1357, %v234, %v434
      %v1369 = vsel %vm1357, %v235, %v436
      %v1372 = vsel %vm1357, %v236, %v438
      %v1375 = vsel %vm1357, %v237, %v440
      %v1378 = vsel %vm1357, %v238, %v442
      %v1381 = vsel %vm1357, %v239, %v444
      %v1384 = vsel %vm1357, %v240, %v446
      %v1387 = vsel %vm1357, %v241, %v448
      %v1390 = vsel %vm1357, %v242, %v450
      %v1393 = vsel %vm1357, %v243, %v452
      %v1396 = vsel %vm1357, %v244, %v454
      %v1399 = vsel %vm1357, %v245, %v456
      %v1402 = vsel %vm1357, %v246, %v458
      %v1405 = vsel %vm1357, %v247, %v460
      %vm1406 = vcmask 130048
      %v1408 = vsel %vm1406, %v1360, %v622
      %v1410 = vsel %vm1406, %v1363, %v624
      %v1412 = vsel %vm1406, %v1366, %v626
      %v1414 = vsel %vm1406, %v1369, %v628
      %v1416 = vsel %vm1406, %v1372, %v630
      %v1418 = vsel %vm1406, %v1375, %v632
      %v1420 = vsel %vm1406, %v1378, %v634
      %v1422 = vsel %vm1406, %v1381, %v636
      %v1424 = vsel %vm1406, %v1384, %v638
      %v1426 = vsel %vm1406, %v1387, %v640
      %v1428 = vsel %vm1406, %v1390, %v642
      %v1430 = vsel %vm1406, %v1393, %v644
      %v1432 = vsel %vm1406, %v1396, %v646
      %v1434 = vsel %vm1406, %v1399, %v648
      %v1436 = vsel %vm1406, %v1402, %v650
      %v1438 = vsel %vm1406, %v1405, %v652
      %vm1439 = vcmask 195584
      %v1441 = vsel %vm1439, %v1408, %v702
      %v1443 = vsel %vm1439, %v1410, %v704
      %v1445 = vsel %vm1439, %v1412, %v706
      %v1447 = vsel %vm1439, %v1414, %v708
      %v1449 = vsel %vm1439, %v1416, %v710
      %v1451 = vsel %vm1439, %v1418, %v712
      %v1453 = vsel %vm1439, %v1420, %v714
      %v1455 = vsel %vm1439, %v1422, %v716
      %v1457 = vsel %vm1439, %v1424, %v718
      %v1459 = vsel %vm1439, %v1426, %v720
      %v1461 = vsel %vm1439, %v1428, %v722
      %v1463 = vsel %vm1439, %v1430, %v724
      %v1465 = vsel %vm1439, %v1432, %v726
      %v1467 = vsel %vm1439, %v1434, %v728
      %v1469 = vsel %vm1439, %v1436, %v730
      %v1471 = vsel %vm1439, %v1438, %v732
      %vm1472 = vcmask 261120
      %v1474 = vsel %vm1472, %v1441, %v782
      %v1476 = vsel %vm1472, %v1443, %v784
      %v1478 = vsel %vm1472, %v1445, %v786
      %v1480 = vsel %vm1472, %v1447, %v788
      %v1482 = vsel %vm1472, %v1449, %v790
      %v1484 = vsel %vm1472, %v1451, %v792
      %v1486 = vsel %vm1472, %v1453, %v794
      %v1488 = vsel %vm1472, %v1455, %v796
      %v1490 = vsel %vm1472, %v1457, %v798
      %v1492 = vsel %vm1472, %v1459, %v800
      %v1494 = vsel %vm1472, %v1461, %v802
      %v1496 = vsel %vm1472, %v1463, %v804
      %v1498 = vsel %vm1472, %v1465, %v806
      %v1500 = vsel %vm1472, %v1467, %v808
      %v1502 = vsel %vm1472, %v1469, %v810
      %v1504 = vsel %vm1472, %v1471, %v812
      %vm1505 = vcmask 326656
      %v1507 = vsel %vm1505, %v1474, %v974
      %v1509 = vsel %vm1505, %v1476, %v976
      %v1511 = vsel %vm1505, %v1478, %v978
      %v1513 = vsel %vm1505, %v1480, %v980
      %v1515 = vsel %vm1505, %v1482, %v982
      %v1517 = vsel %vm1505, %v1484, %v984
      %v1519 = vsel %vm1505, %v1486, %v986
      %v1521 = vsel %vm1505, %v1488, %v988
      %v1523 = vsel %vm1505, %v1490, %v990
      %v1525 = vsel %vm1505, %v1492, %v992
      %v1527 = vsel %vm1505, %v1494, %v994
      %v1529 = vsel %vm1505, %v1496, %v996
      %v1531 = vsel %vm1505, %v1498, %v998
      %v1533 = vsel %vm1505, %v1500, %v1000
      %v1535 = vsel %vm1505, %v1502, %v1002
      %v1537 = vsel %vm1505, %v1504, %v1004
      %vm1538 = vcmask 392192
      %v1540 = vsel %vm1538, %v1507, %v1054
      %v1542 = vsel %vm1538, %v1509, %v1056
      %v1544 = vsel %vm1538, %v1511, %v1058
      %v1546 = vsel %vm1538, %v1513, %v1060
      %v1548 = vsel %vm1538, %v1515, %v1062
      %v1550 = vsel %vm1538, %v1517, %v1064
      %v1552 = vsel %vm1538, %v1519, %v1066
      %v1554 = vsel %vm1538, %v1521, %v1068
      %v1556 = vsel %vm1538, %v1523, %v1070
      %v1558 = vsel %vm1538, %v1525, %v1072
      %v1560 = vsel %vm1538, %v1527, %v1074
      %v1562 = vsel %vm1538, %v1529, %v1076
      %v1564 = vsel %vm1538, %v1531, %v1078
      %v1566 = vsel %vm1538, %v1533, %v1080
      %v1568 = vsel %vm1538, %v1535, %v1082
      %v1570 = vsel %vm1538, %v1537, %v1084
      %vm1571 = vcmask 457728
      %v1573 = vsel %vm1571, %v1540, %v1134
      %v1575 = vsel %vm1571, %v1542, %v1136
      %v1577 = vsel %vm1571, %v1544, %v1138
      %v1579 = vsel %vm1571, %v1546, %v1140
      %v1581 = vsel %vm1571, %v1548, %v1142
      %v1583 = vsel %vm1571, %v1550, %v1144
      %v1585 = vsel %vm1571, %v1552, %v1146
      %v1587 = vsel %vm1571, %v1554, %v1148
      %v1589 = vsel %vm1571, %v1556, %v1150
      %v1591 = vsel %vm1571, %v1558, %v1152
      %v1593 = vsel %vm1571, %v1560, %v1154
      %v1595 = vsel %vm1571, %v1562, %v1156
      %v1597 = vsel %vm1571, %v1564, %v1158
      %v1599 = vsel %vm1571, %v1566, %v1160
      %v1601 = vsel %vm1571, %v1568, %v1162
      %v1603 = vsel %vm1571, %v1570, %v1164
      %vm1604 = vcmask 523264
      %v1606 = vsel %vm1604, %v1573, %v1326
      %v1608 = vsel %vm1604, %v1575, %v1328
      %v1610 = vsel %vm1604, %v1577, %v1330
      %v1612 = vsel %vm1604, %v1579, %v1332
      %v1614 = vsel %vm1604, %v1581, %v1334
      %v1616 = vsel %vm1604, %v1583, %v1336
      %v1618 = vsel %vm1604, %v1585, %v1338
      %v1620 = vsel %vm1604, %v1587, %v1340
      %v1622 = vsel %vm1604, %v1589, %v1342
      %v1624 = vsel %vm1604, %v1591, %v1344
      %v1626 = vsel %vm1604, %v1593, %v1346
      %v1628 = vsel %vm1604, %v1595, %v1348
      %v1630 = vsel %vm1604, %v1597, %v1350
      %v1632 = vsel %vm1604, %v1599, %v1352
      %v1634 = vsel %vm1604, %v1601, %v1354
      %v1636 = vsel %vm1604, %v1603, %v1356
      %v1637 = vld [vmem:[%s216] sm:$0xf]
      %v1638 = vld [vmem:[%s216 + $0x4] sm:$0xf]
      %v1639 = vld [vmem:[%s216 + $0x8] sm:$0xf]
      %v1640 = vld [vmem:[%s216 + $0xc] sm:$0xf]
      %v1641 = vld [vmem:[%s216 + $0x10] sm:$0xf]
      %v1642 = vld [vmem:[%s216 + $0x14] sm:$0xf]
      %v1643 = vld [vmem:[%s216 + $0x18] sm:$0xf]
      %v1644 = vld [vmem:[%s216 + $0x1c] sm:$0xf]
      %v1645 = vld [vmem:[%s216 + $0x20] sm:$0xf]
      %v1647 = vperm.slane %v231, 0
      %1649 = vst [vmem:[#allocation1] ss:$4 sm:$0xff] %v1606
      %s1650 = scalar_lea.vmem [#allocation1], 1
      %1651 = vst [vmem:[%s1650] ss:$4 sm:$0xff] %v1608
      %s1652 = scalar_lea.vmem [#allocation1], 2
      %1653 = vst [vmem:[%s1652] ss:$4 sm:$0xff] %v1610
      %s1654 = scalar_lea.vmem [#allocation1], 3
      %1655 = vst [vmem:[%s1654] ss:$4 sm:$0xff] %v1612
      %s1656 = scalar_lea.vmem [#allocation1], 32
      %1657 = vst [vmem:[%s1656] ss:$4 sm:$0xff] %v1614
      %s1658 = scalar_lea.vmem [#allocation1], 33
      %1659 = vst [vmem:[%s1658] ss:$4 sm:$0xff] %v1616
      %s1660 = scalar_lea.vmem [#allocation1], 34
      %1661 = vst [vmem:[%s1660] ss:$4 sm:$0xff] %v1618
      %s1662 = scalar_lea.vmem [#allocation1], 35
      %1663 = vst [vmem:[%s1662] ss:$4 sm:$0xff] %v1620
      %v1664 = vld.sshfl [vmem:[#allocation1] sm:$0xff pattern:$0x73625140]
      %v1665 = vld.sshfl [vmem:[#allocation1 + $0x20] sm:$0xff pattern:$0x73625140]
      %1666 = vst [vmem:[#allocation1] ss:$4 sm:$0xff] %v1622
      %1667 = vst [vmem:[%s1650] ss:$4 sm:$0xff] %v1624
      %1668 = vst [vmem:[%s1652] ss:$4 sm:$0xff] %v1626
      %1669 = vst [vmem:[%s1654] ss:$4 sm:$0xff] %v1628
      %1670 = vst [vmem:[%s1656] ss:$4 sm:$0xff] %v1630
      %1671 = vst [vmem:[%s1658] ss:$4 sm:$0xff] %v1632
      %1672 = vst [vmem:[%s1660] ss:$4 sm:$0xff] %v1634
      %1673 = vst [vmem:[%s1662] ss:$4 sm:$0xff] %v1636
      %v1674 = vld.sshfl [vmem:[#allocation1] sm:$0xff pattern:$0x73625140]
      %v1675 = vld.sshfl [vmem:[#allocation1 + $0x20] sm:$0xff pattern:$0x73625140]
      %v1685 = vunpack.c.l.b16 %v1637
      %v1686 = vunpack.c.l.b16 %v1638
      %v1687 = vunpack.c.l.b16 %v1639
      %v1688 = vunpack.c.l.b16 %v1640
      %v1689 = vunpack.c.l.b16 %v1641
      %v1690 = vunpack.c.l.b16 %v1642
      %v1691 = vunpack.c.l.b16 %v1643
      %v1692 = vunpack.c.l.b16 %v1644
      %v1693 = vunpack.c.l.b16 %v1645
      %v1694 = vpack.c.b16 %v1686, %v1685
      %v1695 = vpack.c.b16 %v1688, %v1687
      %v1696 = vpack.c.b16 %v1690, %v1689
      %v1697 = vpack.c.b16 %v1692, %v1691
      %v1698 = vpack.c.b16 %v1693, %v1693
      %vm1703 = vcmask 588800
      %v1704 = vsel %vm1703, %v1664, 0
      %v1706 = vsel %vm1703, %v1665, 0
      %v1708 = vsel %vm1703, %v1674, 0
      %v1710 = vsel %vm1703, %v1675, 0
      %vm1712 = vcmask 1043456
      %v1714 = vsel %vm1712, %v1698, 0
      %1716 = vmatpush.bf16.msra.mxu0 0
      %1717 = vmatpush.bf16.msra.mxu0 0
      %1718 = vmatpush.bf16.msra.mxu0 0
      %1719 = vmatpush.bf16.msra.mxu0 %v1714
      %1720 = vmatpush.bf16.msra.mxu0 %v1697
      %1721 = vmatpush.bf16.msra.mxu0 %v1696
      %1722 = vmatpush.bf16.msra.mxu0 %v1695
      %1723 = vmatpush.bf16.msra.mxu0 %v1694
      %1724 = vmatmul.bf16.gmra.mxu0 %v1704
      %v1725 = vpop.f32.mrf.mxu0
      %v1726 = vadd.f32 %v1647, %v1725
      %v1727 = vpop.f32.mrf.mxu0
      %v1728 = vadd.f32 %v1647, %v1727
      %1729 = vmatmul.bf16.gmra.mxu0 %v1706
      %v1730 = vpop.f32.mrf.mxu0
      %v1731 = vadd.f32 %v1647, %v1730
      %v1732 = vpop.f32.mrf.mxu0
      %v1733 = vadd.f32 %v1647, %v1732
      %1734 = vmatmul.bf16.gmra.mxu0 %v1708
      %v1735 = vpop.f32.mrf.mxu0
      %v1736 = vadd.f32 %v1647, %v1735
      %v1737 = vpop.f32.mrf.mxu0
      %v1738 = vadd.f32 %v1647, %v1737
      %1739 = vmatmul.bf16.gmra.mxu0 %v1710
      %v1740 = vpop.f32.mrf.mxu0
      %v1741 = vadd.f32 %v1647, %v1740
      %v1742 = vpop.f32.mrf.mxu0
      %v1743 = vadd.f32 %v1647, %v1742
      %1744 = vdwg.mxu0
      %v1745 = vmax.f32 %v1726, 0.0
      %v1746 = vmax.f32 %v1728, 0.0
      %v1747 = vmax.f32 %v1731, 0.0
      %v1748 = vmax.f32 %v1733, 0.0
      %v1749 = vmax.f32 %v1736, 0.0
      %v1750 = vmax.f32 %v1738, 0.0
      %v1751 = vmax.f32 %v1741, 0.0
      %v1752 = vmax.f32 %v1743, 0.0
      %v1761 = vrot.slane %v1745, 4
      %v1762 = vrot.slane %v1746, 4
      %v1763 = vrot.slane %v1747, 4
      %v1764 = vrot.slane %v1748, 4
      %v1765 = vrot.slane %v1749, 4
      %v1766 = vrot.slane %v1750, 4
      %v1767 = vrot.slane %v1751, 4
      %v1768 = vrot.slane %v1752, 4
      %v1777 = vpack.c.bf16 %v1745, %v1745
      %v1778 = vpack.c.bf16 %v1761, %v1761
      %v1779 = vpack.c.bf16 %v1746, %v1746
      %v1780 = vpack.c.bf16 %v1762, %v1762
      %v1781 = vpack.c.bf16 %v1747, %v1747
      %v1782 = vpack.c.bf16 %v1763, %v1763
      %v1783 = vpack.c.bf16 %v1748, %v1748
      %v1784 = vpack.c.bf16 %v1764, %v1764
      %v1785 = vpack.c.bf16 %v1749, %v1749
      %v1786 = vpack.c.bf16 %v1765, %v1765
      %v1787 = vpack.c.bf16 %v1750, %v1750
      %v1788 = vpack.c.bf16 %v1766, %v1766
      %v1789 = vpack.c.bf16 %v1751, %v1751
      %v1790 = vpack.c.bf16 %v1767, %v1767
      %v1791 = vpack.c.bf16 %v1752, %v1752
      %v1792 = vpack.c.bf16 %v1768, %v1768
      %1793 = vst [vmem:[%s228] sm:$0x3] %v1777
      %1794 = vst [vmem:[%s228 + $0x2] sm:$0x3] %v1778
      %1795 = vst [vmem:[%s228 + $0x4] sm:$0x3] %v1779
      %1796 = vst [vmem:[%s228 + $0x6] sm:$0x3] %v1780
      %1797 = vst [vmem:[%s228 + $0x8] sm:$0x3] %v1781
      %1798 = vst [vmem:[%s228 + $0xa] sm:$0x3] %v1782
      %1799 = vst [vmem:[%s228 + $0xc] sm:$0x3] %v1783
      %1800 = vst [vmem:[%s228 + $0xe] sm:$0x3] %v1784
      %1801 = vst [vmem:[%s228 + $0x10] sm:$0x3] %v1785
      %1802 = vst [vmem:[%s228 + $0x12] sm:$0x3] %v1786
      %1803 = vst [vmem:[%s228 + $0x14] sm:$0x3] %v1787
      %1804 = vst [vmem:[%s228 + $0x16] sm:$0x3] %v1788
      %1805 = vst [vmem:[%s228 + $0x18] sm:$0x3] %v1789
      %1806 = vst [vmem:[%s228 + $0x1a] sm:$0x3] %v1790
      %1807 = vst [vmem:[%s228 + $0x1c] sm:$0x3] %v1791
      %1808 = vst [vmem:[%s228 + $0x1e] sm:$0x3] %v1792
      %s1809 = smul.u32 4, %s18
      %p1810 = scmp.lt.s32.totalorder %s1809, 7
      %s1811 = scalar_select %p1810, %s1809, 7
      %p1812 = scmp.lt.s32.totalorder %s19, 0
      %s1813 = scalar_select %p1812, %s19, 0
      %s1814 = smul.addr %s1811, 4
      %s1815 = sadd.s32 %s1813, %s1814
      %s1816 = smul.addr %s1815, 2
      %s1817 = scalar_lea.vmem %s3, %s1816
      // Predicated region
      $region33: #{resblock_forward.5} parent=31 // pred_check
        %p1818 = pneg %p124
      $region34: #{resblock_forward.5} parent=31 // pred_check_branch
        %1820 = sbr.rel (%p1818) target = $region36
      $region35: #{resblock_forward.5} parent=31 // pred_region
        %s1821 = smul.u32 4, %s18
      $region36: #{resblock_forward.5} parent=31 // pred_fallthru
        _
    $region32: #{resblock_forward.5} parent=5 // pred_fallthru
      _
    %p1822 = scmp.le.s32.totalorder 2, %s9
    // Predicated region
    $region37: #{resblock_forward.5} parent=5 // pred_check
      %p1823 = pneg %p1822
    $region38: #{resblock_forward.5} parent=5 // pred_check_branch
      %1825 = sbr.rel (%p1823) target = $region40
    $region39: #{resblock_forward.5} parent=5 // pred_region
      %s1826 = ssub.s32 %s9, 2
      // Predicated region
      $region41: #{resblock_forward.5} parent=39 // pred_check
        %p1827 = pneg %p130
      $region42: #{resblock_forward.5} parent=39 // pred_check_branch
        %1829 = sbr.rel (%p1827) target = $region44
      $region43: #{resblock_forward.5} parent=39 // pred_region
        %s1830 = smul.u32 4, %s20
        %p1831 = scmp.lt.s32.totalorder %s1830, 7
        %s1832 = scalar_select %p1831, %s1830, 7
        %p1833 = scmp.lt.s32.totalorder %s21, 0
        %s1834 = scalar_select %p1833, %s21, 0
        %s1835 = smul.addr %s1832, 4
        %s1836 = sadd.s32 %s1834, %s1835
        %s1837 = smul.addr %s1836, 2
        %s1838 = scalar_lea.vmem %s3, %s1837
      $region44: #{resblock_forward.5} parent=39 // pred_fallthru
        _
    $region40: #{resblock_forward.5} parent=5 // pred_fallthru
      _
  $region6: #{resblock_forward.5} parent=0 // loop_footer
    %s13 = sadd.s32 1, %s9
  $region7: #{resblock_forward.5} parent=0 // loop_footer_branch
    %8 = sbr.rel target = $region3
  $region8: #{resblock_forward.5} parent=0 // loop_exit
    _

</llo_original>
